<compile_context>
chip_gen: v6e
topology: v6e:2x2x1
jax: 0.10.0
libtpu: 0.0.40
codegen_flags: <defaults>
</compile_context>

<pallas_src>
import functools
import math

import numpy as np

import jax
import jax.numpy as jnp
from jax.experimental import pallas as pl
from jax.experimental.pallas import tpu as pltpu


SEG_HIDDEN = 1024   # seg head hidden width (SuperSimpleNet architecture constant)
DEC_CH = 128        # cls head conv channels
BN_EPS = 1e-5
LANE = 128


def _round_up(x, m):
    return ((x + m - 1) // m) * m


def _device_budgets():
    """(vmem_limit_bytes, row_tile_target, spatial_max_rows) per TPU generation."""
    cap = None
    try:
        cap = getattr(pltpu.get_tpu_info(), "vmem_capacity_bytes", None)
    except Exception:
        cap = None
    if not cap:
        cap = 64 * 1024 * 1024                       # conservative: v7x per-core VMEM
    vmem_limit = min((3 * int(cap)) // 4, 112 * 1024 * 1024)
    if cap >= 100 * 1024 * 1024:                     # v5e / v6e: 128 MiB VMEM
        return vmem_limit, 1024, 8192
    return vmem_limit, 512, 4096                     # v7x-class: 64 MiB VMEM


VMEM_LIMIT, ROW_TILE_TARGET, SPATIAL_MAX_ROWS = _device_budgets()


# ----------------------------- Pallas kernels -----------------------------

def _chain_kernel(x_ref, lw_ref, lb_ref, w1_ref, b1_ref, w2_ref, b2_ref,
                  cat_ref, amap_ref, *, C):
    """K-A: (folded feature-lift+adaptor) -> seg head (1x1/ReLU/1x1).

    The K=3 lift runs on the VPU; the seg matmul uses bf16 MXU inputs with f32
    accumulation (BN already folded into w1/b1).  Emits one lane-dense
    [tm, C1p] bf16 cat(adapted, map, 0...) store plus the raw map column.
    """
    x = x_ref[...]                                              # [tm, 3] f32
    lw = lw_ref[...]                                            # [3, C1p] f32 (zero-padded lanes)
    adapted = (x[:, 0:1] * lw[0:1, :] + x[:, 1:2] * lw[1:2, :]
               + x[:, 2:3] * lw[2:3, :] + lb_ref[...])          # [tm, C1p], lanes >= C are 0
    hid = jnp.dot(adapted.astype(jnp.bfloat16), w1_ref[...],
                  preferred_element_type=jnp.float32) + b1_ref[...]
    hid = jnp.maximum(hid, 0.0)                                 # BN folded into w1/b1
    # 1024 -> 1 projection as VPU multiply + cross-lane reduce (no N=1 matmul).
    ano = jnp.sum(hid * w2_ref[...], axis=-1, keepdims=True) + b2_ref[...]   # [tm, 1]
    lane = jax.lax.broadcasted_iota(jnp.int32, adapted.shape, 1)
    cat = jnp.where(lane == C, ano, adapted)                    # map at channel C, zeros beyond
    cat_ref[...] = cat.astype(jnp.bfloat16)                     # single lane-dense store
    amap_ref[...] = ano


def _dec_kernel(cat_ref, w_ref, b_ref, wdm_ref, wda_ref, mterm_ref,
                score_ref, dmax_sc, davg_sc, *, th, h, w, C1p):
    """K-B: cls/dec head 5x5 'same' conv (taps merged along K) -> ReLU ->
    adaptive max/avg pooling in resident scratch -> score fc in the finalize."""
    t = pl.program_id(1)

    @pl.when(t == 0)
    def _init():
        dmax_sc[...] = jnp.full(dmax_sc.shape, -jnp.inf, jnp.float32)
        davg_sc[...] = jnp.zeros(davg_sc.shape, jnp.float32)

    # rows [t*th, t*th+th+4) of the spatially zero-padded feature map (2-halo).
    xin = cat_ref[0, pl.ds(t * th, th + 4), :, :]               # [th+4, w+4, C1p] bf16

    acc = jnp.zeros((th * w, DEC_CH), jnp.float32)
    for dj in range(5):
        # one strided column slice per dj (hoisted out of the row-tap loop)
        col = xin[:, dj:dj + w, :].reshape((th + 4) * w, C1p)
        # merge the 5 row taps along the contraction dim: K = 5*C1p per matmul
        op = jnp.concatenate([col[di * w:di * w + th * w] for di in range(5)],
                             axis=-1)                           # [th*w, 5*C1p]
        acc = acc + jnp.dot(op, w_ref[dj], preferred_element_type=jnp.float32)
    dec = jnp.maximum(acc + b_ref[...], 0.0)                    # BN folded into dec_w/dec_b

    dmax_sc[...] = jnp.maximum(dmax_sc[...], jnp.max(dec, axis=0, keepdims=True))
    davg_sc[...] = davg_sc[...] + jnp.sum(dec, axis=0, keepdims=True)

    @pl.when(t == pl.num_programs(1) - 1)
    def _finalize():
        davg = davg_sc[...] * jnp.float32(1.0 / (h * w))
        s = (jnp.sum(dmax_sc[...] * wdm_ref[...], axis=-1, keepdims=True)
             + jnp.sum(davg * wda_ref[...], axis=-1, keepdims=True))
        score_ref[...] = (s + mterm_ref[...].reshape(1, 1)).reshape(1, 1, 1)


def _upscale_kernel(L_ref, a_ref, R_ref, o_ref):
    """K-C: fused bilinear upscale + Gaussian blur: out = L @ map @ R^T per batch."""
    a = a_ref[...].reshape(a_ref.shape[1], a_ref.shape[2])      # [h, w]
    up = jnp.dot(L_ref[...], a, preferred_element_type=jnp.float32)       # [Hin, w]
    o_ref[...] = jnp.dot(up, R_ref[...],
                         preferred_element_type=jnp.float32).reshape(o_ref.shape)


# ----------------------------- tiling helpers -----------------------------

def _row_tile(M, target):
    """Large row tile for the mem-bound 1x1 chain; >=2 grid steps when possible,
    multiple of 16 (bf16 sublane packing)."""
    half = -(-M // 2)
    tm = min(target, half) if M > 16 else M
    tm = max(16, ((tm + 15) // 16) * 16)
    return tm


def _spatial_tile(h, w, max_rows):
    """Largest divisor of h with th*w <= max_rows and >=2 tiles when possible."""
    cap = max(1, max_rows // max(w, 1))
    candidates = [d for d in range(1, h + 1)
                  if h % d == 0 and d <= cap and h // d >= 2]
    return max(candidates) if candidates else h


# ----------------------------- Pallas wrappers -----------------------------

def _fused_feature_chain(x_rows, p, C):
    """K-A: row-tiled fused chain. Pads rows to a tile multiple (handles any M)."""
    M = x_rows.shape[0]
    C1p = p["lift_w"].shape[1]
    tm = _row_tile(M, ROW_TILE_TARGET)
    n = -(-M // tm)
    Mp = n * tm
    if Mp != M:
        x_rows = jnp.pad(x_rows, ((0, Mp - M), (0, 0)))

    weights = (p["lift_w"], p["lift_b"], p["seg_w1"], p["seg_b1"],
               p["seg_w2"], p["seg_b2"])
    w_specs = [pl.BlockSpec(tuple(wt.shape), lambda i: (0, 0)) for wt in weights]

    cat_out, amap = pl.pallas_call(
        functools.partial(_chain_kernel, C=C),
        out_shape=(jax.ShapeDtypeStruct((Mp, C1p), jnp.bfloat16),
                   jax.ShapeDtypeStruct((Mp, 1), jnp.float32)),
        grid=(n,),
        in_specs=[pl.BlockSpec((tm, 3), lambda i: (i, 0))] + w_specs,
        out_specs=(pl.BlockSpec((tm, C1p), lambda i: (i, 0)),
                   pl.BlockSpec((tm, 1), lambda i: (i, 0))),
        compiler_params=pltpu.CompilerParams(
            dimension_semantics=("parallel",),
            vmem_limit_bytes=VMEM_LIMIT),
    )(x_rows, *weights)
    return cat_out[:M], amap[:M]


def _dec_head_score(cat_pad, mterm, p, th, h, w):
    """K-B: dec head conv + ReLU + adaptive pooling + score fc finalize."""
    B = cat_pad.shape[0]
    C1p = cat_pad.shape[-1]
    nt = h // th

    score = pl.pallas_call(
        functools.partial(_dec_kernel, th=th, h=h, w=w, C1p=C1p),
        out_shape=jax.ShapeDtypeStruct((B, 1, 1), jnp.float32),
        grid=(B, nt),
        in_specs=[
            pl.BlockSpec((1, h + 4, w + 4, C1p), lambda b, t: (b, 0, 0, 0)),
            pl.BlockSpec((5, 5 * C1p, DEC_CH), lambda b, t: (0, 0, 0)),
            pl.BlockSpec((1, DEC_CH), lambda b, t: (0, 0)),
            pl.BlockSpec((1, DEC_CH), lambda b, t: (0, 0)),
            pl.BlockSpec((1, DEC_CH), lambda b, t: (0, 0)),
            pl.BlockSpec((1, 1, 1), lambda b, t: (b, 0, 0)),
        ],
        out_specs=pl.BlockSpec((1, 1, 1), lambda b, t: (b, 0, 0)),
        scratch_shapes=[pltpu.VMEM((1, DEC_CH), jnp.float32),
                        pltpu.VMEM((1, DEC_CH), jnp.float32)],
        compiler_params=pltpu.CompilerParams(
            dimension_semantics=("parallel", "arbitrary"),
            vmem_limit_bytes=VMEM_LIMIT),
    )(cat_pad, p["dec_w"], p["dec_b"], p["fc_wdm"], p["fc_wda"], mterm)
    return score[:, 0, 0]


def _upscale_blur(amap_bhw, interp_left, interp_rightT):
    """K-C: per-batch fused bilinear upscale + Gaussian blur (f32 output path)."""
    B, h, w = amap_bhw.shape
    Hin = interp_left.shape[0]
    Win = interp_rightT.shape[1]
    return pl.pallas_call(
        _upscale_kernel,
        out_shape=jax.ShapeDtypeStruct((B, Hin, Win), jnp.float32),
        grid=(B,),
        in_specs=[pl.BlockSpec((Hin, h), lambda b: (0, 0)),
                  pl.BlockSpec((1, h, w), lambda b: (b, 0, 0)),
                  pl.BlockSpec((w, Win), lambda b: (0, 0))],
        out_specs=pl.BlockSpec((1, Hin, Win), lambda b: (b, 0, 0)),
        compiler_params=pltpu.CompilerParams(
            dimension_semantics=("parallel",),
            vmem_limit_bytes=VMEM_LIMIT),
    )(interp_left, amap_bhw, interp_rightT)


# ----------------------------- glue helpers -----------------------------

def _bilinear_matrix(out_size, in_size):
    """Row matrix of F.interpolate(mode='bilinear', align_corners=False)."""
    M = np.zeros((out_size, in_size), dtype=np.float32)
    scale = in_size / out_size
    for i in range(out_size):
        src = max((i + 0.5) * scale - 0.5, 0.0)
        i0 = min(int(np.floor(src)), in_size - 1)
        i1 = min(i0 + 1, in_size - 1)
        frac = src - i0
        M[i, i0] += 1.0 - frac
        M[i, i1] += frac
    return M


def _gaussian_blur_matrix(n, ksize, sigma):
    """1-D Gaussian blur with torchvision 'reflect' padding as an n x n matrix."""
    half = (ksize - 1) * 0.5
    x = np.linspace(-half, half, ksize)
    k = np.exp(-0.5 * (x / sigma) ** 2)
    k = (k / k.sum()).astype(np.float32)
    pad = ksize // 2

    def reflect(pidx):
        while pidx < 0 or pidx >= n:
            if pidx < 0:
                pidx = -pidx
            else:
                pidx = 2 * (n - 1) - pidx
        return pidx

    G = np.zeros((n, n), dtype=np.float32)
    for i in range(n):
        for t in range(ksize):
            G[i, reflect(i - pad + t)] += k[t]
    return G


# ----------------------------- parameters -----------------------------

def make_params(key, C):
    keys = jax.random.split(key, 12)
    C1 = C + 1
    C1p = _round_up(C1, LANE)

    def xavier(k, shape, fan_in, fan_out):
        std = math.sqrt(2.0 / (fan_in + fan_out))
        return (std * jax.random.normal(k, shape)).astype(jnp.float32)

    def unif(k, shape, fan_in):
        bound = 1.0 / math.sqrt(fan_in)
        return jax.random.uniform(k, shape, minval=-bound, maxval=bound,
                                  dtype=jnp.float32)

    p = {}
    # stand-in feature lift 3 -> C (see TODO(synk)) folded with the adaptor
    # Conv2d(C, C, 1): no nonlinearity between them -> one exact affine.
    fe_w = xavier(keys[0], (3, C), 3, C)
    fe_b = unif(keys[1], (1, C), 3)
    ad_w = xavier(keys[2], (C, C), C, C)
    ad_b = unif(keys[3], (1, C), C)
    lift_w = fe_w @ ad_w
    lift_b = fe_b @ ad_w + ad_b
    p["lift_w"] = jnp.pad(lift_w, ((0, 0), (0, C1p - C)))       # zero lanes >= C
    p["lift_b"] = jnp.pad(lift_b, ((0, 0), (0, C1p - C)))

    # seg head: 1x1 conv C->1024, BN (eval running stats, folded), ReLU, 1x1 conv 1024->1
    bn_s = 1.0 / math.sqrt(1.0 + BN_EPS)                        # identity running stats
    w1 = xavier(keys[4], (C, SEG_HIDDEN), C, SEG_HIDDEN) * bn_s
    b1 = unif(keys[5], (1, SEG_HIDDEN), C) * bn_s
    p["seg_w1"] = jnp.pad(w1, ((0, C1p - C), (0, 0))).astype(jnp.bfloat16)
    p["seg_b1"] = b1
    p["seg_w2"] = xavier(keys[6], (1, SEG_HIDDEN), SEG_HIDDEN, 1)   # f32 (VPU reduce path)
    p["seg_b2"] = unif(keys[7], (1, 1), SEG_HIDDEN)

    # cls (dec) head: Conv2d(C+1, 128, 5, padding='same'), BN (folded), ReLU
    w_dec = xavier(keys[8], (DEC_CH, C1, 5, 5), C1 * 25, DEC_CH * 25) * bn_s
    b_dec = unif(keys[9], (1, DEC_CH), C1 * 25) * bn_s
    wd = jnp.transpose(w_dec, (3, 2, 1, 0))                     # (dj, di, C1, out)
    wd = jnp.pad(wd, ((0, 0), (0, 0), (0, C1p - C1), (0, 0)))   # zero-padded channels
    p["dec_w"] = wd.reshape(5, 5 * C1p, DEC_CH).astype(jnp.bfloat16)
    p["dec_b"] = b_dec

    # fc_score: Linear(2*128 + 2, 1); weight pre-split per concat slice (lane-major rows)
    fcw = xavier(keys[10], (1, 2 * DEC_CH + 2), 2 * DEC_CH + 2, 1)
    p["fc_wdm"] = fcw[:, :DEC_CH]
    p["fc_wda"] = fcw[:, DEC_CH:2 * DEC_CH]
    p["fc_wmm"] = fcw[:, 2 * DEC_CH:2 * DEC_CH + 1]
    p["fc_wma"] = fcw[:, 2 * DEC_CH + 1:]
    p["fc_b"] = unif(keys[11], (1, 1), 2 * DEC_CH + 2)
    return p


# ----------------------------- forward pass -----------------------------

def supersimplenet_forward(images, params, interp_left, interp_rightT, *, C):
    """Inference forward: returns (anomaly_map [B,1,H,W], anomaly_score [B])."""
    B, _, Hin, Win = images.shape
    h, w = Hin // 4, Win // 4
    M = B * h * w
    C1p = params["lift_w"].shape[1]

    # --- feature extractor stand-in (see TODO(synk) at top) ---
    x = jnp.transpose(images, (0, 2, 3, 1))                     # NCHW -> NHWC
    x = x.reshape(B, h, 4, w, 4, 3).mean(axis=(2, 4))           # [B,h,w,3]
    x_rows = x.reshape(M, 3)

    # --- K-A: folded lift+adaptor -> seg head (fused row chain) ---
    cat_flat, amap_flat = _fused_feature_chain(x_rows, params, C)

    # low-res map statistics + map part of the score fc (tiny, plain XLA)
    am = amap_flat.reshape(B, h * w)
    map_max = jnp.max(am, axis=1, keepdims=True)
    map_avg = jnp.mean(am, axis=1, keepdims=True)
    mterm = (map_max * params["fc_wmm"] + map_avg * params["fc_wma"]
             + params["fc_b"]).reshape(B, 1, 1)

    # --- K-B: cls/dec head conv + pooling + final anomaly score ---
    # TODO(synk): fuse this zero-pad halo into K-A/K-B (and halo-tile the K-B
    # input) for production resolutions; negligible at the sizes exercised here.
    cat_pad = jnp.pad(cat_flat.reshape(B, h, w, C1p),
                      ((0, 0), (2, 2), (2, 2), (0, 0)))
    th = _spatial_tile(h, w, SPATIAL_MAX_ROWS)
    score = _dec_head_score(cat_pad, mterm, params, th, h, w)

    # --- K-C: AnomalyMapGenerator (bilinear upscale + Gaussian blur fused) ---
    amap_img = _upscale_blur(amap_flat.reshape(B, h, w), interp_left, interp_rightT)
    anomaly_map = amap_img.reshape(B, 1, Hin, Win)
    return anomaly_map, score


# ----------------------------- pure-JAX reference -----------------------------

def reference_forward(images, params, interp_left, interp_rightT, *, C):
    """f32 reference of the same math (validates the fused bf16 kernels)."""
    B, _, Hin, Win = images.shape
    h, w = Hin // 4, Win // 4
    C1p = params["lift_w"].shape[1]

    x = jnp.transpose(images, (0, 2, 3, 1)).reshape(B, h, 4, w, 4, 3).mean(axis=(2, 4))
    adapted = jnp.einsum("bhwk,kc->bhwc", x, params["lift_w"]) + params["lift_b"]
    hid = jnp.einsum("bhwc,cf->bhwf", adapted,
                     params["seg_w1"].astype(jnp.float32)) + params["seg_b1"]
    hid = jnp.maximum(hid, 0.0)
    ano = jnp.einsum("bhwf,f->bhw", hid, params["seg_w2"][0]) + params["seg_b2"][0, 0]

    lane = jnp.arange(C1p)
    cat = jnp.where(lane[None, None, None, :] == C, ano[..., None], adapted)
    cat_pad = jnp.pad(cat, ((0, 0), (2, 2), (2, 2), (0, 0)))
    wd = params["dec_w"].astype(jnp.float32).reshape(5, 5, C1p, DEC_CH)
    dec = jnp.zeros((B, h, w, DEC_CH), jnp.float32)
    for dj in range(5):
        for di in range(5):
            patch = cat_pad[:, di:di + h, dj:dj + w, :]
            dec = dec + jnp.einsum("bhwc,co->bhwo", patch, wd[dj, di])
    dec = jnp.maximum(dec + params["dec_b"], 0.0)

    dec_max = jnp.max(dec, axis=(1, 2))
    dec_avg = jnp.mean(dec, axis=(1, 2))
    map_max = jnp.max(ano, axis=(1, 2))[:, None]
    map_avg = jnp.mean(ano, axis=(1, 2))[:, None]
    score = (jnp.sum(dec_max * params["fc_wdm"], axis=1, keepdims=True)
             + jnp.sum(dec_avg * params["fc_wda"], axis=1, keepdims=True)
             + map_max * params["fc_wmm"] + map_avg * params["fc_wma"]
             + params["fc_b"])[:, 0]

    amap = jnp.einsum("Hh,bhw->bHw", interp_left, ano)
    amap = jnp.einsum("bHw,wW->bHW", amap, interp_rightT)
    return amap[:, None], score


# ----------------------------- main -----------------------------

if __name__ == "__main__":
    B, C, Hin, Win = 2, 32, 32, 32
    h, w = Hin // 4, Win // 4

    key = jax.random.PRNGKey(0)
    k_img, k_par = jax.random.split(key)
    images = jax.random.normal(k_img, (B, 3, Hin, Win), dtype=jnp.float32)
    params = make_params(k_par, C)

    # AnomalyMapGenerator(sigma=4): kernel_size = 2*ceil(3*4)+1 = 25; the module
    # hard-codes the blur sigma to 0.4 (torchvision GaussianBlur(ks, sigma=0.4)).
    ksize = 2 * math.ceil(3 * 4) + 1
    blur_sigma = 0.4
    R = _bilinear_matrix(Hin, h)
    Cm = _bilinear_matrix(Win, w)
    Gr = _gaussian_blur_matrix(Hin, ksize, blur_sigma)
    Gc = _gaussian_blur_matrix(Win, ksize, blur_sigma)
    interp_left = jnp.asarray(Gr @ R, dtype=jnp.float32)           # [Hin, h]
    interp_rightT = jnp.asarray((Gc @ Cm).T, dtype=jnp.float32)    # [w, Win]

    fwd = jax.jit(functools.partial(supersimplenet_forward, C=C))
    anomaly_map, anomaly_score = fwd(images, params, interp_left, interp_rightT)
    jax.block_until_ready((anomaly_map, anomaly_score))

    assert anomaly_map.shape == (B, 1, Hin, Win)
    assert anomaly_score.shape == (B,)

    # validate the fused bf16 Pallas pipeline against the f32 reference
    ref_map, ref_score = jax.jit(functools.partial(reference_forward, C=C))(
        images, params, interp_left, interp_rightT)
    np.testing.assert_allclose(np.asarray(anomaly_map), np.asarray(ref_map),
                               atol=2e-2, rtol=2e-2)
    np.testing.assert_allclose(np.asarray(anomaly_score), np.asarray(ref_score),
                               atol=2e-2, rtol=2e-2)

    print("KERNEL_OK")
</pallas_src>

<mosaic_0001>
module attributes {stable_mosaic.version = 11 : i64} {
  func.func @_chain_kernel(%arg0: i32, %arg1: memref<64x3xf32, #tpu.memory_space<vmem>>, %arg2: memref<3x128xf32, #tpu.memory_space<vmem>>, %arg3: memref<1x128xf32, #tpu.memory_space<vmem>>, %arg4: memref<128x1024xbf16, #tpu.memory_space<vmem>>, %arg5: memref<1x1024xf32, #tpu.memory_space<vmem>>, %arg6: memref<1x1024xf32, #tpu.memory_space<vmem>>, %arg7: memref<1x1xf32, #tpu.memory_space<vmem>>, %arg8: memref<64x128xbf16, #tpu.memory_space<vmem>>, %arg9: memref<64x1xf32, #tpu.memory_space<vmem>>) attributes {dimension_semantics = [#tpu.dimension_semantics<parallel>], iteration_bounds = array<i64: 2>, scalar_prefetch = 0 : i64, scratch_operands = 0 : i64, tpu.core_type = #tpu.core_type<tc>, window_params = [{transform_indices = @transform_0, window_bounds = array<i64: 64, 3>}, {pipeline_mode = #tpu.pipeline_mode<synchronous>, transform_indices = @transform_1, window_bounds = array<i64: 3, 128>}, {pipeline_mode = #tpu.pipeline_mode<synchronous>, transform_indices = @transform_2, window_bounds = array<i64: 1, 128>}, {pipeline_mode = #tpu.pipeline_mode<synchronous>, transform_indices = @transform_3, window_bounds = array<i64: 128, 1024>}, {pipeline_mode = #tpu.pipeline_mode<synchronous>, transform_indices = @transform_4, window_bounds = array<i64: 1, 1024>}, {pipeline_mode = #tpu.pipeline_mode<synchronous>, transform_indices = @transform_5, window_bounds = array<i64: 1, 1024>}, {pipeline_mode = #tpu.pipeline_mode<synchronous>, transform_indices = @transform_6, window_bounds = array<i64: 1, 1>}, {transform_indices = @transform_7, window_bounds = array<i64: 64, 128>}, {transform_indices = @transform_8, window_bounds = array<i64: 64, 1>}]} {
    %c0 = arith.constant 0 : index
    %c0_0 = arith.constant 0 : index
    %0 = vector.load %arg1[%c0, %c0_0] : memref<64x3xf32, #tpu.memory_space<vmem>>, vector<64x3xf32>
    %c0_1 = arith.constant 0 : index
    %c0_2 = arith.constant 0 : index
    %1 = vector.load %arg2[%c0_1, %c0_2] : memref<3x128xf32, #tpu.memory_space<vmem>>, vector<3x128xf32>
    %2 = vector.extract_strided_slice %0 {offsets = [0, 0], sizes = [64, 1], strides = [1, 1]} : vector<64x3xf32> to vector<64x1xf32>
    %3 = vector.extract_strided_slice %1 {offsets = [0, 0], sizes = [1, 128], strides = [1, 1]} : vector<3x128xf32> to vector<1x128xf32>
    %4 = vector.broadcast %2 : vector<64x1xf32> to vector<64x128xf32>
    %5 = vector.broadcast %3 : vector<1x128xf32> to vector<64x128xf32>
    %6 = arith.mulf %4, %5 : vector<64x128xf32>
    %7 = vector.extract_strided_slice %0 {offsets = [0, 1], sizes = [64, 1], strides = [1, 1]} : vector<64x3xf32> to vector<64x1xf32>
    %8 = vector.extract_strided_slice %1 {offsets = [1, 0], sizes = [1, 128], strides = [1, 1]} : vector<3x128xf32> to vector<1x128xf32>
    %9 = vector.broadcast %7 : vector<64x1xf32> to vector<64x128xf32>
    %10 = vector.broadcast %8 : vector<1x128xf32> to vector<64x128xf32>
    %11 = arith.mulf %9, %10 : vector<64x128xf32>
    %12 = arith.addf %6, %11 : vector<64x128xf32>
    %13 = vector.extract_strided_slice %0 {offsets = [0, 2], sizes = [64, 1], strides = [1, 1]} : vector<64x3xf32> to vector<64x1xf32>
    %14 = vector.extract_strided_slice %1 {offsets = [2, 0], sizes = [1, 128], strides = [1, 1]} : vector<3x128xf32> to vector<1x128xf32>
    %15 = vector.broadcast %13 : vector<64x1xf32> to vector<64x128xf32>
    %16 = vector.broadcast %14 : vector<1x128xf32> to vector<64x128xf32>
    %17 = arith.mulf %15, %16 : vector<64x128xf32>
    %18 = arith.addf %12, %17 : vector<64x128xf32>
    %c0_3 = arith.constant 0 : index
    %c0_4 = arith.constant 0 : index
    %19 = vector.load %arg3[%c0_3, %c0_4] : memref<1x128xf32, #tpu.memory_space<vmem>>, vector<1x128xf32>
    %20 = vector.broadcast %19 : vector<1x128xf32> to vector<64x128xf32>
    %21 = arith.addf %18, %20 : vector<64x128xf32>
    %22 = arith.truncf %21 : vector<64x128xf32> to vector<64x128xbf16>
    %c0_5 = arith.constant 0 : index
    %c0_6 = arith.constant 0 : index
    %23 = vector.load %arg4[%c0_5, %c0_6] : memref<128x1024xbf16, #tpu.memory_space<vmem>>, vector<128x1024xbf16>
    %cst = arith.constant dense<0.000000e+00> : vector<64x1024xf32>
    %24 = tpu.matmul %22, %23, %cst {dimension_numbers = #tpu.dot_dimension_numbers<[1], [0], [0], [1], [0, 0, 1, 1], [], []>} : vector<64x128xbf16>, vector<128x1024xbf16>, vector<64x1024xf32> -> vector<64x1024xf32>
    %c0_7 = arith.constant 0 : index
    %c0_8 = arith.constant 0 : index
    %25 = vector.load %arg5[%c0_7, %c0_8] : memref<1x1024xf32, #tpu.memory_space<vmem>>, vector<1x1024xf32>
    %26 = vector.broadcast %25 : vector<1x1024xf32> to vector<64x1024xf32>
    %27 = arith.addf %24, %26 : vector<64x1024xf32>
    %cst_9 = arith.constant 0.000000e+00 : f32
    %28 = vector.broadcast %cst_9 : f32 to vector<64x1024xf32>
    %29 = arith.maximumf %27, %28 : vector<64x1024xf32>
    %c0_10 = arith.constant 0 : index
    %c0_11 = arith.constant 0 : index
    %30 = vector.load %arg6[%c0_10, %c0_11] : memref<1x1024xf32, #tpu.memory_space<vmem>>, vector<1x1024xf32>
    %31 = vector.broadcast %30 : vector<1x1024xf32> to vector<64x1024xf32>
    %32 = arith.mulf %29, %31 : vector<64x1024xf32>
    %cst_12 = arith.constant dense<0.000000e+00> : vector<64xf32>
    %33 = vector.multi_reduction <add>, %32, %cst_12 [1] : vector<64x1024xf32> to vector<64xf32>
    %34 = vector.shape_cast %33 : vector<64xf32> to vector<64x1xf32>
    %c0_13 = arith.constant 0 : index
    %c0_14 = arith.constant 0 : index
    %35 = vector.load %arg7[%c0_13, %c0_14] : memref<1x1xf32, #tpu.memory_space<vmem>>, vector<1x1xf32>
    %36 = vector.broadcast %35 : vector<1x1xf32> to vector<64x1xf32>
    %37 = arith.addf %34, %36 : vector<64x1xf32>
    %38 = tpu.iota {dimensions = array<i32: 1>} : vector<64x128xi32>
    %c32_i32 = arith.constant 32 : i32
    %39 = vector.broadcast %c32_i32 : i32 to vector<64x128xi32>
    %40 = arith.cmpi eq, %38, %39 : vector<64x128xi32>
    %41 = vector.shape_cast %37 : vector<64x1xf32> to vector<64x1xf32>
    %42 = vector.broadcast %41 : vector<64x1xf32> to vector<64x128xf32>
    %43 = arith.select %40, %42, %21 : vector<64x128xi1>, vector<64x128xf32>
    %44 = arith.truncf %43 : vector<64x128xf32> to vector<64x128xbf16>
    %c0_15 = arith.constant 0 : index
    %c0_16 = arith.constant 0 : index
    %45 = vector.load %arg8[%c0_15, %c0_16] : memref<64x128xbf16, #tpu.memory_space<vmem>>, vector<64x128xbf16>
    tpu.vector_store %arg8[%c0_15, %c0_16], %44 {strides = array<i32>} : memref<64x128xbf16, #tpu.memory_space<vmem>>, vector<64x128xbf16>,
    %c0_17 = arith.constant 0 : index
    %c0_18 = arith.constant 0 : index
    %46 = vector.load %arg9[%c0_17, %c0_18] : memref<64x1xf32, #tpu.memory_space<vmem>>, vector<64x1xf32>
    tpu.vector_store %arg9[%c0_17, %c0_18], %37 {strides = array<i32>} : memref<64x1xf32, #tpu.memory_space<vmem>>, vector<64x1xf32>,
    return
  }
  func.func @transform_0(%arg0: i32) -> (i32, i32) {
    %c0_i32 = arith.constant 0 : i32
    %c0_i32_0 = arith.constant 0 : i32
    return %arg0, %c0_i32 : i32, i32
  }
  func.func @transform_1(%arg0: i32) -> (i32, i32) {
    %c0_i32 = arith.constant 0 : i32
    %c0_i32_0 = arith.constant 0 : i32
    %c0_i32_1 = arith.constant 0 : i32
    return %c0_i32, %c0_i32_0 : i32, i32
  }
  func.func @transform_2(%arg0: i32) -> (i32, i32) {
    %c0_i32 = arith.constant 0 : i32
    %c0_i32_0 = arith.constant 0 : i32
    %c0_i32_1 = arith.constant 0 : i32
    return %c0_i32, %c0_i32_0 : i32, i32
  }
  func.func @transform_3(%arg0: i32) -> (i32, i32) {
    %c0_i32 = arith.constant 0 : i32
    %c0_i32_0 = arith.constant 0 : i32
    %c0_i32_1 = arith.constant 0 : i32
    return %c0_i32, %c0_i32_0 : i32, i32
  }
  func.func @transform_4(%arg0: i32) -> (i32, i32) {
    %c0_i32 = arith.constant 0 : i32
    %c0_i32_0 = arith.constant 0 : i32
    %c0_i32_1 = arith.constant 0 : i32
    return %c0_i32, %c0_i32_0 : i32, i32
  }
  func.func @transform_5(%arg0: i32) -> (i32, i32) {
    %c0_i32 = arith.constant 0 : i32
    %c0_i32_0 = arith.constant 0 : i32
    %c0_i32_1 = arith.constant 0 : i32
    return %c0_i32, %c0_i32_0 : i32, i32
  }
  func.func @transform_6(%arg0: i32) -> (i32, i32) {
    %c0_i32 = arith.constant 0 : i32
    %c0_i32_0 = arith.constant 0 : i32
    %c0_i32_1 = arith.constant 0 : i32
    return %c0_i32, %c0_i32_0 : i32, i32
  }
  func.func @transform_7(%arg0: i32) -> (i32, i32) {
    %c0_i32 = arith.constant 0 : i32
    %c0_i32_0 = arith.constant 0 : i32
    return %arg0, %c0_i32 : i32, i32
  }
  func.func @transform_8(%arg0: i32) -> (i32, i32) {
    %c0_i32 = arith.constant 0 : i32
    %c0_i32_0 = arith.constant 0 : i32
    return %arg0, %c0_i32 : i32, i32
  }
}

module attributes {stable_mosaic.version = 11 : i64} {
  func.func @_upscale_kernel(%arg0: i32, %arg1: memref<32x8xf32, #tpu.memory_space<vmem>>, %arg2: memref<1x8x8xf32, #tpu.memory_space<vmem>>, %arg3: memref<8x32xf32, #tpu.memory_space<vmem>>, %arg4: memref<1x32x32xf32, #tpu.memory_space<vmem>>) attributes {dimension_semantics = [#tpu.dimension_semantics<parallel>], iteration_bounds = array<i64: 2>, scalar_prefetch = 0 : i64, scratch_operands = 0 : i64, tpu.core_type = #tpu.core_type<tc>, window_params = [{pipeline_mode = #tpu.pipeline_mode<synchronous>, transform_indices = @transform_0, window_bounds = array<i64: 32, 8>}, {transform_indices = @transform_1, window_bounds = array<i64: 1, 8, 8>}, {pipeline_mode = #tpu.pipeline_mode<synchronous>, transform_indices = @transform_2, window_bounds = array<i64: 8, 32>}, {transform_indices = @transform_3, window_bounds = array<i64: 1, 32, 32>}]} {
    %c0 = arith.constant 0 : index
    %c0_0 = arith.constant 0 : index
    %c0_1 = arith.constant 0 : index
    %0 = vector.load %arg2[%c0, %c0_0, %c0_1] : memref<1x8x8xf32, #tpu.memory_space<vmem>>, vector<1x8x8xf32>
    %1 = vector.shape_cast %0 : vector<1x8x8xf32> to vector<8x8xf32>
    %c0_2 = arith.constant 0 : index
    %c0_3 = arith.constant 0 : index
    %2 = vector.load %arg1[%c0_2, %c0_3] : memref<32x8xf32, #tpu.memory_space<vmem>>, vector<32x8xf32>
    %cst = arith.constant dense<0.000000e+00> : vector<32x8xf32>
    %3 = tpu.matmul %2, %1, %cst {dimension_numbers = #tpu.dot_dimension_numbers<[1], [0], [0], [1], [0, 0, 1, 1], [], []>} : vector<32x8xf32>, vector<8x8xf32>, vector<32x8xf32> -> vector<32x8xf32>
    %c0_4 = arith.constant 0 : index
    %c0_5 = arith.constant 0 : index
    %4 = vector.load %arg3[%c0_4, %c0_5] : memref<8x32xf32, #tpu.memory_space<vmem>>, vector<8x32xf32>
    %cst_6 = arith.constant dense<0.000000e+00> : vector<32x32xf32>
    %5 = tpu.matmul %3, %4, %cst_6 {dimension_numbers = #tpu.dot_dimension_numbers<[1], [0], [0], [1], [0, 0, 1, 1], [], []>} : vector<32x8xf32>, vector<8x32xf32>, vector<32x32xf32> -> vector<32x32xf32>
    %6 = vector.shape_cast %5 : vector<32x32xf32> to vector<1x32x32xf32>
    %c0_7 = arith.constant 0 : index
    %c0_8 = arith.constant 0 : index
    %c0_9 = arith.constant 0 : index
    %7 = vector.load %arg4[%c0_7, %c0_8, %c0_9] : memref<1x32x32xf32, #tpu.memory_space<vmem>>, vector<1x32x32xf32>
    tpu.vector_store %arg4[%c0_7, %c0_8, %c0_9], %6 {strides = array<i32>} : memref<1x32x32xf32, #tpu.memory_space<vmem>>, vector<1x32x32xf32>,
    return
  }
  func.func @transform_0(%arg0: i32) -> (i32, i32) {
    %c0_i32 = arith.constant 0 : i32
    %c0_i32_0 = arith.constant 0 : i32
    %c0_i32_1 = arith.constant 0 : i32
    return %c0_i32, %c0_i32_0 : i32, i32
  }
  func.func @transform_1(%arg0: i32) -> (i32, i32, i32) {
    %c0_i32 = arith.constant 0 : i32
    %c0_i32_0 = arith.constant 0 : i32
    %c0_i32_1 = arith.constant 0 : i32
    return %arg0, %c0_i32, %c0_i32_0 : i32, i32, i32
  }
  func.func @transform_2(%arg0: i32) -> (i32, i32) {
    %c0_i32 = arith.constant 0 : i32
    %c0_i32_0 = arith.constant 0 : i32
    %c0_i32_1 = arith.constant 0 : i32
    return %c0_i32, %c0_i32_0 : i32, i32
  }
  func.func @transform_3(%arg0: i32) -> (i32, i32, i32) {
    %c0_i32 = arith.constant 0 : i32
    %c0_i32_0 = arith.constant 0 : i32
    %c0_i32_1 = arith.constant 0 : i32
    return %arg0, %c0_i32, %c0_i32_0 : i32, i32, i32
  }
}

module attributes {stable_mosaic.version = 11 : i64} {
  func.func @_dec_kernel(%arg0: i32, %arg1: i32, %arg2: memref<1x12x12x128xbf16, #tpu.memory_space<vmem>>, %arg3: memref<5x640x128xbf16, #tpu.memory_space<vmem>>, %arg4: memref<1x128xf32, #tpu.memory_space<vmem>>, %arg5: memref<1x128xf32, #tpu.memory_space<vmem>>, %arg6: memref<1x128xf32, #tpu.memory_space<vmem>>, %arg7: memref<1x1x1xf32, #tpu.memory_space<vmem>>, %arg8: memref<1x1x1xf32, #tpu.memory_space<vmem>>, %arg9: memref<1x128xf32, #tpu.memory_space<vmem>>, %arg10: memref<1x128xf32, #tpu.memory_space<vmem>>) attributes {dimension_semantics = [#tpu.dimension_semantics<parallel>, #tpu.dimension_semantics<arbitrary>], iteration_bounds = array<i64: 2, 2>, scalar_prefetch = 0 : i64, scratch_operands = 2 : i64, tpu.core_type = #tpu.core_type<tc>, window_params = [{transform_indices = @transform_0, window_bounds = array<i64: 1, 12, 12, 128>}, {pipeline_mode = #tpu.pipeline_mode<synchronous>, transform_indices = @transform_1, window_bounds = array<i64: 5, 640, 128>}, {pipeline_mode = #tpu.pipeline_mode<synchronous>, transform_indices = @transform_2, window_bounds = array<i64: 1, 128>}, {pipeline_mode = #tpu.pipeline_mode<synchronous>, transform_indices = @transform_3, window_bounds = array<i64: 1, 128>}, {pipeline_mode = #tpu.pipeline_mode<synchronous>, transform_indices = @transform_4, window_bounds = array<i64: 1, 128>}, {transform_indices = @transform_5, window_bounds = array<i64: 1, 1, 1>}, {transform_indices = @transform_6, window_bounds = array<i64: 1, 1, 1>}]} {
    %c0_i32 = arith.constant 0 : i32
    %0 = arith.cmpi eq, %arg1, %c0_i32 : i32
    %1 = arith.extui %0 : i1 to i32
    %c0_i32_0 = arith.constant 0 : i32
    %2 = arith.cmpi ne, %1, %c0_i32_0 : i32
    scf.if %2 {
      %cst_33 = arith.constant 0xFF800000 : f32
      %86 = vector.broadcast %cst_33 : f32 to vector<1x128xf32>
      %c0_34 = arith.constant 0 : index
      %c0_35 = arith.constant 0 : index
      %87 = vector.load %arg9[%c0_34, %c0_35] : memref<1x128xf32, #tpu.memory_space<vmem>>, vector<1x128xf32>
      tpu.vector_store %arg9[%c0_34, %c0_35], %86 {strides = array<i32>} : memref<1x128xf32, #tpu.memory_space<vmem>>, vector<1x128xf32>,
      %cst_36 = arith.constant 0.000000e+00 : f32
      %88 = vector.broadcast %cst_36 : f32 to vector<1x128xf32>
      %c0_37 = arith.constant 0 : index
      %c0_38 = arith.constant 0 : index
      %89 = vector.load %arg10[%c0_37, %c0_38] : memref<1x128xf32, #tpu.memory_space<vmem>>, vector<1x128xf32>
      tpu.vector_store %arg10[%c0_37, %c0_38], %88 {strides = array<i32>} : memref<1x128xf32, #tpu.memory_space<vmem>>, vector<1x128xf32>,
    } else {
    }
    %c4_i32 = arith.constant 4 : i32
    %3 = arith.muli %arg1, %c4_i32 : i32
    %c0 = arith.constant 0 : index
    %4 = arith.index_cast %3 : i32 to index
    %c0_1 = arith.constant 0 : index
    %c0_2 = arith.constant 0 : index
    %5 = vector.load %arg2[%c0, %4, %c0_1, %c0_2] : memref<1x12x12x128xbf16, #tpu.memory_space<vmem>>, vector<1x8x12x128xbf16>
    %6 = vector.shape_cast %5 : vector<1x8x12x128xbf16> to vector<8x12x128xbf16>
    %cst = arith.constant 0.000000e+00 : f32
    %7 = vector.broadcast %cst : f32 to vector<32x128xf32>
    %8 = vector.extract_strided_slice %6 {offsets = [0, 0, 0], sizes = [8, 8, 128], strides = [1, 1, 1]} : vector<8x12x128xbf16> to vector<8x8x128xbf16>
    %9 = vector.shape_cast %8 : vector<8x8x128xbf16> to vector<64x128xbf16>
    %10 = vector.extract_strided_slice %9 {offsets = [0, 0], sizes = [32, 128], strides = [1, 1]} : vector<64x128xbf16> to vector<32x128xbf16>
    %11 = vector.extract_strided_slice %9 {offsets = [8, 0], sizes = [32, 128], strides = [1, 1]} : vector<64x128xbf16> to vector<32x128xbf16>
    %12 = vector.extract_strided_slice %9 {offsets = [16, 0], sizes = [32, 128], strides = [1, 1]} : vector<64x128xbf16> to vector<32x128xbf16>
    %13 = vector.extract_strided_slice %9 {offsets = [24, 0], sizes = [32, 128], strides = [1, 1]} : vector<64x128xbf16> to vector<32x128xbf16>
    %14 = vector.extract_strided_slice %9 {offsets = [32, 0], sizes = [32, 128], strides = [1, 1]} : vector<64x128xbf16> to vector<32x128xbf16>
    %15 = tpu.concatenate %10, %11, %12, %13, %14 in 1 : vector<32x128xbf16>, vector<32x128xbf16>, vector<32x128xbf16>, vector<32x128xbf16>, vector<32x128xbf16> -> vector<32x640xbf16>
    %c0_3 = arith.constant 0 : index
    %c0_4 = arith.constant 0 : index
    %c0_5 = arith.constant 0 : index
    %16 = vector.load %arg3[%c0_3, %c0_4, %c0_5] : memref<5x640x128xbf16, #tpu.memory_space<vmem>>, vector<1x640x128xbf16>
    %17 = vector.shape_cast %16 : vector<1x640x128xbf16> to vector<640x128xbf16>
    %cst_6 = arith.constant dense<0.000000e+00> : vector<32x128xf32>
    %18 = tpu.matmul %15, %17, %cst_6 {dimension_numbers = #tpu.dot_dimension_numbers<[1], [0], [0], [1], [0, 0, 1, 1], [], []>} : vector<32x640xbf16>, vector<640x128xbf16>, vector<32x128xf32> -> vector<32x128xf32>
    %19 = arith.addf %7, %18 : vector<32x128xf32>
    %20 = vector.extract_strided_slice %6 {offsets = [0, 1, 0], sizes = [8, 8, 128], strides = [1, 1, 1]} : vector<8x12x128xbf16> to vector<8x8x128xbf16>
    %21 = vector.shape_cast %20 : vector<8x8x128xbf16> to vector<64x128xbf16>
    %22 = vector.extract_strided_slice %21 {offsets = [0, 0], sizes = [32, 128], strides = [1, 1]} : vector<64x128xbf16> to vector<32x128xbf16>
    %23 = vector.extract_strided_slice %21 {offsets = [8, 0], sizes = [32, 128], strides = [1, 1]} : vector<64x128xbf16> to vector<32x128xbf16>
    %24 = vector.extract_strided_slice %21 {offsets = [16, 0], sizes = [32, 128], strides = [1, 1]} : vector<64x128xbf16> to vector<32x128xbf16>
    %25 = vector.extract_strided_slice %21 {offsets = [24, 0], sizes = [32, 128], strides = [1, 1]} : vector<64x128xbf16> to vector<32x128xbf16>
    %26 = vector.extract_strided_slice %21 {offsets = [32, 0], sizes = [32, 128], strides = [1, 1]} : vector<64x128xbf16> to vector<32x128xbf16>
    %27 = tpu.concatenate %22, %23, %24, %25, %26 in 1 : vector<32x128xbf16>, vector<32x128xbf16>, vector<32x128xbf16>, vector<32x128xbf16>, vector<32x128xbf16> -> vector<32x640xbf16>
    %c1 = arith.constant 1 : index
    %c0_7 = arith.constant 0 : index
    %c0_8 = arith.constant 0 : index
    %28 = vector.load %arg3[%c1, %c0_7, %c0_8] : memref<5x640x128xbf16, #tpu.memory_space<vmem>>, vector<1x640x128xbf16>
    %29 = vector.shape_cast %28 : vector<1x640x128xbf16> to vector<640x128xbf16>
    %cst_9 = arith.constant dense<0.000000e+00> : vector<32x128xf32>
    %30 = tpu.matmul %27, %29, %cst_9 {dimension_numbers = #tpu.dot_dimension_numbers<[1], [0], [0], [1], [0, 0, 1, 1], [], []>} : vector<32x640xbf16>, vector<640x128xbf16>, vector<32x128xf32> -> vector<32x128xf32>
    %31 = arith.addf %19, %30 : vector<32x128xf32>
    %32 = vector.extract_strided_slice %6 {offsets = [0, 2, 0], sizes = [8, 8, 128], strides = [1, 1, 1]} : vector<8x12x128xbf16> to vector<8x8x128xbf16>
    %33 = vector.shape_cast %32 : vector<8x8x128xbf16> to vector<64x128xbf16>
    %34 = vector.extract_strided_slice %33 {offsets = [0, 0], sizes = [32, 128], strides = [1, 1]} : vector<64x128xbf16> to vector<32x128xbf16>
    %35 = vector.extract_strided_slice %33 {offsets = [8, 0], sizes = [32, 128], strides = [1, 1]} : vector<64x128xbf16> to vector<32x128xbf16>
    %36 = vector.extract_strided_slice %33 {offsets = [16, 0], sizes = [32, 128], strides = [1, 1]} : vector<64x128xbf16> to vector<32x128xbf16>
    %37 = vector.extract_strided_slice %33 {offsets = [24, 0], sizes = [32, 128], strides = [1, 1]} : vector<64x128xbf16> to vector<32x128xbf16>
    %38 = vector.extract_strided_slice %33 {offsets = [32, 0], sizes = [32, 128], strides = [1, 1]} : vector<64x128xbf16> to vector<32x128xbf16>
    %39 = tpu.concatenate %34, %35, %36, %37, %38 in 1 : vector<32x128xbf16>, vector<32x128xbf16>, vector<32x128xbf16>, vector<32x128xbf16>, vector<32x128xbf16> -> vector<32x640xbf16>
    %c2 = arith.constant 2 : index
    %c0_10 = arith.constant 0 : index
    %c0_11 = arith.constant 0 : index
    %40 = vector.load %arg3[%c2, %c0_10, %c0_11] : memref<5x640x128xbf16, #tpu.memory_space<vmem>>, vector<1x640x128xbf16>
    %41 = vector.shape_cast %40 : vector<1x640x128xbf16> to vector<640x128xbf16>
    %cst_12 = arith.constant dense<0.000000e+00> : vector<32x128xf32>
    %42 = tpu.matmul %39, %41, %cst_12 {dimension_numbers = #tpu.dot_dimension_numbers<[1], [0], [0], [1], [0, 0, 1, 1], [], []>} : vector<32x640xbf16>, vector<640x128xbf16>, vector<32x128xf32> -> vector<32x128xf32>
    %43 = arith.addf %31, %42 : vector<32x128xf32>
    %44 = vector.extract_strided_slice %6 {offsets = [0, 3, 0], sizes = [8, 8, 128], strides = [1, 1, 1]} : vector<8x12x128xbf16> to vector<8x8x128xbf16>
    %45 = vector.shape_cast %44 : vector<8x8x128xbf16> to vector<64x128xbf16>
    %46 = vector.extract_strided_slice %45 {offsets = [0, 0], sizes = [32, 128], strides = [1, 1]} : vector<64x128xbf16> to vector<32x128xbf16>
    %47 = vector.extract_strided_slice %45 {offsets = [8, 0], sizes = [32, 128], strides = [1, 1]} : vector<64x128xbf16> to vector<32x128xbf16>
    %48 = vector.extract_strided_slice %45 {offsets = [16, 0], sizes = [32, 128], strides = [1, 1]} : vector<64x128xbf16> to vector<32x128xbf16>
    %49 = vector.extract_strided_slice %45 {offsets = [24, 0], sizes = [32, 128], strides = [1, 1]} : vector<64x128xbf16> to vector<32x128xbf16>
    %50 = vector.extract_strided_slice %45 {offsets = [32, 0], sizes = [32, 128], strides = [1, 1]} : vector<64x128xbf16> to vector<32x128xbf16>
    %51 = tpu.concatenate %46, %47, %48, %49, %50 in 1 : vector<32x128xbf16>, vector<32x128xbf16>, vector<32x128xbf16>, vector<32x128xbf16>, vector<32x128xbf16> -> vector<32x640xbf16>
    %c3 = arith.constant 3 : index
    %c0_13 = arith.constant 0 : index
    %c0_14 = arith.constant 0 : index
    %52 = vector.load %arg3[%c3, %c0_13, %c0_14] : memref<5x640x128xbf16, #tpu.memory_space<vmem>>, vector<1x640x128xbf16>
    %53 = vector.shape_cast %52 : vector<1x640x128xbf16> to vector<640x128xbf16>
    %cst_15 = arith.constant dense<0.000000e+00> : vector<32x128xf32>
    %54 = tpu.matmul %51, %53, %cst_15 {dimension_numbers = #tpu.dot_dimension_numbers<[1], [0], [0], [1], [0, 0, 1, 1], [], []>} : vector<32x640xbf16>, vector<640x128xbf16>, vector<32x128xf32> -> vector<32x128xf32>
    %55 = arith.addf %43, %54 : vector<32x128xf32>
    %56 = vector.extract_strided_slice %6 {offsets = [0, 4, 0], sizes = [8, 8, 128], strides = [1, 1, 1]} : vector<8x12x128xbf16> to vector<8x8x128xbf16>
    %57 = vector.shape_cast %56 : vector<8x8x128xbf16> to vector<64x128xbf16>
    %58 = vector.extract_strided_slice %57 {offsets = [0, 0], sizes = [32, 128], strides = [1, 1]} : vector<64x128xbf16> to vector<32x128xbf16>
    %59 = vector.extract_strided_slice %57 {offsets = [8, 0], sizes = [32, 128], strides = [1, 1]} : vector<64x128xbf16> to vector<32x128xbf16>
    %60 = vector.extract_strided_slice %57 {offsets = [16, 0], sizes = [32, 128], strides = [1, 1]} : vector<64x128xbf16> to vector<32x128xbf16>
    %61 = vector.extract_strided_slice %57 {offsets = [24, 0], sizes = [32, 128], strides = [1, 1]} : vector<64x128xbf16> to vector<32x128xbf16>
    %62 = vector.extract_strided_slice %57 {offsets = [32, 0], sizes = [32, 128], strides = [1, 1]} : vector<64x128xbf16> to vector<32x128xbf16>
    %63 = tpu.concatenate %58, %59, %60, %61, %62 in 1 : vector<32x128xbf16>, vector<32x128xbf16>, vector<32x128xbf16>, vector<32x128xbf16>, vector<32x128xbf16> -> vector<32x640xbf16>
    %c4 = arith.constant 4 : index
    %c0_16 = arith.constant 0 : index
    %c0_17 = arith.constant 0 : index
    %64 = vector.load %arg3[%c4, %c0_16, %c0_17] : memref<5x640x128xbf16, #tpu.memory_space<vmem>>, vector<1x640x128xbf16>
    %65 = vector.shape_cast %64 : vector<1x640x128xbf16> to vector<640x128xbf16>
    %cst_18 = arith.constant dense<0.000000e+00> : vector<32x128xf32>
    %66 = tpu.matmul %63, %65, %cst_18 {dimension_numbers = #tpu.dot_dimension_numbers<[1], [0], [0], [1], [0, 0, 1, 1], [], []>} : vector<32x640xbf16>, vector<640x128xbf16>, vector<32x128xf32> -> vector<32x128xf32>
    %67 = arith.addf %55, %66 : vector<32x128xf32>
    %c0_19 = arith.constant 0 : index
    %c0_20 = arith.constant 0 : index
    %68 = vector.load %arg4[%c0_19, %c0_20] : memref<1x128xf32, #tpu.memory_space<vmem>>, vector<1x128xf32>
    %69 = vector.broadcast %68 : vector<1x128xf32> to vector<32x128xf32>
    %70 = arith.addf %67, %69 : vector<32x128xf32>
    %cst_21 = arith.constant 0.000000e+00 : f32
    %71 = vector.broadcast %cst_21 : f32 to vector<32x128xf32>
    %72 = arith.maximumf %70, %71 : vector<32x128xf32>
    %c0_22 = arith.constant 0 : index
    %c0_23 = arith.constant 0 : index
    %73 = vector.load %arg9[%c0_22, %c0_23] : memref<1x128xf32, #tpu.memory_space<vmem>>, vector<1x128xf32>
    %cst_24 = arith.constant dense<0xFF800000> : vector<128xf32>
    %74 = vector.multi_reduction <maximumf>, %72, %cst_24 [0] : vector<32x128xf32> to vector<128xf32>
    %75 = vector.shape_cast %74 : vector<128xf32> to vector<1x128xf32>
    %76 = arith.maximumf %73, %75 : vector<1x128xf32>
    %c0_25 = arith.constant 0 : index
    %c0_26 = arith.constant 0 : index
    %77 = vector.load %arg9[%c0_25, %c0_26] : memref<1x128xf32, #tpu.memory_space<vmem>>, vector<1x128xf32>
    tpu.vector_store %arg9[%c0_25, %c0_26], %76 {strides = array<i32>} : memref<1x128xf32, #tpu.memory_space<vmem>>, vector<1x128xf32>,
    %c0_27 = arith.constant 0 : index
    %c0_28 = arith.constant 0 : index
    %78 = vector.load %arg10[%c0_27, %c0_28] : memref<1x128xf32, #tpu.memory_space<vmem>>, vector<1x128xf32>
    %cst_29 = arith.constant dense<0.000000e+00> : vector<128xf32>
    %79 = vector.multi_reduction <add>, %72, %cst_29 [0] : vector<32x128xf32> to vector<128xf32>
    %80 = vector.shape_cast %79 : vector<128xf32> to vector<1x128xf32>
    %81 = arith.addf %78, %80 : vector<1x128xf32>
    %c0_30 = arith.constant 0 : index
    %c0_31 = arith.constant 0 : index
    %82 = vector.load %arg10[%c0_30, %c0_31] : memref<1x128xf32, #tpu.memory_space<vmem>>, vector<1x128xf32>
    tpu.vector_store %arg10[%c0_30, %c0_31], %81 {strides = array<i32>} : memref<1x128xf32, #tpu.memory_space<vmem>>, vector<1x128xf32>,
    %c1_i32 = arith.constant 1 : i32
    %83 = arith.cmpi eq, %arg1, %c1_i32 : i32
    %84 = arith.extui %83 : i1 to i32
    %c0_i32_32 = arith.constant 0 : i32
    %85 = arith.cmpi ne, %84, %c0_i32_32 : i32
    scf.if %85 {
      %c0_33 = arith.constant 0 : index
      %c0_34 = arith.constant 0 : index
      %86 = vector.load %arg10[%c0_33, %c0_34] : memref<1x128xf32, #tpu.memory_space<vmem>>, vector<1x128xf32>
      %cst_35 = arith.constant 1.562500e-02 : f32
      %87 = vector.broadcast %cst_35 : f32 to vector<1x128xf32>
      %88 = arith.mulf %86, %87 : vector<1x128xf32>
      %c0_36 = arith.constant 0 : index
      %c0_37 = arith.constant 0 : index
      %89 = vector.load %arg9[%c0_36, %c0_37] : memref<1x128xf32, #tpu.memory_space<vmem>>, vector<1x128xf32>
      %c0_38 = arith.constant 0 : index
      %c0_39 = arith.constant 0 : index
      %90 = vector.load %arg5[%c0_38, %c0_39] : memref<1x128xf32, #tpu.memory_space<vmem>>, vector<1x128xf32>
      %91 = arith.mulf %89, %90 : vector<1x128xf32>
      %cst_40 = arith.constant dense<0.000000e+00> : vector<1xf32>
      %92 = vector.multi_reduction <add>, %91, %cst_40 [1] : vector<1x128xf32> to vector<1xf32>
      %93 = vector.shape_cast %92 : vector<1xf32> to vector<1x1xf32>
      %c0_41 = arith.constant 0 : index
      %c0_42 = arith.constant 0 : index
      %94 = vector.load %arg6[%c0_41, %c0_42] : memref<1x128xf32, #tpu.memory_space<vmem>>, vector<1x128xf32>
      %95 = arith.mulf %88, %94 : vector<1x128xf32>
      %cst_43 = arith.constant dense<0.000000e+00> : vector<1xf32>
      %96 = vector.multi_reduction <add>, %95, %cst_43 [1] : vector<1x128xf32> to vector<1xf32>
      %97 = vector.shape_cast %96 : vector<1xf32> to vector<1x1xf32>
      %98 = arith.addf %93, %97 : vector<1x1xf32>
      %c0_44 = arith.constant 0 : index
      %c0_45 = arith.constant 0 : index
      %c0_46 = arith.constant 0 : index
      %99 = vector.load %arg7[%c0_44, %c0_45, %c0_46] : memref<1x1x1xf32, #tpu.memory_space<vmem>>, vector<1x1x1xf32>
      %100 = vector.shape_cast %99 : vector<1x1x1xf32> to vector<1x1xf32>
      %101 = arith.addf %98, %100 : vector<1x1xf32>
      %102 = vector.shape_cast %101 : vector<1x1xf32> to vector<1x1x1xf32>
      %c0_47 = arith.constant 0 : index
      %c0_48 = arith.constant 0 : index
      %c0_49 = arith.constant 0 : index
      %103 = vector.load %arg8[%c0_47, %c0_48, %c0_49] : memref<1x1x1xf32, #tpu.memory_space<vmem>>, vector<1x1x1xf32>
      tpu.vector_store %arg8[%c0_47, %c0_48, %c0_49], %102 {strides = array<i32>} : memref<1x1x1xf32, #tpu.memory_space<vmem>>, vector<1x1x1xf32>,
    } else {
    }
    return
  }
  func.func @transform_0(%arg0: i32, %arg1: i32) -> (i32, i32, i32, i32) {
    %c0_i32 = arith.constant 0 : i32
    %c0_i32_0 = arith.constant 0 : i32
    %c0_i32_1 = arith.constant 0 : i32
    %c0_i32_2 = arith.constant 0 : i32
    return %arg0, %c0_i32, %c0_i32_0, %c0_i32_1 : i32, i32, i32, i32
  }
  func.func @transform_1(%arg0: i32, %arg1: i32) -> (i32, i32, i32) {
    %c0_i32 = arith.constant 0 : i32
    %c0_i32_0 = arith.constant 0 : i32
    %c0_i32_1 = arith.constant 0 : i32
    %c0_i32_2 = arith.constant 0 : i32
    return %c0_i32, %c0_i32_0, %c0_i32_1 : i32, i32, i32
  }
  func.func @transform_2(%arg0: i32, %arg1: i32) -> (i32, i32) {
    %c0_i32 = arith.constant 0 : i32
    %c0_i32_0 = arith.constant 0 : i32
    %c0_i32_1 = arith.constant 0 : i32
    return %c0_i32, %c0_i32_0 : i32, i32
  }
  func.func @transform_3(%arg0: i32, %arg1: i32) -> (i32, i32) {
    %c0_i32 = arith.constant 0 : i32
    %c0_i32_0 = arith.constant 0 : i32
    %c0_i32_1 = arith.constant 0 : i32
    return %c0_i32, %c0_i32_0 : i32, i32
  }
  func.func @transform_4(%arg0: i32, %arg1: i32) -> (i32, i32) {
    %c0_i32 = arith.constant 0 : i32
    %c0_i32_0 = arith.constant 0 : i32
    %c0_i32_1 = arith.constant 0 : i32
    return %c0_i32, %c0_i32_0 : i32, i32
  }
  func.func @transform_5(%arg0: i32, %arg1: i32) -> (i32, i32, i32) {
    %c0_i32 = arith.constant 0 : i32
    %c0_i32_0 = arith.constant 0 : i32
    %c0_i32_1 = arith.constant 0 : i32
    return %arg0, %c0_i32, %c0_i32_0 : i32, i32, i32
  }
  func.func @transform_6(%arg0: i32, %arg1: i32) -> (i32, i32, i32) {
    %c0_i32 = arith.constant 0 : i32
    %c0_i32_0 = arith.constant 0 : i32
    %c0_i32_1 = arith.constant 0 : i32
    return %arg0, %c0_i32, %c0_i32_0 : i32, i32, i32
  }
}

</mosaic_0001>

<llo_original>
// kernel: supersimplenet_forward.5
$region0: #{supersimplenet_forward.5}
  #allocation0 [shape = 'u32[]', space=smem, size = 0x4, offset = 0x4, fixed_abs, tag = 'smem constant byte address 0x4 - core index']
  #allocation1 [shape = 'u32[144,128]{1,0:T(1,128)}', space=vmem, size = 0x12000, scoped, tag = 'internal scratch']
  %s0 = inlined_call_operand.vmem [shape: f32[32,8], index: 0, kind: input, shape index: {}]
  %s1 = inlined_call_operand.vmem [shape: f32[2,8,8], index: 1, kind: input, shape index: {}]
  %s2 = inlined_call_operand.vmem [shape: f32[8,32], index: 2, kind: input, shape index: {}]
  %s3 = inlined_call_operand.hbm [shape: f32[2,32,32], index: 3, kind: output, shape index: {}]
  %s4 = sld [smem:[#allocation0]]
  $region45: #{supersimplenet_forward.5} parent=0
    _
  %s6 = ssub.s32 1, %s4
  %s7 = scalar_select 0, %s6, %s4
  $region1: #{supersimplenet_forward.5} parent=0
    #allocation2 [shape = 'u8[32768]{0}', space=vmem, size = 0x8000, scoped, tag = 'output window, operand 0']
    #allocation3 [shape = 's32[2]{0}', space=sflag, size = 0x8, scoped, tag = 'scoped memory for supersimplenet_forward.5']
    %8 = vsyncpa [#allocation3], 0
    %s9 = scalar_lea.sflag [#allocation3], 1
    %10 = vsyncpa %s9, 0
    loop: start=0, step=1, limit=4
    $region2: #{supersimplenet_forward.5} parent=1 // loop_pre_header
      _
    $region3: #{supersimplenet_forward.5} parent=1 // loop_header
      %s12 = sphi 0, %s16
      %p13 = scmp.ge.s32.totalorder %s12, 4
      %s20 = sphi 0, %s20
      %s22 = sphi 0, %s20
      %s23 = sphi 0, %s22
      %s37 = sphi 0, %s23
      %s43 = sphi 0, %s45
      %s46 = sphi 0, %s43
      %s47 = sphi 0, %s46
      %s63 = sphi 0, %s47
      %s67 = sphi 0, %s67
      %s69 = sphi 0, %s67
      %s70 = sphi 0, %s69
      %s84 = sphi 0, %s70
      %s90 = sphi 0, %s92
      %s93 = sphi 0, %s90
      %s94 = sphi 0, %s93
      %s110 = sphi 0, %s94
    $region4: #{supersimplenet_forward.5} parent=1 // loop_header_branch
      %15 = sbr.rel (%p13) target = $region8
    $region5: #{supersimplenet_forward.5} parent=1 // loop_body
      %s17 = ssub.s32 %s12, 1
      %s18 = ssub.s32 %s12, 2
      %s19 = sadd.s32 %s12, 1
      %s21 = sadd.s32 %s20, 1
      %p24 = scmp.eq.s32.totalorder %s12, 1
      %p25 = scmp.ne.s32.totalorder %s20, %s22
      %p26 = scmp.eq.s32.totalorder %s12, 0
      %p27 = por %p25, %p26
      %p28 = scmp.ne.s32.totalorder %s20, %s22
      %p29 = scmp.eq.s32.totalorder %s17, 1
      %p30 = por %p28, %p29
      %p31 = scmp.ne.s32.totalorder %s22, %s23
      %p32 = scmp.eq.s32.totalorder %s17, 0
      %p33 = por %p31, %p32
      %p34 = scmp.ne.s32.totalorder %s22, %s23
      %p35 = scmp.eq.s32.totalorder %s18, 1
      %p36 = por %p34, %p35
      %p38 = scmp.ne.s32.totalorder %s23, %s37
      %p39 = scmp.eq.s32.totalorder %s18, 0
      %p40 = por %p38, %p39
      %s41 = ssub.s32 %s12, %s19
      %p42 = scmp.eq.s32.totalorder %s41, 0
      %s44 = sadd.s32 %s43, 1
      %s45 = scalar_select %p42, %s43, %s44
      %p48 = pneg %p42
      %p49 = scmp.eq.s32.totalorder %s12, 1
      %p50 = por %p48, %p49
      %p51 = scmp.ne.s32.totalorder %s43, %s46
      %p52 = scmp.eq.s32.totalorder %s12, 0
      %p53 = por %p51, %p52
      %p54 = scmp.ne.s32.totalorder %s43, %s46
      %p55 = scmp.eq.s32.totalorder %s17, 1
      %p56 = por %p54, %p55
      %p57 = scmp.ne.s32.totalorder %s46, %s47
      %p58 = scmp.eq.s32.totalorder %s17, 0
      %p59 = por %p57, %p58
      %p60 = scmp.ne.s32.totalorder %s46, %s47
      %p61 = scmp.eq.s32.totalorder %s18, 1
      %p62 = por %p60, %p61
      %p64 = scmp.ne.s32.totalorder %s47, %s63
      %p65 = scmp.eq.s32.totalorder %s18, 0
      %p66 = por %p64, %p65
      %s68 = sadd.s32 %s67, 1
      %p71 = scmp.eq.s32.totalorder %s12, 1
      %p72 = scmp.ne.s32.totalorder %s67, %s69
      %p73 = scmp.eq.s32.totalorder %s12, 0
      %p74 = por %p72, %p73
      %p75 = scmp.ne.s32.totalorder %s67, %s69
      %p76 = scmp.eq.s32.totalorder %s17, 1
      %p77 = por %p75, %p76
      %p78 = scmp.ne.s32.totalorder %s69, %s70
      %p79 = scmp.eq.s32.totalorder %s17, 0
      %p80 = por %p78, %p79
      %p81 = scmp.ne.s32.totalorder %s69, %s70
      %p82 = scmp.eq.s32.totalorder %s18, 1
      %p83 = por %p81, %p82
      %p85 = scmp.ne.s32.totalorder %s70, %s84
      %p86 = scmp.eq.s32.totalorder %s18, 0
      %p87 = por %p85, %p86
      %s88 = ssub.s32 %s12, %s19
      %p89 = scmp.eq.s32.totalorder %s88, 0
      %s91 = sadd.s32 %s90, 1
      %s92 = scalar_select %p89, %s90, %s91
      %p95 = pneg %p89
      %p96 = scmp.eq.s32.totalorder %s12, 1
      %p97 = por %p95, %p96
      %p98 = scmp.ne.s32.totalorder %s90, %s93
      %p99 = scmp.eq.s32.totalorder %s12, 0
      %p100 = por %p98, %p99
      %p101 = scmp.ne.s32.totalorder %s90, %s93
      %p102 = scmp.eq.s32.totalorder %s17, 1
      %p103 = por %p101, %p102
      %p104 = scmp.ne.s32.totalorder %s93, %s94
      %p105 = scmp.eq.s32.totalorder %s17, 0
      %p106 = por %p104, %p105
      %p107 = scmp.ne.s32.totalorder %s93, %s94
      %p108 = scmp.eq.s32.totalorder %s18, 1
      %p109 = por %p107, %p108
      %p111 = scmp.ne.s32.totalorder %s94, %s110
      %p112 = scmp.eq.s32.totalorder %s18, 0
      %p113 = por %p111, %p112
      %p114 = scmp.le.s32.totalorder 1, %s12
      %p115 = scmp.lt.s32.totalorder %s12, 3
      %p116 = pnand %p114, %p115
      %p117 = pneg %p116
      // Predicated region
      $region9: #{supersimplenet_forward.5} parent=5 // pred_check
        _
      $region10: #{supersimplenet_forward.5} parent=5 // pred_check_branch
        %119 = sbr.rel (%p116) target = $region12
      $region11: #{supersimplenet_forward.5} parent=5 // pred_region
        %s120 = ssub.s32 %s12, 1
        // Predicated region
        $region13: #{supersimplenet_forward.5} parent=11 // pred_check
          %p121 = pneg %p33
        $region14: #{supersimplenet_forward.5} parent=11 // pred_check_branch
          %123 = sbr.rel (%p121) target = $region16
        $region15: #{supersimplenet_forward.5} parent=11 // pred_region
          _
        $region16: #{supersimplenet_forward.5} parent=11 // pred_fallthru
          _
        // Predicated region
        $region17: #{supersimplenet_forward.5} parent=11 // pred_check
          %p124 = pneg %p80
        $region18: #{supersimplenet_forward.5} parent=11 // pred_check_branch
          %126 = sbr.rel (%p124) target = $region20
        $region19: #{supersimplenet_forward.5} parent=11 // pred_region
          _
        $region20: #{supersimplenet_forward.5} parent=11 // pred_fallthru
          _
      $region12: #{supersimplenet_forward.5} parent=5 // pred_fallthru
        _
      %p127 = scmp.lt.s32.totalorder %s12, 2
      // Predicated region
      $region21: #{supersimplenet_forward.5} parent=5 // pred_check
        %p128 = pneg %p127
      $region22: #{supersimplenet_forward.5} parent=5 // pred_check_branch
        %130 = sbr.rel (%p128) target = $region24
      $region23: #{supersimplenet_forward.5} parent=5 // pred_region
        // Predicated region
        $region25: #{supersimplenet_forward.5} parent=23 // pred_check
          %p131 = pneg %p53
        $region26: #{supersimplenet_forward.5} parent=23 // pred_check_branch
          %133 = sbr.rel (%p131) target = $region28
        $region27: #{supersimplenet_forward.5} parent=23 // pred_region
          %p134 = scmp.lt.s32.totalorder %s12, 1
          %s135 = scalar_select %p134, %s12, 1
          %s136 = smul.addr %s135, 8
          %s137 = scalar_lea.vmem %s1, %s136
        $region28: #{supersimplenet_forward.5} parent=23 // pred_fallthru
          _
      $region24: #{supersimplenet_forward.5} parent=5 // pred_fallthru
        _
      %p138 = scmp.le.s32.totalorder 1, %s12
      %p139 = scmp.lt.s32.totalorder %s12, 3
      %p140 = pnand %p138, %p139
      %p141 = pneg %p140
      // Predicated region
      $region29: #{supersimplenet_forward.5} parent=5 // pred_check
        _
      $region30: #{supersimplenet_forward.5} parent=5 // pred_check_branch
        %143 = sbr.rel (%p140) target = $region32
      $region31: #{supersimplenet_forward.5} parent=5 // pred_region
        %s144 = ssub.s32 %s12, 1
        %p145 = pneg %p33
        %p146 = pneg %p30
        %p147 = scmp.lt.s32.totalorder %s17, 1
        %s148 = scalar_select %p147, %s17, 1
        %s149 = smul.addr %s148, 8
        %s150 = scalar_lea.vmem %s1, %s149
        %p151 = pneg %p59
        %p152 = pneg %p56
        %p153 = pneg %p80
        %p154 = pneg %p77
        %p155 = pneg %p106
        %p156 = pneg %p103
        %s157 = sand.u32 %s93, 1
        %s158 = scalar_lea.sflag [#allocation3], %s157
        %s159 = sand.u32 %s93, 1
        %s160 = smul.addr %s159, 32
        %s161 = scalar_lea.vmem [#allocation2], %s160
        %p162 = scmp.lt.s32.totalorder %s17, 1
        %s163 = scalar_select %p162, %s17, 1
        %s164 = smul.addr %s163, 8
        %s165 = scalar_lea.vmem %s1, %s164
        %v166 = vld [vmem:[%s165] sm:$0xff]
        %v167 = vld [vmem:[%s0] sm:$0xff]
        %v168 = vld [vmem:[%s0 + $0x8] sm:$0xff]
        %v169 = vld [vmem:[%s0 + $0x10] sm:$0xff]
        %v170 = vld [vmem:[%s0 + $0x18] sm:$0xff]
        %vm171 = vcmask 64512
        %v173 = vsel %vm171, %v167, 0
        %v176 = vsel %vm171, %v168, 0
        %v179 = vsel %vm171, %v169, 0
        %v182 = vsel %vm171, %v170, 0
        %184 = vmatprep.subr.mxu0 0.0
        %185 = vmatpush1.msra.mxu0 0.0
        %186 = vmatprep.subr.mxu0 0.0
        %187 = vmatpush1.msra.mxu0 0.0
        %188 = vmatprep.subr.mxu0 0.0
        %189 = vmatpush1.msra.mxu0 0.0
        %190 = vmatprep.subr.mxu0 0.0
        %191 = vmatpush1.msra.mxu0 0.0
        %192 = vmatprep.subr.mxu0 0.0
        %193 = vmatpush1.msra.mxu0 0.0
        %194 = vmatprep.subr.mxu0 0.0
        %195 = vmatpush1.msra.mxu0 0.0
        %196 = vmatprep.subr.mxu0 0.0
        %197 = vmatpush1.msra.mxu0 0.0
        %198 = vmatprep.subr.mxu0 0.0
        %199 = vmatpush1.msra.mxu0 0.0
        %200 = vmatprep.subr.mxu0 0.0
        %201 = vmatpush1.msra.mxu0 0.0
        %202 = vmatprep.subr.mxu0 0.0
        %203 = vmatpush1.msra.mxu0 0.0
        %204 = vmatprep.subr.mxu0 0.0
        %205 = vmatpush1.msra.mxu0 0.0
        %206 = vmatprep.subr.mxu0 0.0
        %207 = vmatpush1.msra.mxu0 0.0
        %208 = vmatprep.subr.mxu0 0.0
        %209 = vmatpush1.msra.mxu0 0.0
        %210 = vmatprep.subr.mxu0 0.0
        %211 = vmatpush1.msra.mxu0 0.0
        %212 = vmatprep.subr.mxu0 0.0
        %213 = vmatpush1.msra.mxu0 0.0
        %214 = vmatprep.subr.mxu0 0.0
        %215 = vmatpush1.msra.mxu0 %v166
        %216 = vmatprep.subr.mxu0 0.0
        %217 = vmatpush2.msra.mxu0 0.0
        %218 = vmatprep.subr.mxu0 0.0
        %219 = vmatpush2.msra.mxu0 0.0
        %220 = vmatprep.subr.mxu0 0.0
        %221 = vmatpush2.msra.mxu0 0.0
        %222 = vmatprep.subr.mxu0 0.0
        %223 = vmatpush2.msra.mxu0 0.0
        %224 = vmatprep.subr.mxu0 0.0
        %225 = vmatpush2.msra.mxu0 0.0
        %226 = vmatprep.subr.mxu0 0.0
        %227 = vmatpush2.msra.mxu0 0.0
        %228 = vmatprep.subr.mxu0 0.0
        %229 = vmatpush2.msra.mxu0 0.0
        %230 = vmatprep.subr.mxu0 0.0
        %231 = vmatpush2.msra.mxu0 0.0
        %232 = vmatprep.subr.mxu0 0.0
        %233 = vmatpush2.msra.mxu0 0.0
        %234 = vmatprep.subr.mxu0 0.0
        %235 = vmatpush2.msra.mxu0 0.0
        %236 = vmatprep.subr.mxu0 0.0
        %237 = vmatpush2.msra.mxu0 0.0
        %238 = vmatprep.subr.mxu0 0.0
        %239 = vmatpush2.msra.mxu0 0.0
        %240 = vmatprep.subr.mxu0 0.0
        %241 = vmatpush2.msra.mxu0 0.0
        %242 = vmatprep.subr.mxu0 0.0
        %243 = vmatpush2.msra.mxu0 0.0
        %244 = vmatprep.subr.mxu0 0.0
        %245 = vmatpush2.msra.mxu0 0.0
        %246 = vmatprep.subr.mxu0 0.0
        %247 = vmatpush2.msra.mxu0 0.0
        %248 = vmatprep.mubr.f32.mxu0 0.0
        %249 = vmatmul.mubr.f32.gmra.mxu0 %v173
        %v250 = vpop.f32.mrf.mxu0
        %v251 = vadd.f32 0.0, %v250
        %v252 = vpop.f32.mrf.mxu0
        %253 = vmatprep.mubr.f32.mxu0 0.0
        %254 = vmatmul.mubr.f32.gmra.mxu0 %v176
        %v255 = vpop.f32.mrf.mxu0
        %v256 = vadd.f32 0.0, %v255
        %v257 = vpop.f32.mrf.mxu0
        %258 = vmatprep.mubr.f32.mxu0 0.0
        %259 = vmatmul.mubr.f32.gmra.mxu0 %v179
        %v260 = vpop.f32.mrf.mxu0
        %v261 = vadd.f32 0.0, %v260
        %v262 = vpop.f32.mrf.mxu0
        %263 = vmatprep.mubr.f32.mxu0 0.0
        %264 = vmatmul.mubr.f32.gmra.mxu0 %v182
        %v265 = vpop.f32.mrf.mxu0
        %v266 = vadd.f32 0.0, %v265
        %v267 = vpop.f32.mrf.mxu0
        %268 = vdwg.mxu0
        %v269 = vld [vmem:[%s2] sm:$0xff]
        %v271 = vsel %vm171, %v251, 0
        %v274 = vsel %vm171, %v256, 0
        %v277 = vsel %vm171, %v261, 0
        %v280 = vsel %vm171, %v266, 0
        %282 = vmatprep.subr.mxu0 0.0
        %283 = vmatpush1.msra.mxu0 0.0
        %284 = vmatprep.subr.mxu0 0.0
        %285 = vmatpush1.msra.mxu0 0.0
        %286 = vmatprep.subr.mxu0 0.0
        %287 = vmatpush1.msra.mxu0 0.0
        %288 = vmatprep.subr.mxu0 0.0
        %289 = vmatpush1.msra.mxu0 0.0
        %290 = vmatprep.subr.mxu0 0.0
        %291 = vmatpush1.msra.mxu0 0.0
        %292 = vmatprep.subr.mxu0 0.0
        %293 = vmatpush1.msra.mxu0 0.0
        %294 = vmatprep.subr.mxu0 0.0
        %295 = vmatpush1.msra.mxu0 0.0
        %296 = vmatprep.subr.mxu0 0.0
        %297 = vmatpush1.msra.mxu0 0.0
        %298 = vmatprep.subr.mxu0 0.0
        %299 = vmatpush1.msra.mxu0 0.0
        %300 = vmatprep.subr.mxu0 0.0
        %301 = vmatpush1.msra.mxu0 0.0
        %302 = vmatprep.subr.mxu0 0.0
        %303 = vmatpush1.msra.mxu0 0.0
        %304 = vmatprep.subr.mxu0 0.0
        %305 = vmatpush1.msra.mxu0 0.0
        %306 = vmatprep.subr.mxu0 0.0
        %307 = vmatpush1.msra.mxu0 0.0
        %308 = vmatprep.subr.mxu0 0.0
        %309 = vmatpush1.msra.mxu0 0.0
        %310 = vmatprep.subr.mxu0 0.0
        %311 = vmatpush1.msra.mxu0 0.0
        %312 = vmatprep.subr.mxu0 0.0
        %313 = vmatpush1.msra.mxu0 %v269
        %314 = vmatprep.subr.mxu0 0.0
        %315 = vmatpush2.msra.mxu0 0.0
        %316 = vmatprep.subr.mxu0 0.0
        %317 = vmatpush2.msra.mxu0 0.0
        %318 = vmatprep.subr.mxu0 0.0
        %319 = vmatpush2.msra.mxu0 0.0
        %320 = vmatprep.subr.mxu0 0.0
        %321 = vmatpush2.msra.mxu0 0.0
        %322 = vmatprep.subr.mxu0 0.0
        %323 = vmatpush2.msra.mxu0 0.0
        %324 = vmatprep.subr.mxu0 0.0
        %325 = vmatpush2.msra.mxu0 0.0
        %326 = vmatprep.subr.mxu0 0.0
        %327 = vmatpush2.msra.mxu0 0.0
        %328 = vmatprep.subr.mxu0 0.0
        %329 = vmatpush2.msra.mxu0 0.0
        %330 = vmatprep.subr.mxu0 0.0
        %331 = vmatpush2.msra.mxu0 0.0
        %332 = vmatprep.subr.mxu0 0.0
        %333 = vmatpush2.msra.mxu0 0.0
        %334 = vmatprep.subr.mxu0 0.0
        %335 = vmatpush2.msra.mxu0 0.0
        %336 = vmatprep.subr.mxu0 0.0
        %337 = vmatpush2.msra.mxu0 0.0
        %338 = vmatprep.subr.mxu0 0.0
        %339 = vmatpush2.msra.mxu0 0.0
        %340 = vmatprep.subr.mxu0 0.0
        %341 = vmatpush2.msra.mxu0 0.0
        %342 = vmatprep.subr.mxu0 0.0
        %343 = vmatpush2.msra.mxu0 0.0
        %344 = vmatprep.subr.mxu0 0.0
        %345 = vmatpush2.msra.mxu0 0.0
        %346 = vmatprep.mubr.f32.mxu0 0.0
        %347 = vmatmul.mubr.f32.gmra.mxu0 %v271
        %v348 = vpop.f32.mrf.mxu0
        %v349 = vadd.f32 0.0, %v348
        %v350 = vpop.f32.mrf.mxu0
        %351 = vmatprep.mubr.f32.mxu0 0.0
        %352 = vmatmul.mubr.f32.gmra.mxu0 %v274
        %v353 = vpop.f32.mrf.mxu0
        %v354 = vadd.f32 0.0, %v353
        %v355 = vpop.f32.mrf.mxu0
        %356 = vmatprep.mubr.f32.mxu0 0.0
        %357 = vmatmul.mubr.f32.gmra.mxu0 %v277
        %v358 = vpop.f32.mrf.mxu0
        %v359 = vadd.f32 0.0, %v358
        %v360 = vpop.f32.mrf.mxu0
        %361 = vmatprep.mubr.f32.mxu0 0.0
        %362 = vmatmul.mubr.f32.gmra.mxu0 %v280
        %v363 = vpop.f32.mrf.mxu0
        %v364 = vadd.f32 0.0, %v363
        %v365 = vpop.f32.mrf.mxu0
        %366 = vdwg.mxu0
        %vm367 = vcmask 261120
        %368 = vst.msk [vmem:[%s161] sm:$0xff] %vm367, %v349
        %369 = vst.msk [vmem:[%s161 + $0x8] sm:$0xff] %vm367, %v354
        %370 = vst.msk [vmem:[%s161 + $0x10] sm:$0xff] %vm367, %v359
        %371 = vst.msk [vmem:[%s161 + $0x18] sm:$0xff] %vm367, %v364
        %s372 = sand.u32 %s93, 1
        %s373 = scalar_lea.sflag [#allocation3], %s372
        %s374 = sand.u32 %s93, 1
        %s375 = smul.addr %s374, 32
        %s376 = scalar_lea.vmem [#allocation2], %s375
        // Predicated region
        $region33: #{supersimplenet_forward.5} parent=31 // pred_check
          %p377 = pneg %p103
        $region34: #{supersimplenet_forward.5} parent=31 // pred_check_branch
          %379 = sbr.rel (%p377) target = $region36
        $region35: #{supersimplenet_forward.5} parent=31 // pred_region
          %s381 = ssub.s32 512, 512
          %382 = vsyncadd %s373, %s381
          %s383 = smul.addr %s17, 4
          %s384 = smul.addr %s383, 128
          %s385 = scalar_lea.hbm %s3, %s384
          %s386 = sshll.u32 %s376, 4
          %s387 = int_to_ptr.vmem [resolvable:$true] %s386
          %392 = dma.vmem_to_hbm [thread:$0]  %s387, 512, %s385, %s373, 128, 128, 8
        $region36: #{supersimplenet_forward.5} parent=31 // pred_fallthru
          _
      $region32: #{supersimplenet_forward.5} parent=5 // pred_fallthru
        _
      %p393 = scmp.le.s32.totalorder 2, %s12
      // Predicated region
      $region37: #{supersimplenet_forward.5} parent=5 // pred_check
        %p394 = pneg %p393
      $region38: #{supersimplenet_forward.5} parent=5 // pred_check_branch
        %396 = sbr.rel (%p394) target = $region40
      $region39: #{supersimplenet_forward.5} parent=5 // pred_region
        %s397 = ssub.s32 %s12, 2
        // Predicated region
        $region41: #{supersimplenet_forward.5} parent=39 // pred_check
          %p398 = pneg %p109
        $region42: #{supersimplenet_forward.5} parent=39 // pred_check_branch
          %400 = sbr.rel (%p398) target = $region44
        $region43: #{supersimplenet_forward.5} parent=39 // pred_region
          %s401 = sand.u32 %s94, 1
          %s402 = scalar_lea.sflag [#allocation3], %s401
          %s403 = sand.u32 %s94, 1
          %s404 = smul.addr %s403, 32
          %s405 = scalar_lea.vmem [#allocation2], %s404
          %406 = dma.done %s402, 512
        $region44: #{supersimplenet_forward.5} parent=39 // pred_fallthru
          _
      $region40: #{supersimplenet_forward.5} parent=5 // pred_fallthru
        _
    $region6: #{supersimplenet_forward.5} parent=1 // loop_footer
      %s16 = sadd.s32 1, %s12
    $region7: #{supersimplenet_forward.5} parent=1 // loop_footer_branch
      %11 = sbr.rel target = $region3
    $region8: #{supersimplenet_forward.5} parent=1 // loop_exit
      _
    %407 = vsyncpa [#allocation3], 1
    %s408 = scalar_lea.sflag [#allocation3], 1
    %409 = vsyncpa %s408, 1

// kernel: supersimplenet_forward.3
$region0: #{supersimplenet_forward.3}
  #allocation0 [shape = 'u32[]', space=smem, size = 0x4, offset = 0x4, fixed_abs, tag = 'smem constant byte address 0x4 - core index']
  #allocation1 [shape = 'u32[144,128]{1,0:T(1,128)}', space=vmem, size = 0x12000, scoped, tag = 'internal scratch']
  #allocation2 [shape = 'f32[1,1]{1,0:T(1,128)S(1)}', space=vmem, size = 0x200, scoped, tag = 'scoped memory for supersimplenet_forward.3']
  %s0 = inlined_call_operand.vmem [shape: f32[128,3], index: 0, kind: input, shape index: {}]
  %s1 = inlined_call_operand.vmem [shape: f32[3,128], index: 1, kind: input, shape index: {}]
  %s2 = inlined_call_operand.vmem [shape: f32[1,128], index: 2, kind: input, shape index: {}]
  %s3 = inlined_call_operand.vmem [shape: bf16[128,1024], index: 3, kind: input, shape index: {}]
  %s4 = inlined_call_operand.vmem [shape: f32[1,1024], index: 4, kind: input, shape index: {}]
  %s5 = inlined_call_operand.vmem [shape: f32[1,1024], index: 5, kind: input, shape index: {}]
  %s6 = inlined_call_operand.<no memory space> [shape: f32[1,1], index: 6, kind: input, shape index: {}]
  %s7 = inlined_call_operand.vmem [shape: bf16[128,128], index: 7, kind: output, shape index: {0}]
  %s8 = inlined_call_operand.vmem [shape: f32[128,1], index: 8, kind: output, shape index: {1}]
  %9 = xla_tuple %s7, %s8
  %s10 = sld [smem:[#allocation0]]
  $region69: #{supersimplenet_forward.3} parent=0
    _
  %s12 = ssub.s32 1, %s10
  %s13 = scalar_select 0, %s12, %s10
  %v14 = vstv %s6
  %15 = vst [vmem:[#allocation2] sm:$0x1] %v14
  loop: start=0, step=1, limit=4
  $region2: #{supersimplenet_forward.3} parent=0 // loop_pre_header
    _
  $region3: #{supersimplenet_forward.3} parent=0 // loop_header
    %s17 = sphi 0, %s21
    %p18 = scmp.ge.s32.totalorder %s17, 4
    %s27 = sphi 0, %s29
    %s30 = sphi 0, %s27
    %s31 = sphi 0, %s30
    %s47 = sphi 0, %s31
    %s51 = sphi 0, %s51
    %s53 = sphi 0, %s51
    %s54 = sphi 0, %s53
    %s68 = sphi 0, %s54
    %s72 = sphi 0, %s72
    %s74 = sphi 0, %s72
    %s75 = sphi 0, %s74
    %s89 = sphi 0, %s75
    %s93 = sphi 0, %s93
    %s95 = sphi 0, %s93
    %s96 = sphi 0, %s95
    %s110 = sphi 0, %s96
    %s114 = sphi 0, %s114
    %s116 = sphi 0, %s114
    %s117 = sphi 0, %s116
    %s131 = sphi 0, %s117
    %s135 = sphi 0, %s135
    %s137 = sphi 0, %s135
    %s138 = sphi 0, %s137
    %s152 = sphi 0, %s138
    %s156 = sphi 0, %s156
    %s158 = sphi 0, %s156
    %s159 = sphi 0, %s158
    %s173 = sphi 0, %s159
    %s179 = sphi 0, %s181
    %s182 = sphi 0, %s179
    %s183 = sphi 0, %s182
    %s199 = sphi 0, %s183
    %s205 = sphi 0, %s207
    %s208 = sphi 0, %s205
    %s209 = sphi 0, %s208
    %s225 = sphi 0, %s209
  $region4: #{supersimplenet_forward.3} parent=0 // loop_header_branch
    %20 = sbr.rel (%p18) target = $region8
  $region5: #{supersimplenet_forward.3} parent=0 // loop_body
    %s22 = ssub.s32 %s17, 1
    %s23 = ssub.s32 %s17, 2
    %s24 = sadd.s32 %s17, 1
    %s25 = ssub.s32 %s17, %s24
    %p26 = scmp.eq.s32.totalorder %s25, 0
    %s28 = sadd.s32 %s27, 1
    %s29 = scalar_select %p26, %s27, %s28
    %p32 = pneg %p26
    %p33 = scmp.eq.s32.totalorder %s17, 1
    %p34 = por %p32, %p33
    %p35 = scmp.ne.s32.totalorder %s27, %s30
    %p36 = scmp.eq.s32.totalorder %s17, 0
    %p37 = por %p35, %p36
    %p38 = scmp.ne.s32.totalorder %s27, %s30
    %p39 = scmp.eq.s32.totalorder %s22, 1
    %p40 = por %p38, %p39
    %p41 = scmp.ne.s32.totalorder %s30, %s31
    %p42 = scmp.eq.s32.totalorder %s22, 0
    %p43 = por %p41, %p42
    %p44 = scmp.ne.s32.totalorder %s30, %s31
    %p45 = scmp.eq.s32.totalorder %s23, 1
    %p46 = por %p44, %p45
    %p48 = scmp.ne.s32.totalorder %s31, %s47
    %p49 = scmp.eq.s32.totalorder %s23, 0
    %p50 = por %p48, %p49
    %s52 = sadd.s32 %s51, 1
    %p55 = scmp.eq.s32.totalorder %s17, 1
    %p56 = scmp.ne.s32.totalorder %s51, %s53
    %p57 = scmp.eq.s32.totalorder %s17, 0
    %p58 = por %p56, %p57
    %p59 = scmp.ne.s32.totalorder %s51, %s53
    %p60 = scmp.eq.s32.totalorder %s22, 1
    %p61 = por %p59, %p60
    %p62 = scmp.ne.s32.totalorder %s53, %s54
    %p63 = scmp.eq.s32.totalorder %s22, 0
    %p64 = por %p62, %p63
    %p65 = scmp.ne.s32.totalorder %s53, %s54
    %p66 = scmp.eq.s32.totalorder %s23, 1
    %p67 = por %p65, %p66
    %p69 = scmp.ne.s32.totalorder %s54, %s68
    %p70 = scmp.eq.s32.totalorder %s23, 0
    %p71 = por %p69, %p70
    %s73 = sadd.s32 %s72, 1
    %p76 = scmp.eq.s32.totalorder %s17, 1
    %p77 = scmp.ne.s32.totalorder %s72, %s74
    %p78 = scmp.eq.s32.totalorder %s17, 0
    %p79 = por %p77, %p78
    %p80 = scmp.ne.s32.totalorder %s72, %s74
    %p81 = scmp.eq.s32.totalorder %s22, 1
    %p82 = por %p80, %p81
    %p83 = scmp.ne.s32.totalorder %s74, %s75
    %p84 = scmp.eq.s32.totalorder %s22, 0
    %p85 = por %p83, %p84
    %p86 = scmp.ne.s32.totalorder %s74, %s75
    %p87 = scmp.eq.s32.totalorder %s23, 1
    %p88 = por %p86, %p87
    %p90 = scmp.ne.s32.totalorder %s75, %s89
    %p91 = scmp.eq.s32.totalorder %s23, 0
    %p92 = por %p90, %p91
    %s94 = sadd.s32 %s93, 1
    %p97 = scmp.eq.s32.totalorder %s17, 1
    %p98 = scmp.ne.s32.totalorder %s93, %s95
    %p99 = scmp.eq.s32.totalorder %s17, 0
    %p100 = por %p98, %p99
    %p101 = scmp.ne.s32.totalorder %s93, %s95
    %p102 = scmp.eq.s32.totalorder %s22, 1
    %p103 = por %p101, %p102
    %p104 = scmp.ne.s32.totalorder %s95, %s96
    %p105 = scmp.eq.s32.totalorder %s22, 0
    %p106 = por %p104, %p105
    %p107 = scmp.ne.s32.totalorder %s95, %s96
    %p108 = scmp.eq.s32.totalorder %s23, 1
    %p109 = por %p107, %p108
    %p111 = scmp.ne.s32.totalorder %s96, %s110
    %p112 = scmp.eq.s32.totalorder %s23, 0
    %p113 = por %p111, %p112
    %s115 = sadd.s32 %s114, 1
    %p118 = scmp.eq.s32.totalorder %s17, 1
    %p119 = scmp.ne.s32.totalorder %s114, %s116
    %p120 = scmp.eq.s32.totalorder %s17, 0
    %p121 = por %p119, %p120
    %p122 = scmp.ne.s32.totalorder %s114, %s116
    %p123 = scmp.eq.s32.totalorder %s22, 1
    %p124 = por %p122, %p123
    %p125 = scmp.ne.s32.totalorder %s116, %s117
    %p126 = scmp.eq.s32.totalorder %s22, 0
    %p127 = por %p125, %p126
    %p128 = scmp.ne.s32.totalorder %s116, %s117
    %p129 = scmp.eq.s32.totalorder %s23, 1
    %p130 = por %p128, %p129
    %p132 = scmp.ne.s32.totalorder %s117, %s131
    %p133 = scmp.eq.s32.totalorder %s23, 0
    %p134 = por %p132, %p133
    %s136 = sadd.s32 %s135, 1
    %p139 = scmp.eq.s32.totalorder %s17, 1
    %p140 = scmp.ne.s32.totalorder %s135, %s137
    %p141 = scmp.eq.s32.totalorder %s17, 0
    %p142 = por %p140, %p141
    %p143 = scmp.ne.s32.totalorder %s135, %s137
    %p144 = scmp.eq.s32.totalorder %s22, 1
    %p145 = por %p143, %p144
    %p146 = scmp.ne.s32.totalorder %s137, %s138
    %p147 = scmp.eq.s32.totalorder %s22, 0
    %p148 = por %p146, %p147
    %p149 = scmp.ne.s32.totalorder %s137, %s138
    %p150 = scmp.eq.s32.totalorder %s23, 1
    %p151 = por %p149, %p150
    %p153 = scmp.ne.s32.totalorder %s138, %s152
    %p154 = scmp.eq.s32.totalorder %s23, 0
    %p155 = por %p153, %p154
    %s157 = sadd.s32 %s156, 1
    %p160 = scmp.eq.s32.totalorder %s17, 1
    %p161 = scmp.ne.s32.totalorder %s156, %s158
    %p162 = scmp.eq.s32.totalorder %s17, 0
    %p163 = por %p161, %p162
    %p164 = scmp.ne.s32.totalorder %s156, %s158
    %p165 = scmp.eq.s32.totalorder %s22, 1
    %p166 = por %p164, %p165
    %p167 = scmp.ne.s32.totalorder %s158, %s159
    %p168 = scmp.eq.s32.totalorder %s22, 0
    %p169 = por %p167, %p168
    %p170 = scmp.ne.s32.totalorder %s158, %s159
    %p171 = scmp.eq.s32.totalorder %s23, 1
    %p172 = por %p170, %p171
    %p174 = scmp.ne.s32.totalorder %s159, %s173
    %p175 = scmp.eq.s32.totalorder %s23, 0
    %p176 = por %p174, %p175
    %s177 = ssub.s32 %s17, %s24
    %p178 = scmp.eq.s32.totalorder %s177, 0
    %s180 = sadd.s32 %s179, 1
    %s181 = scalar_select %p178, %s179, %s180
    %p184 = pneg %p178
    %p185 = scmp.eq.s32.totalorder %s17, 1
    %p186 = por %p184, %p185
    %p187 = scmp.ne.s32.totalorder %s179, %s182
    %p188 = scmp.eq.s32.totalorder %s17, 0
    %p189 = por %p187, %p188
    %p190 = scmp.ne.s32.totalorder %s179, %s182
    %p191 = scmp.eq.s32.totalorder %s22, 1
    %p192 = por %p190, %p191
    %p193 = scmp.ne.s32.totalorder %s182, %s183
    %p194 = scmp.eq.s32.totalorder %s22, 0
    %p195 = por %p193, %p194
    %p196 = scmp.ne.s32.totalorder %s182, %s183
    %p197 = scmp.eq.s32.totalorder %s23, 1
    %p198 = por %p196, %p197
    %p200 = scmp.ne.s32.totalorder %s183, %s199
    %p201 = scmp.eq.s32.totalorder %s23, 0
    %p202 = por %p200, %p201
    %s203 = ssub.s32 %s17, %s24
    %p204 = scmp.eq.s32.totalorder %s203, 0
    %s206 = sadd.s32 %s205, 1
    %s207 = scalar_select %p204, %s205, %s206
    %p210 = pneg %p204
    %p211 = scmp.eq.s32.totalorder %s17, 1
    %p212 = por %p210, %p211
    %p213 = scmp.ne.s32.totalorder %s205, %s208
    %p214 = scmp.eq.s32.totalorder %s17, 0
    %p215 = por %p213, %p214
    %p216 = scmp.ne.s32.totalorder %s205, %s208
    %p217 = scmp.eq.s32.totalorder %s22, 1
    %p218 = por %p216, %p217
    %p219 = scmp.ne.s32.totalorder %s208, %s209
    %p220 = scmp.eq.s32.totalorder %s22, 0
    %p221 = por %p219, %p220
    %p222 = scmp.ne.s32.totalorder %s208, %s209
    %p223 = scmp.eq.s32.totalorder %s23, 1
    %p224 = por %p222, %p223
    %p226 = scmp.ne.s32.totalorder %s209, %s225
    %p227 = scmp.eq.s32.totalorder %s23, 0
    %p228 = por %p226, %p227
    %p229 = scmp.le.s32.totalorder 1, %s17
    %p230 = scmp.lt.s32.totalorder %s17, 3
    %p231 = pnand %p229, %p230
    %p232 = pneg %p231
    // Predicated region
    $region9: #{supersimplenet_forward.3} parent=5 // pred_check
      _
    $region10: #{supersimplenet_forward.3} parent=5 // pred_check_branch
      %234 = sbr.rel (%p231) target = $region12
    $region11: #{supersimplenet_forward.3} parent=5 // pred_region
      %s235 = ssub.s32 %s17, 1
      // Predicated region
      $region13: #{supersimplenet_forward.3} parent=11 // pred_check
        %p236 = pneg %p64
      $region14: #{supersimplenet_forward.3} parent=11 // pred_check_branch
        %238 = sbr.rel (%p236) target = $region16
      $region15: #{supersimplenet_forward.3} parent=11 // pred_region
        _
      $region16: #{supersimplenet_forward.3} parent=11 // pred_fallthru
        _
      // Predicated region
      $region17: #{supersimplenet_forward.3} parent=11 // pred_check
        %p239 = pneg %p85
      $region18: #{supersimplenet_forward.3} parent=11 // pred_check_branch
        %241 = sbr.rel (%p239) target = $region20
      $region19: #{supersimplenet_forward.3} parent=11 // pred_region
        _
      $region20: #{supersimplenet_forward.3} parent=11 // pred_fallthru
        _
      // Predicated region
      $region21: #{supersimplenet_forward.3} parent=11 // pred_check
        %p242 = pneg %p106
      $region22: #{supersimplenet_forward.3} parent=11 // pred_check_branch
        %244 = sbr.rel (%p242) target = $region24
      $region23: #{supersimplenet_forward.3} parent=11 // pred_region
        _
      $region24: #{supersimplenet_forward.3} parent=11 // pred_fallthru
        _
      // Predicated region
      $region25: #{supersimplenet_forward.3} parent=11 // pred_check
        %p245 = pneg %p127
      $region26: #{supersimplenet_forward.3} parent=11 // pred_check_branch
        %247 = sbr.rel (%p245) target = $region28
      $region27: #{supersimplenet_forward.3} parent=11 // pred_region
        _
      $region28: #{supersimplenet_forward.3} parent=11 // pred_fallthru
        _
      // Predicated region
      $region29: #{supersimplenet_forward.3} parent=11 // pred_check
        %p248 = pneg %p148
      $region30: #{supersimplenet_forward.3} parent=11 // pred_check_branch
        %250 = sbr.rel (%p248) target = $region32
      $region31: #{supersimplenet_forward.3} parent=11 // pred_region
        _
      $region32: #{supersimplenet_forward.3} parent=11 // pred_fallthru
        _
      // Predicated region
      $region33: #{supersimplenet_forward.3} parent=11 // pred_check
        %p251 = pneg %p169
      $region34: #{supersimplenet_forward.3} parent=11 // pred_check_branch
        %253 = sbr.rel (%p251) target = $region36
      $region35: #{supersimplenet_forward.3} parent=11 // pred_region
        _
      $region36: #{supersimplenet_forward.3} parent=11 // pred_fallthru
        _
    $region12: #{supersimplenet_forward.3} parent=5 // pred_fallthru
      _
    %p254 = scmp.lt.s32.totalorder %s17, 2
    // Predicated region
    $region37: #{supersimplenet_forward.3} parent=5 // pred_check
      %p255 = pneg %p254
    $region38: #{supersimplenet_forward.3} parent=5 // pred_check_branch
      %257 = sbr.rel (%p255) target = $region40
    $region39: #{supersimplenet_forward.3} parent=5 // pred_region
      // Predicated region
      $region41: #{supersimplenet_forward.3} parent=39 // pred_check
        %p258 = pneg %p37
      $region42: #{supersimplenet_forward.3} parent=39 // pred_check_branch
        %260 = sbr.rel (%p258) target = $region44
      $region43: #{supersimplenet_forward.3} parent=39 // pred_region
        %s261 = smul.u32 8, %s17
        %p262 = scmp.lt.s32.totalorder %s261, 15
        %s263 = scalar_select %p262, %s261, 15
        %s264 = smul.addr %s263, 8
        %s265 = scalar_lea.vmem %s0, %s264
        %s266 = smul.u32 8, %s17
      $region44: #{supersimplenet_forward.3} parent=39 // pred_fallthru
        _
    $region40: #{supersimplenet_forward.3} parent=5 // pred_fallthru
      _
    %p267 = scmp.le.s32.totalorder 1, %s17
    %p268 = scmp.lt.s32.totalorder %s17, 3
    %p269 = pnand %p267, %p268
    %p270 = pneg %p269
    // Predicated region
    $region45: #{supersimplenet_forward.3} parent=5 // pred_check
      _
    $region46: #{supersimplenet_forward.3} parent=5 // pred_check_branch
      %272 = sbr.rel (%p269) target = $region48
    $region47: #{supersimplenet_forward.3} parent=5 // pred_region
      %s273 = ssub.s32 %s17, 1
      %s274 = smul.u32 8, %s22
      %p275 = scmp.lt.s32.totalorder %s274, 15
      %s276 = scalar_select %p275, %s274, 15
      %s277 = smul.addr %s276, 8
      %s278 = scalar_lea.vmem %s0, %s277
      %p279 = pneg %p43
      %p280 = pneg %p40
      %p281 = pneg %p64
      %p282 = pneg %p61
      %p283 = pneg %p85
      %p284 = pneg %p82
      %p285 = pneg %p106
      %p286 = pneg %p103
      %p287 = pneg %p127
      %p288 = pneg %p124
      %p289 = pneg %p148
      %p290 = pneg %p145
      %p291 = pneg %p169
      %p292 = pneg %p166
      %p293 = pneg %p195
      %p294 = pneg %p192
      %s295 = smul.u32 8, %s22
      %p296 = scmp.lt.s32.totalorder %s295, 15
      %s297 = scalar_select %p296, %s295, 15
      %s298 = smul.addr %s297, 4
      %s299 = scalar_lea.vmem %s7, %s298
      %p300 = pneg %p221
      %p301 = pneg %p218
      %s302 = smul.u32 8, %s22
      %p303 = scmp.lt.s32.totalorder %s302, 15
      %s304 = scalar_select %p303, %s302, 15
      %s305 = smul.addr %s304, 8
      %s306 = scalar_lea.vmem %s8, %s305
      %s307 = smul.u32 8, %s22
      %p308 = scmp.lt.s32.totalorder %s307, 15
      %s309 = scalar_select %p308, %s307, 15
      %s310 = smul.addr %s309, 8
      %s311 = scalar_lea.vmem %s0, %s310
      %s312 = smul.u32 8, %s22
      %s313 = smul.u32 8, %s22
      %p314 = scmp.lt.s32.totalorder %s313, 15
      %s315 = scalar_select %p314, %s313, 15
      %s316 = smul.addr %s315, 4
      %s317 = scalar_lea.vmem %s7, %s316
      %s318 = smul.u32 8, %s22
      %s319 = smul.u32 8, %s22
      %p320 = scmp.lt.s32.totalorder %s319, 15
      %s321 = scalar_select %p320, %s319, 15
      %s322 = smul.addr %s321, 8
      %s323 = scalar_lea.vmem %s8, %s322
      %s324 = smul.u32 8, %s22
      %v326 = vld [vmem:[%s311] sm:$0xff]
      %v327 = vld [vmem:[%s311 + $0x8] sm:$0xff]
      %v328 = vld [vmem:[%s311 + $0x10] sm:$0xff]
      %v329 = vld [vmem:[%s311 + $0x18] sm:$0xff]
      %v330 = vld [vmem:[%s311 + $0x20] sm:$0xff]
      %v331 = vld [vmem:[%s311 + $0x28] sm:$0xff]
      %v332 = vld [vmem:[%s311 + $0x30] sm:$0xff]
      %v333 = vld [vmem:[%s311 + $0x38] sm:$0xff]
      %v334 = vld [vmem:[%s1] sm:$0x7]
      %336 = vset.pattern.permute.xlu0 0
      %337 = vperm.xlu0 %336, %v326
      %v338 = vpop.permute.xlu0 %337
      %341 = vset.pattern.permute.xlu0 0
      %342 = vperm.xlu0 %341, %v327
      %v343 = vpop.permute.xlu0 %342
      %346 = vset.pattern.permute.xlu0 0
      %347 = vperm.xlu0 %346, %v328
      %v348 = vpop.permute.xlu0 %347
      %351 = vset.pattern.permute.xlu0 0
      %352 = vperm.xlu0 %351, %v329
      %v353 = vpop.permute.xlu0 %352
      %356 = vset.pattern.permute.xlu0 0
      %357 = vperm.xlu0 %356, %v330
      %v358 = vpop.permute.xlu0 %357
      %361 = vset.pattern.permute.xlu0 0
      %362 = vperm.xlu0 %361, %v331
      %v363 = vpop.permute.xlu0 %362
      %366 = vset.pattern.permute.xlu0 0
      %367 = vperm.xlu0 %366, %v332
      %v368 = vpop.permute.xlu0 %367
      %371 = vset.pattern.permute.xlu0 0
      %372 = vperm.xlu0 %371, %v333
      %v373 = vpop.permute.xlu0 %372
      %v375 = vlaneseq
      %v376 = vshrl.u32 %v375, 7
      %v377 = vsub.s32 0, %v376
      %v378 = vrot.slane %v334, %v377
      %v379 = vmul.f32 %v338, %v378
      %v380 = vmul.f32 %v343, %v378
      %v381 = vmul.f32 %v348, %v378
      %v382 = vmul.f32 %v353, %v378
      %v383 = vmul.f32 %v358, %v378
      %v384 = vmul.f32 %v363, %v378
      %v385 = vmul.f32 %v368, %v378
      %v386 = vmul.f32 %v373, %v378
      %387 = vset.pattern.permute.xlu0 1
      %388 = vperm.xlu0 %387, %v326
      %v389 = vpop.permute.xlu0 %388
      %391 = vset.pattern.permute.xlu0 1
      %392 = vperm.xlu0 %391, %v327
      %v393 = vpop.permute.xlu0 %392
      %395 = vset.pattern.permute.xlu0 1
      %396 = vperm.xlu0 %395, %v328
      %v397 = vpop.permute.xlu0 %396
      %399 = vset.pattern.permute.xlu0 1
      %400 = vperm.xlu0 %399, %v329
      %v401 = vpop.permute.xlu0 %400
      %403 = vset.pattern.permute.xlu0 1
      %404 = vperm.xlu0 %403, %v330
      %v405 = vpop.permute.xlu0 %404
      %407 = vset.pattern.permute.xlu0 1
      %408 = vperm.xlu0 %407, %v331
      %v409 = vpop.permute.xlu0 %408
      %411 = vset.pattern.permute.xlu0 1
      %412 = vperm.xlu0 %411, %v332
      %v413 = vpop.permute.xlu0 %412
      %415 = vset.pattern.permute.xlu0 1
      %416 = vperm.xlu0 %415, %v333
      %v417 = vpop.permute.xlu0 %416
      %v419 = vlaneseq
      %v420 = vshrl.u32 %v419, 7
      %v421 = vsub.s32 1, %v420
      %v422 = vrot.slane %v334, %v421
      %v423 = vmul.f32 %v389, %v422
      %v424 = vmul.f32 %v393, %v422
      %v425 = vmul.f32 %v397, %v422
      %v426 = vmul.f32 %v401, %v422
      %v427 = vmul.f32 %v405, %v422
      %v428 = vmul.f32 %v409, %v422
      %v429 = vmul.f32 %v413, %v422
      %v430 = vmul.f32 %v417, %v422
      %v431 = vadd.f32 %v379, %v423
      %v432 = vadd.f32 %v380, %v424
      %v433 = vadd.f32 %v381, %v425
      %v434 = vadd.f32 %v382, %v426
      %v435 = vadd.f32 %v383, %v427
      %v436 = vadd.f32 %v384, %v428
      %v437 = vadd.f32 %v385, %v429
      %v438 = vadd.f32 %v386, %v430
      %439 = vset.pattern.permute.xlu0 2
      %440 = vperm.xlu0 %439, %v326
      %v441 = vpop.permute.xlu0 %440
      %443 = vset.pattern.permute.xlu0 2
      %444 = vperm.xlu0 %443, %v327
      %v445 = vpop.permute.xlu0 %444
      %447 = vset.pattern.permute.xlu0 2
      %448 = vperm.xlu0 %447, %v328
      %v449 = vpop.permute.xlu0 %448
      %451 = vset.pattern.permute.xlu0 2
      %452 = vperm.xlu0 %451, %v329
      %v453 = vpop.permute.xlu0 %452
      %455 = vset.pattern.permute.xlu0 2
      %456 = vperm.xlu0 %455, %v330
      %v457 = vpop.permute.xlu0 %456
      %459 = vset.pattern.permute.xlu0 2
      %460 = vperm.xlu0 %459, %v331
      %v461 = vpop.permute.xlu0 %460
      %463 = vset.pattern.permute.xlu0 2
      %464 = vperm.xlu0 %463, %v332
      %v465 = vpop.permute.xlu0 %464
      %467 = vset.pattern.permute.xlu0 2
      %468 = vperm.xlu0 %467, %v333
      %v469 = vpop.permute.xlu0 %468
      %v471 = vlaneseq
      %v472 = vshrl.u32 %v471, 7
      %v473 = vsub.s32 2, %v472
      %v474 = vrot.slane %v334, %v473
      %v475 = vmul.f32 %v441, %v474
      %v476 = vmul.f32 %v445, %v474
      %v477 = vmul.f32 %v449, %v474
      %v478 = vmul.f32 %v453, %v474
      %v479 = vmul.f32 %v457, %v474
      %v480 = vmul.f32 %v461, %v474
      %v481 = vmul.f32 %v465, %v474
      %v482 = vmul.f32 %v469, %v474
      %v483 = vadd.f32 %v431, %v475
      %v484 = vadd.f32 %v432, %v476
      %v485 = vadd.f32 %v433, %v477
      %v486 = vadd.f32 %v434, %v478
      %v487 = vadd.f32 %v435, %v479
      %v488 = vadd.f32 %v436, %v480
      %v489 = vadd.f32 %v437, %v481
      %v490 = vadd.f32 %v438, %v482
      %v491 = vld [vmem:[%s2] sm:$0x1]
      %v493 = vlaneseq
      %v494 = vshrl.u32 %v493, 7
      %v495 = vsub.s32 0, %v494
      %v496 = vrot.slane %v491, %v495
      %v498 = vadd.f32 %v483, %v496
      %v499 = vadd.f32 %v484, %v496
      %v500 = vadd.f32 %v485, %v496
      %v501 = vadd.f32 %v486, %v496
      %v502 = vadd.f32 %v487, %v496
      %v503 = vadd.f32 %v488, %v496
      %v504 = vadd.f32 %v489, %v496
      %v505 = vadd.f32 %v490, %v496
      %v506 = vpack.c.bf16 %v499, %v498
      %v507 = vpack.c.bf16 %v501, %v500
      %v508 = vpack.c.bf16 %v503, %v502
      %v509 = vpack.c.bf16 %v505, %v504
      %v510 = vld [vmem:[%s3] sm:$0xff]
      %v511 = vld [vmem:[%s3 + $0x8] sm:$0xff]
      %v512 = vld [vmem:[%s3 + $0x10] sm:$0xff]
      %v513 = vld [vmem:[%s3 + $0x18] sm:$0xff]
      %v514 = vld [vmem:[%s3 + $0x20] sm:$0xff]
      %v515 = vld [vmem:[%s3 + $0x28] sm:$0xff]
      %v516 = vld [vmem:[%s3 + $0x30] sm:$0xff]
      %v517 = vld [vmem:[%s3 + $0x38] sm:$0xff]
      %v518 = vld [vmem:[%s3 + $0x40] sm:$0xff]
      %v519 = vld [vmem:[%s3 + $0x48] sm:$0xff]
      %v520 = vld [vmem:[%s3 + $0x50] sm:$0xff]
      %v521 = vld [vmem:[%s3 + $0x58] sm:$0xff]
      %v522 = vld [vmem:[%s3 + $0x60] sm:$0xff]
      %v523 = vld [vmem:[%s3 + $0x68] sm:$0xff]
      %v524 = vld [vmem:[%s3 + $0x70] sm:$0xff]
      %v525 = vld [vmem:[%s3 + $0x78] sm:$0xff]
      %v526 = vld [vmem:[%s3 + $0x80] sm:$0xff]
      %v527 = vld [vmem:[%s3 + $0x88] sm:$0xff]
      %v528 = vld [vmem:[%s3 + $0x90] sm:$0xff]
      %v529 = vld [vmem:[%s3 + $0x98] sm:$0xff]
      %v530 = vld [vmem:[%s3 + $0xa0] sm:$0xff]
      %v531 = vld [vmem:[%s3 + $0xa8] sm:$0xff]
      %v532 = vld [vmem:[%s3 + $0xb0] sm:$0xff]
      %v533 = vld [vmem:[%s3 + $0xb8] sm:$0xff]
      %v534 = vld [vmem:[%s3 + $0xc0] sm:$0xff]
      %v535 = vld [vmem:[%s3 + $0xc8] sm:$0xff]
      %v536 = vld [vmem:[%s3 + $0xd0] sm:$0xff]
      %v537 = vld [vmem:[%s3 + $0xd8] sm:$0xff]
      %v538 = vld [vmem:[%s3 + $0xe0] sm:$0xff]
      %v539 = vld [vmem:[%s3 + $0xe8] sm:$0xff]
      %v540 = vld [vmem:[%s3 + $0xf0] sm:$0xff]
      %v541 = vld [vmem:[%s3 + $0xf8] sm:$0xff]
      %v542 = vld [vmem:[%s3 + $0x100] sm:$0xff]
      %v543 = vld [vmem:[%s3 + $0x108] sm:$0xff]
      %v544 = vld [vmem:[%s3 + $0x110] sm:$0xff]
      %v545 = vld [vmem:[%s3 + $0x118] sm:$0xff]
      %v546 = vld [vmem:[%s3 + $0x120] sm:$0xff]
      %v547 = vld [vmem:[%s3 + $0x128] sm:$0xff]
      %v548 = vld [vmem:[%s3 + $0x130] sm:$0xff]
      %v549 = vld [vmem:[%s3 + $0x138] sm:$0xff]
      %v550 = vld [vmem:[%s3 + $0x140] sm:$0xff]
      %v551 = vld [vmem:[%s3 + $0x148] sm:$0xff]
      %v552 = vld [vmem:[%s3 + $0x150] sm:$0xff]
      %v553 = vld [vmem:[%s3 + $0x158] sm:$0xff]
      %v554 = vld [vmem:[%s3 + $0x160] sm:$0xff]
      %v555 = vld [vmem:[%s3 + $0x168] sm:$0xff]
      %v556 = vld [vmem:[%s3 + $0x170] sm:$0xff]
      %v557 = vld [vmem:[%s3 + $0x178] sm:$0xff]
      %v558 = vld [vmem:[%s3 + $0x180] sm:$0xff]
      %v559 = vld [vmem:[%s3 + $0x188] sm:$0xff]
      %v560 = vld [vmem:[%s3 + $0x190] sm:$0xff]
      %v561 = vld [vmem:[%s3 + $0x198] sm:$0xff]
      %v562 = vld [vmem:[%s3 + $0x1a0] sm:$0xff]
      %v563 = vld [vmem:[%s3 + $0x1a8] sm:$0xff]
      %v564 = vld [vmem:[%s3 + $0x1b0] sm:$0xff]
      %v565 = vld [vmem:[%s3 + $0x1b8] sm:$0xff]
      %v566 = vld [vmem:[%s3 + $0x1c0] sm:$0xff]
      %v567 = vld [vmem:[%s3 + $0x1c8] sm:$0xff]
      %v568 = vld [vmem:[%s3 + $0x1d0] sm:$0xff]
      %v569 = vld [vmem:[%s3 + $0x1d8] sm:$0xff]
      %v570 = vld [vmem:[%s3 + $0x1e0] sm:$0xff]
      %v571 = vld [vmem:[%s3 + $0x1e8] sm:$0xff]
      %v572 = vld [vmem:[%s3 + $0x1f0] sm:$0xff]
      %v573 = vld [vmem:[%s3 + $0x1f8] sm:$0xff]
      %v574 = vld [vmem:[%s4] sm:$0xff]
      %v576 = vlaneseq
      %v577 = vshrl.u32 %v576, 7
      %v578 = vsub.s32 0, %v577
      %v579 = vrot.slane %v574, %v578
      %v580 = vlaneseq
      %v581 = vshrl.u32 %v580, 7
      %v582 = vsub.s32 1, %v581
      %v583 = vrot.slane %v574, %v582
      %v584 = vlaneseq
      %v585 = vshrl.u32 %v584, 7
      %v586 = vsub.s32 2, %v585
      %v587 = vrot.slane %v574, %v586
      %v588 = vlaneseq
      %v589 = vshrl.u32 %v588, 7
      %v590 = vsub.s32 3, %v589
      %v591 = vrot.slane %v574, %v590
      %v592 = vlaneseq
      %v593 = vshrl.u32 %v592, 7
      %v594 = vsub.s32 4, %v593
      %v595 = vrot.slane %v574, %v594
      %v596 = vlaneseq
      %v597 = vshrl.u32 %v596, 7
      %v598 = vsub.s32 5, %v597
      %v599 = vrot.slane %v574, %v598
      %v600 = vlaneseq
      %v601 = vshrl.u32 %v600, 7
      %v602 = vsub.s32 6, %v601
      %v603 = vrot.slane %v574, %v602
      %v604 = vlaneseq
      %v605 = vshrl.u32 %v604, 7
      %v606 = vsub.s32 7, %v605
      %v607 = vrot.slane %v574, %v606
      %v680 = vunpack.c.l.b16 %v510
      %v681 = vunpack.c.h.b16 %v510
      %v682 = vunpack.c.l.b16 %v511
      %v683 = vunpack.c.h.b16 %v511
      %v684 = vunpack.c.l.b16 %v512
      %v685 = vunpack.c.h.b16 %v512
      %v686 = vunpack.c.l.b16 %v513
      %v687 = vunpack.c.h.b16 %v513
      %v688 = vunpack.c.l.b16 %v514
      %v689 = vunpack.c.h.b16 %v514
      %v690 = vunpack.c.l.b16 %v515
      %v691 = vunpack.c.h.b16 %v515
      %v692 = vunpack.c.l.b16 %v516
      %v693 = vunpack.c.h.b16 %v516
      %v694 = vunpack.c.l.b16 %v517
      %v695 = vunpack.c.h.b16 %v517
      %v696 = vunpack.c.l.b16 %v518
      %v697 = vunpack.c.h.b16 %v518
      %v698 = vunpack.c.l.b16 %v519
      %v699 = vunpack.c.h.b16 %v519
      %v700 = vunpack.c.l.b16 %v520
      %v701 = vunpack.c.h.b16 %v520
      %v702 = vunpack.c.l.b16 %v521
      %v703 = vunpack.c.h.b16 %v521
      %v704 = vunpack.c.l.b16 %v522
      %v705 = vunpack.c.h.b16 %v522
      %v706 = vunpack.c.l.b16 %v523
      %v707 = vunpack.c.h.b16 %v523
      %v708 = vunpack.c.l.b16 %v524
      %v709 = vunpack.c.h.b16 %v524
      %v710 = vunpack.c.l.b16 %v525
      %v711 = vunpack.c.h.b16 %v525
      %v712 = vunpack.c.l.b16 %v526
      %v713 = vunpack.c.h.b16 %v526
      %v714 = vunpack.c.l.b16 %v527
      %v715 = vunpack.c.h.b16 %v527
      %v716 = vunpack.c.l.b16 %v528
      %v717 = vunpack.c.h.b16 %v528
      %v718 = vunpack.c.l.b16 %v529
      %v719 = vunpack.c.h.b16 %v529
      %v720 = vunpack.c.l.b16 %v530
      %v721 = vunpack.c.h.b16 %v530
      %v722 = vunpack.c.l.b16 %v531
      %v723 = vunpack.c.h.b16 %v531
      %v724 = vunpack.c.l.b16 %v532
      %v725 = vunpack.c.h.b16 %v532
      %v726 = vunpack.c.l.b16 %v533
      %v727 = vunpack.c.h.b16 %v533
      %v728 = vunpack.c.l.b16 %v534
      %v729 = vunpack.c.h.b16 %v534
      %v730 = vunpack.c.l.b16 %v535
      %v731 = vunpack.c.h.b16 %v535
      %v732 = vunpack.c.l.b16 %v536
      %v733 = vunpack.c.h.b16 %v536
      %v734 = vunpack.c.l.b16 %v537
      %v735 = vunpack.c.h.b16 %v537
      %v736 = vunpack.c.l.b16 %v538
      %v737 = vunpack.c.h.b16 %v538
      %v738 = vunpack.c.l.b16 %v539
      %v739 = vunpack.c.h.b16 %v539
      %v740 = vunpack.c.l.b16 %v540
      %v741 = vunpack.c.h.b16 %v540
      %v742 = vunpack.c.l.b16 %v541
      %v743 = vunpack.c.h.b16 %v541
      %v744 = vunpack.c.l.b16 %v542
      %v745 = vunpack.c.h.b16 %v542
      %v746 = vunpack.c.l.b16 %v543
      %v747 = vunpack.c.h.b16 %v543
      %v748 = vunpack.c.l.b16 %v544
      %v749 = vunpack.c.h.b16 %v544
      %v750 = vunpack.c.l.b16 %v545
      %v751 = vunpack.c.h.b16 %v545
      %v752 = vunpack.c.l.b16 %v546
      %v753 = vunpack.c.h.b16 %v546
      %v754 = vunpack.c.l.b16 %v547
      %v755 = vunpack.c.h.b16 %v547
      %v756 = vunpack.c.l.b16 %v548
      %v757 = vunpack.c.h.b16 %v548
      %v758 = vunpack.c.l.b16 %v549
      %v759 = vunpack.c.h.b16 %v549
      %v760 = vunpack.c.l.b16 %v550
      %v761 = vunpack.c.h.b16 %v550
      %v762 = vunpack.c.l.b16 %v551
      %v763 = vunpack.c.h.b16 %v551
      %v764 = vunpack.c.l.b16 %v552
      %v765 = vunpack.c.h.b16 %v552
      %v766 = vunpack.c.l.b16 %v553
      %v767 = vunpack.c.h.b16 %v553
      %v768 = vunpack.c.l.b16 %v554
      %v769 = vunpack.c.h.b16 %v554
      %v770 = vunpack.c.l.b16 %v555
      %v771 = vunpack.c.h.b16 %v555
      %v772 = vunpack.c.l.b16 %v556
      %v773 = vunpack.c.h.b16 %v556
      %v774 = vunpack.c.l.b16 %v557
      %v775 = vunpack.c.h.b16 %v557
      %v776 = vunpack.c.l.b16 %v558
      %v777 = vunpack.c.h.b16 %v558
      %v778 = vunpack.c.l.b16 %v559
      %v779 = vunpack.c.h.b16 %v559
      %v780 = vunpack.c.l.b16 %v560
      %v781 = vunpack.c.h.b16 %v560
      %v782 = vunpack.c.l.b16 %v561
      %v783 = vunpack.c.h.b16 %v561
      %v784 = vunpack.c.l.b16 %v562
      %v785 = vunpack.c.h.b16 %v562
      %v786 = vunpack.c.l.b16 %v563
      %v787 = vunpack.c.h.b16 %v563
      %v788 = vunpack.c.l.b16 %v564
      %v789 = vunpack.c.h.b16 %v564
      %v790 = vunpack.c.l.b16 %v565
      %v791 = vunpack.c.h.b16 %v565
      %v792 = vunpack.c.l.b16 %v566
      %v793 = vunpack.c.h.b16 %v566
      %v794 = vunpack.c.l.b16 %v567
      %v795 = vunpack.c.h.b16 %v567
      %v796 = vunpack.c.l.b16 %v568
      %v797 = vunpack.c.h.b16 %v568
      %v798 = vunpack.c.l.b16 %v569
      %v799 = vunpack.c.h.b16 %v569
      %v800 = vunpack.c.l.b16 %v570
      %v801 = vunpack.c.h.b16 %v570
      %v802 = vunpack.c.l.b16 %v571
      %v803 = vunpack.c.h.b16 %v571
      %v804 = vunpack.c.l.b16 %v572
      %v805 = vunpack.c.h.b16 %v572
      %v806 = vunpack.c.l.b16 %v573
      %v807 = vunpack.c.h.b16 %v573
      %v808 = vpack.c.b16 %v688, %v680
      %v809 = vpack.c.b16 %v689, %v681
      %v810 = vpack.c.b16 %v690, %v682
      %v811 = vpack.c.b16 %v691, %v683
      %v812 = vpack.c.b16 %v692, %v684
      %v813 = vpack.c.b16 %v693, %v685
      %v814 = vpack.c.b16 %v694, %v686
      %v815 = vpack.c.b16 %v695, %v687
      %v816 = vpack.c.b16 %v704, %v696
      %v817 = vpack.c.b16 %v705, %v697
      %v818 = vpack.c.b16 %v706, %v698
      %v819 = vpack.c.b16 %v707, %v699
      %v820 = vpack.c.b16 %v708, %v700
      %v821 = vpack.c.b16 %v709, %v701
      %v822 = vpack.c.b16 %v710, %v702
      %v823 = vpack.c.b16 %v711, %v703
      %v824 = vpack.c.b16 %v720, %v712
      %v825 = vpack.c.b16 %v721, %v713
      %v826 = vpack.c.b16 %v722, %v714
      %v827 = vpack.c.b16 %v723, %v715
      %v828 = vpack.c.b16 %v724, %v716
      %v829 = vpack.c.b16 %v725, %v717
      %v830 = vpack.c.b16 %v726, %v718
      %v831 = vpack.c.b16 %v727, %v719
      %v832 = vpack.c.b16 %v736, %v728
      %v833 = vpack.c.b16 %v737, %v729
      %v834 = vpack.c.b16 %v738, %v730
      %v835 = vpack.c.b16 %v739, %v731
      %v836 = vpack.c.b16 %v740, %v732
      %v837 = vpack.c.b16 %v741, %v733
      %v838 = vpack.c.b16 %v742, %v734
      %v839 = vpack.c.b16 %v743, %v735
      %v840 = vpack.c.b16 %v752, %v744
      %v841 = vpack.c.b16 %v753, %v745
      %v842 = vpack.c.b16 %v754, %v746
      %v843 = vpack.c.b16 %v755, %v747
      %v844 = vpack.c.b16 %v756, %v748
      %v845 = vpack.c.b16 %v757, %v749
      %v846 = vpack.c.b16 %v758, %v750
      %v847 = vpack.c.b16 %v759, %v751
      %v848 = vpack.c.b16 %v768, %v760
      %v849 = vpack.c.b16 %v769, %v761
      %v850 = vpack.c.b16 %v770, %v762
      %v851 = vpack.c.b16 %v771, %v763
      %v852 = vpack.c.b16 %v772, %v764
      %v853 = vpack.c.b16 %v773, %v765
      %v854 = vpack.c.b16 %v774, %v766
      %v855 = vpack.c.b16 %v775, %v767
      %v856 = vpack.c.b16 %v784, %v776
      %v857 = vpack.c.b16 %v785, %v777
      %v858 = vpack.c.b16 %v786, %v778
      %v859 = vpack.c.b16 %v787, %v779
      %v860 = vpack.c.b16 %v788, %v780
      %v861 = vpack.c.b16 %v789, %v781
      %v862 = vpack.c.b16 %v790, %v782
      %v863 = vpack.c.b16 %v791, %v783
      %v864 = vpack.c.b16 %v800, %v792
      %v865 = vpack.c.b16 %v801, %v793
      %v866 = vpack.c.b16 %v802, %v794
      %v867 = vpack.c.b16 %v803, %v795
      %v868 = vpack.c.b16 %v804, %v796
      %v869 = vpack.c.b16 %v805, %v797
      %v870 = vpack.c.b16 %v806, %v798
      %v871 = vpack.c.b16 %v807, %v799
      %936 = vmatprep.subr.bf16.mxu0 %v865
      %937 = vmatpush1.bf16.msra.mxu0 %v864
      %938 = vmatprep.subr.bf16.mxu0 %v857
      %939 = vmatpush1.bf16.msra.mxu0 %v856
      %940 = vmatprep.subr.bf16.mxu0 %v849
      %941 = vmatpush1.bf16.msra.mxu0 %v848
      %942 = vmatprep.subr.bf16.mxu0 %v841
      %943 = vmatpush1.bf16.msra.mxu0 %v840
      %944 = vmatprep.subr.bf16.mxu0 %v833
      %945 = vmatpush1.bf16.msra.mxu0 %v832
      %946 = vmatprep.subr.bf16.mxu0 %v825
      %947 = vmatpush1.bf16.msra.mxu0 %v824
      %948 = vmatprep.subr.bf16.mxu0 %v817
      %949 = vmatpush1.bf16.msra.mxu0 %v816
      %950 = vmatprep.subr.bf16.mxu0 %v809
      %951 = vmatpush1.bf16.msra.mxu0 %v808
      %952 = vmatprep.subr.bf16.mxu0 0
      %953 = vmatpush2.bf16.msra.mxu0 0
      %954 = vmatprep.subr.bf16.mxu0 0
      %955 = vmatpush2.bf16.msra.mxu0 0
      %956 = vmatprep.subr.bf16.mxu0 0
      %957 = vmatpush2.bf16.msra.mxu0 0
      %958 = vmatprep.subr.bf16.mxu0 0
      %959 = vmatpush2.bf16.msra.mxu0 0
      %960 = vmatprep.subr.bf16.mxu0 0
      %961 = vmatpush2.bf16.msra.mxu0 0
      %962 = vmatprep.subr.bf16.mxu0 0
      %963 = vmatpush2.bf16.msra.mxu0 0
      %964 = vmatprep.subr.bf16.mxu0 0
      %965 = vmatpush2.bf16.msra.mxu0 0
      %966 = vmatprep.subr.bf16.mxu0 0
      %967 = vmatpush2.bf16.msra.mxu0 0
      %968 = vmatprep.mubr.bf16.mxu0 0
      %969 = vmatmul.mubr.bf16.gmra.mxu0 %v506
      %v970 = vpop.f32.mrf.mxu0
      %v971 = vadd.f32 %v579, %v970
      %v972 = vpop.f32.mrf.mxu0
      %v973 = vadd.f32 %v583, %v972
      %v974 = vpop.f32.mrf.mxu0
      %v975 = vadd.f32 %v579, %v974
      %v976 = vpop.f32.mrf.mxu0
      %v977 = vadd.f32 %v583, %v976
      %978 = vmatprep.mubr.bf16.mxu0 0
      %979 = vmatmul.mubr.bf16.gmra.mxu0 %v507
      %v980 = vpop.f32.mrf.mxu0
      %v981 = vadd.f32 %v579, %v980
      %v982 = vpop.f32.mrf.mxu0
      %v983 = vadd.f32 %v583, %v982
      %v984 = vpop.f32.mrf.mxu0
      %v985 = vadd.f32 %v579, %v984
      %v986 = vpop.f32.mrf.mxu0
      %v987 = vadd.f32 %v583, %v986
      %988 = vmatprep.mubr.bf16.mxu0 0
      %989 = vmatmul.mubr.bf16.gmra.mxu0 %v508
      %v990 = vpop.f32.mrf.mxu0
      %v991 = vadd.f32 %v579, %v990
      %v992 = vpop.f32.mrf.mxu0
      %v993 = vadd.f32 %v583, %v992
      %v994 = vpop.f32.mrf.mxu0
      %v995 = vadd.f32 %v579, %v994
      %v996 = vpop.f32.mrf.mxu0
      %v997 = vadd.f32 %v583, %v996
      %998 = vmatprep.mubr.bf16.mxu0 0
      %999 = vmatmul.mubr.bf16.gmra.mxu0 %v509
      %v1000 = vpop.f32.mrf.mxu0
      %v1001 = vadd.f32 %v579, %v1000
      %v1002 = vpop.f32.mrf.mxu0
      %v1003 = vadd.f32 %v583, %v1002
      %v1004 = vpop.f32.mrf.mxu0
      %v1005 = vadd.f32 %v579, %v1004
      %v1006 = vpop.f32.mrf.mxu0
      %v1007 = vadd.f32 %v583, %v1006
      %1008 = vdwg.mxu0
      %1009 = vmatprep.subr.bf16.mxu0 %v867
      %1010 = vmatpush1.bf16.msra.mxu0 %v866
      %1011 = vmatprep.subr.bf16.mxu0 %v859
      %1012 = vmatpush1.bf16.msra.mxu0 %v858
      %1013 = vmatprep.subr.bf16.mxu0 %v851
      %1014 = vmatpush1.bf16.msra.mxu0 %v850
      %1015 = vmatprep.subr.bf16.mxu0 %v843
      %1016 = vmatpush1.bf16.msra.mxu0 %v842
      %1017 = vmatprep.subr.bf16.mxu0 %v835
      %1018 = vmatpush1.bf16.msra.mxu0 %v834
      %1019 = vmatprep.subr.bf16.mxu0 %v827
      %1020 = vmatpush1.bf16.msra.mxu0 %v826
      %1021 = vmatprep.subr.bf16.mxu0 %v819
      %1022 = vmatpush1.bf16.msra.mxu0 %v818
      %1023 = vmatprep.subr.bf16.mxu0 %v811
      %1024 = vmatpush1.bf16.msra.mxu0 %v810
      %1025 = vmatprep.subr.bf16.mxu0 0
      %1026 = vmatpush2.bf16.msra.mxu0 0
      %1027 = vmatprep.subr.bf16.mxu0 0
      %1028 = vmatpush2.bf16.msra.mxu0 0
      %1029 = vmatprep.subr.bf16.mxu0 0
      %1030 = vmatpush2.bf16.msra.mxu0 0
      %1031 = vmatprep.subr.bf16.mxu0 0
      %1032 = vmatpush2.bf16.msra.mxu0 0
      %1033 = vmatprep.subr.bf16.mxu0 0
      %1034 = vmatpush2.bf16.msra.mxu0 0
      %1035 = vmatprep.subr.bf16.mxu0 0
      %1036 = vmatpush2.bf16.msra.mxu0 0
      %1037 = vmatprep.subr.bf16.mxu0 0
      %1038 = vmatpush2.bf16.msra.mxu0 0
      %1039 = vmatprep.subr.bf16.mxu0 0
      %1040 = vmatpush2.bf16.msra.mxu0 0
      %1041 = vmatprep.mubr.bf16.mxu0 0
      %1042 = vmatmul.mubr.bf16.gmra.mxu0 %v506
      %v1043 = vpop.f32.mrf.mxu0
      %v1044 = vadd.f32 %v587, %v1043
      %v1045 = vpop.f32.mrf.mxu0
      %v1046 = vadd.f32 %v591, %v1045
      %v1047 = vpop.f32.mrf.mxu0
      %v1048 = vadd.f32 %v587, %v1047
      %v1049 = vpop.f32.mrf.mxu0
      %v1050 = vadd.f32 %v591, %v1049
      %1051 = vmatprep.mubr.bf16.mxu0 0
      %1052 = vmatmul.mubr.bf16.gmra.mxu0 %v507
      %v1053 = vpop.f32.mrf.mxu0
      %v1054 = vadd.f32 %v587, %v1053
      %v1055 = vpop.f32.mrf.mxu0
      %v1056 = vadd.f32 %v591, %v1055
      %v1057 = vpop.f32.mrf.mxu0
      %v1058 = vadd.f32 %v587, %v1057
      %v1059 = vpop.f32.mrf.mxu0
      %v1060 = vadd.f32 %v591, %v1059
      %1061 = vmatprep.mubr.bf16.mxu0 0
      %1062 = vmatmul.mubr.bf16.gmra.mxu0 %v508
      %v1063 = vpop.f32.mrf.mxu0
      %v1064 = vadd.f32 %v587, %v1063
      %v1065 = vpop.f32.mrf.mxu0
      %v1066 = vadd.f32 %v591, %v1065
      %v1067 = vpop.f32.mrf.mxu0
      %v1068 = vadd.f32 %v587, %v1067
      %v1069 = vpop.f32.mrf.mxu0
      %v1070 = vadd.f32 %v591, %v1069
      %1071 = vmatprep.mubr.bf16.mxu0 0
      %1072 = vmatmul.mubr.bf16.gmra.mxu0 %v509
      %v1073 = vpop.f32.mrf.mxu0
      %v1074 = vadd.f32 %v587, %v1073
      %v1075 = vpop.f32.mrf.mxu0
      %v1076 = vadd.f32 %v591, %v1075
      %v1077 = vpop.f32.mrf.mxu0
      %v1078 = vadd.f32 %v587, %v1077
      %v1079 = vpop.f32.mrf.mxu0
      %v1080 = vadd.f32 %v591, %v1079
      %1081 = vdwg.mxu0
      %1082 = vmatprep.subr.bf16.mxu0 %v869
      %1083 = vmatpush1.bf16.msra.mxu0 %v868
      %1084 = vmatprep.subr.bf16.mxu0 %v861
      %1085 = vmatpush1.bf16.msra.mxu0 %v860
      %1086 = vmatprep.subr.bf16.mxu0 %v853
      %1087 = vmatpush1.bf16.msra.mxu0 %v852
      %1088 = vmatprep.subr.bf16.mxu0 %v845
      %1089 = vmatpush1.bf16.msra.mxu0 %v844
      %1090 = vmatprep.subr.bf16.mxu0 %v837
      %1091 = vmatpush1.bf16.msra.mxu0 %v836
      %1092 = vmatprep.subr.bf16.mxu0 %v829
      %1093 = vmatpush1.bf16.msra.mxu0 %v828
      %1094 = vmatprep.subr.bf16.mxu0 %v821
      %1095 = vmatpush1.bf16.msra.mxu0 %v820
      %1096 = vmatprep.subr.bf16.mxu0 %v813
      %1097 = vmatpush1.bf16.msra.mxu0 %v812
      %1098 = vmatprep.subr.bf16.mxu0 0
      %1099 = vmatpush2.bf16.msra.mxu0 0
      %1100 = vmatprep.subr.bf16.mxu0 0
      %1101 = vmatpush2.bf16.msra.mxu0 0
      %1102 = vmatprep.subr.bf16.mxu0 0
      %1103 = vmatpush2.bf16.msra.mxu0 0
      %1104 = vmatprep.subr.bf16.mxu0 0
      %1105 = vmatpush2.bf16.msra.mxu0 0
      %1106 = vmatprep.subr.bf16.mxu0 0
      %1107 = vmatpush2.bf16.msra.mxu0 0
      %1108 = vmatprep.subr.bf16.mxu0 0
      %1109 = vmatpush2.bf16.msra.mxu0 0
      %1110 = vmatprep.subr.bf16.mxu0 0
      %1111 = vmatpush2.bf16.msra.mxu0 0
      %1112 = vmatprep.subr.bf16.mxu0 0
      %1113 = vmatpush2.bf16.msra.mxu0 0
      %1114 = vmatprep.mubr.bf16.mxu0 0
      %1115 = vmatmul.mubr.bf16.gmra.mxu0 %v506
      %v1116 = vpop.f32.mrf.mxu0
      %v1117 = vadd.f32 %v595, %v1116
      %v1118 = vpop.f32.mrf.mxu0
      %v1119 = vadd.f32 %v599, %v1118
      %v1120 = vpop.f32.mrf.mxu0
      %v1121 = vadd.f32 %v595, %v1120
      %v1122 = vpop.f32.mrf.mxu0
      %v1123 = vadd.f32 %v599, %v1122
      %1124 = vmatprep.mubr.bf16.mxu0 0
      %1125 = vmatmul.mubr.bf16.gmra.mxu0 %v507
      %v1126 = vpop.f32.mrf.mxu0
      %v1127 = vadd.f32 %v595, %v1126
      %v1128 = vpop.f32.mrf.mxu0
      %v1129 = vadd.f32 %v599, %v1128
      %v1130 = vpop.f32.mrf.mxu0
      %v1131 = vadd.f32 %v595, %v1130
      %v1132 = vpop.f32.mrf.mxu0
      %v1133 = vadd.f32 %v599, %v1132
      %1134 = vmatprep.mubr.bf16.mxu0 0
      %1135 = vmatmul.mubr.bf16.gmra.mxu0 %v508
      %v1136 = vpop.f32.mrf.mxu0
      %v1137 = vadd.f32 %v595, %v1136
      %v1138 = vpop.f32.mrf.mxu0
      %v1139 = vadd.f32 %v599, %v1138
      %v1140 = vpop.f32.mrf.mxu0
      %v1141 = vadd.f32 %v595, %v1140
      %v1142 = vpop.f32.mrf.mxu0
      %v1143 = vadd.f32 %v599, %v1142
      %1144 = vmatprep.mubr.bf16.mxu0 0
      %1145 = vmatmul.mubr.bf16.gmra.mxu0 %v509
      %v1146 = vpop.f32.mrf.mxu0
      %v1147 = vadd.f32 %v595, %v1146
      %v1148 = vpop.f32.mrf.mxu0
      %v1149 = vadd.f32 %v599, %v1148
      %v1150 = vpop.f32.mrf.mxu0
      %v1151 = vadd.f32 %v595, %v1150
      %v1152 = vpop.f32.mrf.mxu0
      %v1153 = vadd.f32 %v599, %v1152
      %1154 = vdwg.mxu0
      %1155 = vmatprep.subr.bf16.mxu0 %v871
      %1156 = vmatpush1.bf16.msra.mxu0 %v870
      %1157 = vmatprep.subr.bf16.mxu0 %v863
      %1158 = vmatpush1.bf16.msra.mxu0 %v862
      %1159 = vmatprep.subr.bf16.mxu0 %v855
      %1160 = vmatpush1.bf16.msra.mxu0 %v854
      %1161 = vmatprep.subr.bf16.mxu0 %v847
      %1162 = vmatpush1.bf16.msra.mxu0 %v846
      %1163 = vmatprep.subr.bf16.mxu0 %v839
      %1164 = vmatpush1.bf16.msra.mxu0 %v838
      %1165 = vmatprep.subr.bf16.mxu0 %v831
      %1166 = vmatpush1.bf16.msra.mxu0 %v830
      %1167 = vmatprep.subr.bf16.mxu0 %v823
      %1168 = vmatpush1.bf16.msra.mxu0 %v822
      %1169 = vmatprep.subr.bf16.mxu0 %v815
      %1170 = vmatpush1.bf16.msra.mxu0 %v814
      %1171 = vmatprep.subr.bf16.mxu0 0
      %1172 = vmatpush2.bf16.msra.mxu0 0
      %1173 = vmatprep.subr.bf16.mxu0 0
      %1174 = vmatpush2.bf16.msra.mxu0 0
      %1175 = vmatprep.subr.bf16.mxu0 0
      %1176 = vmatpush2.bf16.msra.mxu0 0
      %1177 = vmatprep.subr.bf16.mxu0 0
      %1178 = vmatpush2.bf16.msra.mxu0 0
      %1179 = vmatprep.subr.bf16.mxu0 0
      %1180 = vmatpush2.bf16.msra.mxu0 0
      %1181 = vmatprep.subr.bf16.mxu0 0
      %1182 = vmatpush2.bf16.msra.mxu0 0
      %1183 = vmatprep.subr.bf16.mxu0 0
      %1184 = vmatpush2.bf16.msra.mxu0 0
      %1185 = vmatprep.subr.bf16.mxu0 0
      %1186 = vmatpush2.bf16.msra.mxu0 0
      %1187 = vmatprep.mubr.bf16.mxu0 0
      %1188 = vmatmul.mubr.bf16.gmra.mxu0 %v506
      %v1189 = vpop.f32.mrf.mxu0
      %v1190 = vadd.f32 %v603, %v1189
      %v1191 = vpop.f32.mrf.mxu0
      %v1192 = vadd.f32 %v607, %v1191
      %v1193 = vpop.f32.mrf.mxu0
      %v1194 = vadd.f32 %v603, %v1193
      %v1195 = vpop.f32.mrf.mxu0
      %v1196 = vadd.f32 %v607, %v1195
      %1197 = vmatprep.mubr.bf16.mxu0 0
      %1198 = vmatmul.mubr.bf16.gmra.mxu0 %v507
      %v1199 = vpop.f32.mrf.mxu0
      %v1200 = vadd.f32 %v603, %v1199
      %v1201 = vpop.f32.mrf.mxu0
      %v1202 = vadd.f32 %v607, %v1201
      %v1203 = vpop.f32.mrf.mxu0
      %v1204 = vadd.f32 %v603, %v1203
      %v1205 = vpop.f32.mrf.mxu0
      %v1206 = vadd.f32 %v607, %v1205
      %1207 = vmatprep.mubr.bf16.mxu0 0
      %1208 = vmatmul.mubr.bf16.gmra.mxu0 %v508
      %v1209 = vpop.f32.mrf.mxu0
      %v1210 = vadd.f32 %v603, %v1209
      %v1211 = vpop.f32.mrf.mxu0
      %v1212 = vadd.f32 %v607, %v1211
      %v1213 = vpop.f32.mrf.mxu0
      %v1214 = vadd.f32 %v603, %v1213
      %v1215 = vpop.f32.mrf.mxu0
      %v1216 = vadd.f32 %v607, %v1215
      %1217 = vmatprep.mubr.bf16.mxu0 0
      %1218 = vmatmul.mubr.bf16.gmra.mxu0 %v509
      %v1219 = vpop.f32.mrf.mxu0
      %v1220 = vadd.f32 %v603, %v1219
      %v1221 = vpop.f32.mrf.mxu0
      %v1222 = vadd.f32 %v607, %v1221
      %v1223 = vpop.f32.mrf.mxu0
      %v1224 = vadd.f32 %v603, %v1223
      %v1225 = vpop.f32.mrf.mxu0
      %v1226 = vadd.f32 %v607, %v1225
      %1227 = vdwg.mxu0
      %v1228 = vmax.f32 %v971, 0.0
      %v1229 = vmax.f32 %v973, 0.0
      %v1230 = vmax.f32 %v1044, 0.0
      %v1231 = vmax.f32 %v1046, 0.0
      %v1232 = vmax.f32 %v1117, 0.0
      %v1233 = vmax.f32 %v1119, 0.0
      %v1234 = vmax.f32 %v1190, 0.0
      %v1235 = vmax.f32 %v1192, 0.0
      %v1236 = vmax.f32 %v975, 0.0
      %v1237 = vmax.f32 %v977, 0.0
      %v1238 = vmax.f32 %v1048, 0.0
      %v1239 = vmax.f32 %v1050, 0.0
      %v1240 = vmax.f32 %v1121, 0.0
      %v1241 = vmax.f32 %v1123, 0.0
      %v1242 = vmax.f32 %v1194, 0.0
      %v1243 = vmax.f32 %v1196, 0.0
      %v1244 = vmax.f32 %v981, 0.0
      %v1245 = vmax.f32 %v983, 0.0
      %v1246 = vmax.f32 %v1054, 0.0
      %v1247 = vmax.f32 %v1056, 0.0
      %v1248 = vmax.f32 %v1127, 0.0
      %v1249 = vmax.f32 %v1129, 0.0
      %v1250 = vmax.f32 %v1200, 0.0
      %v1251 = vmax.f32 %v1202, 0.0
      %v1252 = vmax.f32 %v985, 0.0
      %v1253 = vmax.f32 %v987, 0.0
      %v1254 = vmax.f32 %v1058, 0.0
      %v1255 = vmax.f32 %v1060, 0.0
      %v1256 = vmax.f32 %v1131, 0.0
      %v1257 = vmax.f32 %v1133, 0.0
      %v1258 = vmax.f32 %v1204, 0.0
      %v1259 = vmax.f32 %v1206, 0.0
      %v1260 = vmax.f32 %v991, 0.0
      %v1261 = vmax.f32 %v993, 0.0
      %v1262 = vmax.f32 %v1064, 0.0
      %v1263 = vmax.f32 %v1066, 0.0
      %v1264 = vmax.f32 %v1137, 0.0
      %v1265 = vmax.f32 %v1139, 0.0
      %v1266 = vmax.f32 %v1210, 0.0
      %v1267 = vmax.f32 %v1212, 0.0
      %v1268 = vmax.f32 %v995, 0.0
      %v1269 = vmax.f32 %v997, 0.0
      %v1270 = vmax.f32 %v1068, 0.0
      %v1271 = vmax.f32 %v1070, 0.0
      %v1272 = vmax.f32 %v1141, 0.0
      %v1273 = vmax.f32 %v1143, 0.0
      %v1274 = vmax.f32 %v1214, 0.0
      %v1275 = vmax.f32 %v1216, 0.0
      %v1276 = vmax.f32 %v1001, 0.0
      %v1277 = vmax.f32 %v1003, 0.0
      %v1278 = vmax.f32 %v1074, 0.0
      %v1279 = vmax.f32 %v1076, 0.0
      %v1280 = vmax.f32 %v1147, 0.0
      %v1281 = vmax.f32 %v1149, 0.0
      %v1282 = vmax.f32 %v1220, 0.0
      %v1283 = vmax.f32 %v1222, 0.0
      %v1284 = vmax.f32 %v1005, 0.0
      %v1285 = vmax.f32 %v1007, 0.0
      %v1286 = vmax.f32 %v1078, 0.0
      %v1287 = vmax.f32 %v1080, 0.0
      %v1288 = vmax.f32 %v1151, 0.0
      %v1289 = vmax.f32 %v1153, 0.0
      %v1290 = vmax.f32 %v1224, 0.0
      %v1291 = vmax.f32 %v1226, 0.0
      %v1292 = vld [vmem:[%s5] sm:$0xff]
      %v1294 = vlaneseq
      %v1295 = vshrl.u32 %v1294, 7
      %v1296 = vsub.s32 0, %v1295
      %v1297 = vrot.slane %v1292, %v1296
      %v1298 = vlaneseq
      %v1299 = vshrl.u32 %v1298, 7
      %v1300 = vsub.s32 1, %v1299
      %v1301 = vrot.slane %v1292, %v1300
      %v1302 = vlaneseq
      %v1303 = vshrl.u32 %v1302, 7
      %v1304 = vsub.s32 2, %v1303
      %v1305 = vrot.slane %v1292, %v1304
      %v1306 = vlaneseq
      %v1307 = vshrl.u32 %v1306, 7
      %v1308 = vsub.s32 3, %v1307
      %v1309 = vrot.slane %v1292, %v1308
      %v1310 = vlaneseq
      %v1311 = vshrl.u32 %v1310, 7
      %v1312 = vsub.s32 4, %v1311
      %v1313 = vrot.slane %v1292, %v1312
      %v1314 = vlaneseq
      %v1315 = vshrl.u32 %v1314, 7
      %v1316 = vsub.s32 5, %v1315
      %v1317 = vrot.slane %v1292, %v1316
      %v1318 = vlaneseq
      %v1319 = vshrl.u32 %v1318, 7
      %v1320 = vsub.s32 6, %v1319
      %v1321 = vrot.slane %v1292, %v1320
      %v1322 = vlaneseq
      %v1323 = vshrl.u32 %v1322, 7
      %v1324 = vsub.s32 7, %v1323
      %v1325 = vrot.slane %v1292, %v1324
      %v1334 = vmul.f32 %v1228, %v1297
      %v1335 = vmul.f32 %v1229, %v1301
      %v1336 = vmul.f32 %v1230, %v1305
      %v1337 = vmul.f32 %v1231, %v1309
      %v1338 = vmul.f32 %v1232, %v1313
      %v1339 = vmul.f32 %v1233, %v1317
      %v1340 = vmul.f32 %v1234, %v1321
      %v1341 = vmul.f32 %v1235, %v1325
      %v1342 = vmul.f32 %v1236, %v1297
      %v1343 = vmul.f32 %v1237, %v1301
      %v1344 = vmul.f32 %v1238, %v1305
      %v1345 = vmul.f32 %v1239, %v1309
      %v1346 = vmul.f32 %v1240, %v1313
      %v1347 = vmul.f32 %v1241, %v1317
      %v1348 = vmul.f32 %v1242, %v1321
      %v1349 = vmul.f32 %v1243, %v1325
      %v1350 = vmul.f32 %v1244, %v1297
      %v1351 = vmul.f32 %v1245, %v1301
      %v1352 = vmul.f32 %v1246, %v1305
      %v1353 = vmul.f32 %v1247, %v1309
      %v1354 = vmul.f32 %v1248, %v1313
      %v1355 = vmul.f32 %v1249, %v1317
      %v1356 = vmul.f32 %v1250, %v1321
      %v1357 = vmul.f32 %v1251, %v1325
      %v1358 = vmul.f32 %v1252, %v1297
      %v1359 = vmul.f32 %v1253, %v1301
      %v1360 = vmul.f32 %v1254, %v1305
      %v1361 = vmul.f32 %v1255, %v1309
      %v1362 = vmul.f32 %v1256, %v1313
      %v1363 = vmul.f32 %v1257, %v1317
      %v1364 = vmul.f32 %v1258, %v1321
      %v1365 = vmul.f32 %v1259, %v1325
      %v1366 = vmul.f32 %v1260, %v1297
      %v1367 = vmul.f32 %v1261, %v1301
      %v1368 = vmul.f32 %v1262, %v1305
      %v1369 = vmul.f32 %v1263, %v1309
      %v1370 = vmul.f32 %v1264, %v1313
      %v1371 = vmul.f32 %v1265, %v1317
      %v1372 = vmul.f32 %v1266, %v1321
      %v1373 = vmul.f32 %v1267, %v1325
      %v1374 = vmul.f32 %v1268, %v1297
      %v1375 = vmul.f32 %v1269, %v1301
      %v1376 = vmul.f32 %v1270, %v1305
      %v1377 = vmul.f32 %v1271, %v1309
      %v1378 = vmul.f32 %v1272, %v1313
      %v1379 = vmul.f32 %v1273, %v1317
      %v1380 = vmul.f32 %v1274, %v1321
      %v1381 = vmul.f32 %v1275, %v1325
      %v1382 = vmul.f32 %v1276, %v1297
      %v1383 = vmul.f32 %v1277, %v1301
      %v1384 = vmul.f32 %v1278, %v1305
      %v1385 = vmul.f32 %v1279, %v1309
      %v1386 = vmul.f32 %v1280, %v1313
      %v1387 = vmul.f32 %v1281, %v1317
      %v1388 = vmul.f32 %v1282, %v1321
      %v1389 = vmul.f32 %v1283, %v1325
      %v1390 = vmul.f32 %v1284, %v1297
      %v1391 = vmul.f32 %v1285, %v1301
      %v1392 = vmul.f32 %v1286, %v1305
      %v1393 = vmul.f32 %v1287, %v1309
      %v1394 = vmul.f32 %v1288, %v1313
      %v1395 = vmul.f32 %v1289, %v1317
      %v1396 = vmul.f32 %v1290, %v1321
      %v1397 = vmul.f32 %v1291, %v1325
      %v1398 = vadd.f32 %v1334, %v1335
      %v1399 = vadd.f32 %v1398, %v1336
      %v1400 = vadd.f32 %v1399, %v1337
      %v1401 = vadd.f32 %v1400, %v1338
      %v1402 = vadd.f32 %v1401, %v1339
      %v1403 = vadd.f32 %v1402, %v1340
      %v1404 = vadd.f32 %v1403, %v1341
      %1405 = vadd.xlane.f32.xlu0 %v1404
      %v1406 = vpop.xlane.xlu0 %1405
      %v1407 = vadd.f32 %v1342, %v1343
      %v1408 = vadd.f32 %v1407, %v1344
      %v1409 = vadd.f32 %v1408, %v1345
      %v1410 = vadd.f32 %v1409, %v1346
      %v1411 = vadd.f32 %v1410, %v1347
      %v1412 = vadd.f32 %v1411, %v1348
      %v1413 = vadd.f32 %v1412, %v1349
      %1414 = vadd.xlane.f32.xlu0 %v1413
      %v1415 = vpop.xlane.xlu0 %1414
      %v1416 = vadd.f32 %v1350, %v1351
      %v1417 = vadd.f32 %v1416, %v1352
      %v1418 = vadd.f32 %v1417, %v1353
      %v1419 = vadd.f32 %v1418, %v1354
      %v1420 = vadd.f32 %v1419, %v1355
      %v1421 = vadd.f32 %v1420, %v1356
      %v1422 = vadd.f32 %v1421, %v1357
      %1423 = vadd.xlane.f32.xlu0 %v1422
      %v1424 = vpop.xlane.xlu0 %1423
      %v1425 = vadd.f32 %v1358, %v1359
      %v1426 = vadd.f32 %v1425, %v1360
      %v1427 = vadd.f32 %v1426, %v1361
      %v1428 = vadd.f32 %v1427, %v1362
      %v1429 = vadd.f32 %v1428, %v1363
      %v1430 = vadd.f32 %v1429, %v1364
      %v1431 = vadd.f32 %v1430, %v1365
      %1432 = vadd.xlane.f32.xlu0 %v1431
      %v1433 = vpop.xlane.xlu0 %1432
      %v1434 = vadd.f32 %v1366, %v1367
      %v1435 = vadd.f32 %v1434, %v1368
      %v1436 = vadd.f32 %v1435, %v1369
      %v1437 = vadd.f32 %v1436, %v1370
      %v1438 = vadd.f32 %v1437, %v1371
      %v1439 = vadd.f32 %v1438, %v1372
      %v1440 = vadd.f32 %v1439, %v1373
      %1441 = vadd.xlane.f32.xlu0 %v1440
      %v1442 = vpop.xlane.xlu0 %1441
      %v1443 = vadd.f32 %v1374, %v1375
      %v1444 = vadd.f32 %v1443, %v1376
      %v1445 = vadd.f32 %v1444, %v1377
      %v1446 = vadd.f32 %v1445, %v1378
      %v1447 = vadd.f32 %v1446, %v1379
      %v1448 = vadd.f32 %v1447, %v1380
      %v1449 = vadd.f32 %v1448, %v1381
      %1450 = vadd.xlane.f32.xlu0 %v1449
      %v1451 = vpop.xlane.xlu0 %1450
      %v1452 = vadd.f32 %v1382, %v1383
      %v1453 = vadd.f32 %v1452, %v1384
      %v1454 = vadd.f32 %v1453, %v1385
      %v1455 = vadd.f32 %v1454, %v1386
      %v1456 = vadd.f32 %v1455, %v1387
      %v1457 = vadd.f32 %v1456, %v1388
      %v1458 = vadd.f32 %v1457, %v1389
      %1459 = vadd.xlane.f32.xlu0 %v1458
      %v1460 = vpop.xlane.xlu0 %1459
      %v1461 = vadd.f32 %v1390, %v1391
      %v1462 = vadd.f32 %v1461, %v1392
      %v1463 = vadd.f32 %v1462, %v1393
      %v1464 = vadd.f32 %v1463, %v1394
      %v1465 = vadd.f32 %v1464, %v1395
      %v1466 = vadd.f32 %v1465, %v1396
      %v1467 = vadd.f32 %v1466, %v1397
      %1468 = vadd.xlane.f32.xlu0 %v1467
      %v1469 = vpop.xlane.xlu0 %1468
      %v1470 = vld [vmem:[#allocation2] sm:$0x1]
      %v1472 = vlaneseq
      %v1473 = vshrl.u32 %v1472, 7
      %v1474 = vsub.s32 0, %v1473
      %v1475 = vrot.slane %v1470, %v1474
      %v1477 = vadd.f32 %v1406, %v1475
      %v1478 = vadd.f32 %v1415, %v1475
      %v1479 = vadd.f32 %v1424, %v1475
      %v1480 = vadd.f32 %v1433, %v1475
      %v1481 = vadd.f32 %v1442, %v1475
      %v1482 = vadd.f32 %v1451, %v1475
      %v1483 = vadd.f32 %v1460, %v1475
      %v1484 = vadd.f32 %v1469, %v1475
      %v1485 = vlaneseq
      %v1486 = vand.u32 %v1485, 127
      %vm1487 = vcmp.eq.s32.totalorder %v1486, 32
      %1489 = vset.pattern.permute.xlu0 0
      %1490 = vperm.xlu0 %1489, %v1477
      %v1491 = vpop.permute.xlu0 %1490
      %1494 = vset.pattern.permute.xlu0 0
      %1495 = vperm.xlu0 %1494, %v1478
      %v1496 = vpop.permute.xlu0 %1495
      %1499 = vset.pattern.permute.xlu0 0
      %1500 = vperm.xlu0 %1499, %v1479
      %v1501 = vpop.permute.xlu0 %1500
      %1504 = vset.pattern.permute.xlu0 0
      %1505 = vperm.xlu0 %1504, %v1480
      %v1506 = vpop.permute.xlu0 %1505
      %1509 = vset.pattern.permute.xlu0 0
      %1510 = vperm.xlu0 %1509, %v1481
      %v1511 = vpop.permute.xlu0 %1510
      %1514 = vset.pattern.permute.xlu0 0
      %1515 = vperm.xlu0 %1514, %v1482
      %v1516 = vpop.permute.xlu0 %1515
      %1519 = vset.pattern.permute.xlu0 0
      %1520 = vperm.xlu0 %1519, %v1483
      %v1521 = vpop.permute.xlu0 %1520
      %1524 = vset.pattern.permute.xlu0 0
      %1525 = vperm.xlu0 %1524, %v1484
      %v1526 = vpop.permute.xlu0 %1525
      %v1528 = vsel %vm1487, %v1491, %v498
      %v1529 = vsel %vm1487, %v1496, %v499
      %v1530 = vsel %vm1487, %v1501, %v500
      %v1531 = vsel %vm1487, %v1506, %v501
      %v1532 = vsel %vm1487, %v1511, %v502
      %v1533 = vsel %vm1487, %v1516, %v503
      %v1534 = vsel %vm1487, %v1521, %v504
      %v1535 = vsel %vm1487, %v1526, %v505
      %v1536 = vpack.c.bf16 %v1529, %v1528
      %v1537 = vpack.c.bf16 %v1531, %v1530
      %v1538 = vpack.c.bf16 %v1533, %v1532
      %v1539 = vpack.c.bf16 %v1535, %v1534
      %v1544 = vunpack.c.l.b16 %v1536
      %v1545 = vunpack.c.h.b16 %v1536
      %v1546 = vunpack.c.l.b16 %v1537
      %v1547 = vunpack.c.h.b16 %v1537
      %v1548 = vunpack.c.l.b16 %v1538
      %v1549 = vunpack.c.h.b16 %v1538
      %v1550 = vunpack.c.l.b16 %v1539
      %v1551 = vunpack.c.h.b16 %v1539
      %v1552 = vpack.c.b16 %v1544, %v1544
      %v1553 = vpack.c.b16 %v1545, %v1545
      %v1554 = vpack.c.b16 %v1546, %v1546
      %v1555 = vpack.c.b16 %v1547, %v1547
      %v1556 = vpack.c.b16 %v1548, %v1548
      %v1557 = vpack.c.b16 %v1549, %v1549
      %v1558 = vpack.c.b16 %v1550, %v1550
      %v1559 = vpack.c.b16 %v1551, %v1551
      %1568 = vst [vmem:[%s317] sm:$0xf] %v1552
      %1569 = vst [vmem:[%s317 + $0x4] sm:$0xf] %v1553
      %1570 = vst [vmem:[%s317 + $0x8] sm:$0xf] %v1554
      %1571 = vst [vmem:[%s317 + $0xc] sm:$0xf] %v1555
      %1572 = vst [vmem:[%s317 + $0x10] sm:$0xf] %v1556
      %1573 = vst [vmem:[%s317 + $0x14] sm:$0xf] %v1557
      %1574 = vst [vmem:[%s317 + $0x18] sm:$0xf] %v1558
      %1575 = vst [vmem:[%s317 + $0x1c] sm:$0xf] %v1559
      %vm1576 = vcmask 7168
      %1577 = vst.msk [vmem:[%s323] sm:$0xff] %vm1576, %v1477
      %1578 = vst.msk [vmem:[%s323 + $0x8] sm:$0xff] %vm1576, %v1478
      %1579 = vst.msk [vmem:[%s323 + $0x10] sm:$0xff] %vm1576, %v1479
      %1580 = vst.msk [vmem:[%s323 + $0x18] sm:$0xff] %vm1576, %v1480
      %1581 = vst.msk [vmem:[%s323 + $0x20] sm:$0xff] %vm1576, %v1481
      %1582 = vst.msk [vmem:[%s323 + $0x28] sm:$0xff] %vm1576, %v1482
      %1583 = vst.msk [vmem:[%s323 + $0x30] sm:$0xff] %vm1576, %v1483
      %1584 = vst.msk [vmem:[%s323 + $0x38] sm:$0xff] %vm1576, %v1484
      %s1585 = smul.u32 8, %s22
      %p1586 = scmp.lt.s32.totalorder %s1585, 15
      %s1587 = scalar_select %p1586, %s1585, 15
      %s1588 = smul.addr %s1587, 4
      %s1589 = scalar_lea.vmem %s7, %s1588
      %s1590 = smul.u32 8, %s22
      %p1591 = scmp.lt.s32.totalorder %s1590, 15
      %s1592 = scalar_select %p1591, %s1590, 15
      %s1593 = smul.addr %s1592, 8
      %s1594 = scalar_lea.vmem %s8, %s1593
      // Predicated region
      $region49: #{supersimplenet_forward.3} parent=47 // pred_check
        %p1595 = pneg %p192
      $region50: #{supersimplenet_forward.3} parent=47 // pred_check_branch
        %1597 = sbr.rel (%p1595) target = $region52
      $region51: #{supersimplenet_forward.3} parent=47 // pred_region
        %s1598 = smul.u32 8, %s22
      $region52: #{supersimplenet_forward.3} parent=47 // pred_fallthru
        _
      // Predicated region
      $region53: #{supersimplenet_forward.3} parent=47 // pred_check
        %p1599 = pneg %p218
      $region54: #{supersimplenet_forward.3} parent=47 // pred_check_branch
        %1601 = sbr.rel (%p1599) target = $region56
      $region55: #{supersimplenet_forward.3} parent=47 // pred_region
        %s1602 = smul.u32 8, %s22
      $region56: #{supersimplenet_forward.3} parent=47 // pred_fallthru
        _
    $region48: #{supersimplenet_forward.3} parent=5 // pred_fallthru
      _
    %p1603 = scmp.le.s32.totalorder 2, %s17
    // Predicated region
    $region57: #{supersimplenet_forward.3} parent=5 // pred_check
      %p1604 = pneg %p1603
    $region58: #{supersimplenet_forward.3} parent=5 // pred_check_branch
      %1606 = sbr.rel (%p1604) target = $region60
    $region59: #{supersimplenet_forward.3} parent=5 // pred_region
      %s1607 = ssub.s32 %s17, 2
      // Predicated region
      $region61: #{supersimplenet_forward.3} parent=59 // pred_check
        %p1608 = pneg %p198
      $region62: #{supersimplenet_forward.3} parent=59 // pred_check_branch
        %1610 = sbr.rel (%p1608) target = $region64
      $region63: #{supersimplenet_forward.3} parent=59 // pred_region
        %s1611 = smul.u32 8, %s23
        %p1612 = scmp.lt.s32.totalorder %s1611, 15
        %s1613 = scalar_select %p1612, %s1611, 15
        %s1614 = smul.addr %s1613, 4
        %s1615 = scalar_lea.vmem %s7, %s1614
      $region64: #{supersimplenet_forward.3} parent=59 // pred_fallthru
        _
      // Predicated region
      $region65: #{supersimplenet_forward.3} parent=59 // pred_check
        %p1616 = pneg %p224
      $region66: #{supersimplenet_forward.3} parent=59 // pred_check_branch
        %1618 = sbr.rel (%p1616) target = $region68
      $region67: #{supersimplenet_forward.3} parent=59 // pred_region
        %s1619 = smul.u32 8, %s23
        %p1620 = scmp.lt.s32.totalorder %s1619, 15
        %s1621 = scalar_select %p1620, %s1619, 15
        %s1622 = smul.addr %s1621, 8
        %s1623 = scalar_lea.vmem %s8, %s1622
      $region68: #{supersimplenet_forward.3} parent=59 // pred_fallthru
        _
    $region60: #{supersimplenet_forward.3} parent=5 // pred_fallthru
      _
  $region6: #{supersimplenet_forward.3} parent=0 // loop_footer
    %s21 = sadd.s32 1, %s17
  $region7: #{supersimplenet_forward.3} parent=0 // loop_footer_branch
    %16 = sbr.rel target = $region3
  $region8: #{supersimplenet_forward.3} parent=0 // loop_exit
    _

// kernel: supersimplenet_forward.4
$region0: #{supersimplenet_forward.4}
  #allocation0 [shape = 'u32[]', space=smem, size = 0x4, offset = 0x4, fixed_abs, tag = 'smem constant byte address 0x4 - core index']
  #allocation1 [shape = 'u32[144,128]{1,0:T(1,128)}', space=vmem, size = 0x12000, scoped, tag = 'internal scratch']
  #allocation2 [shape = 'f32[1,128]{1,0:T(1,128)}', space=vmem, size = 0x200, scoped, tag = 'scratch operand']
  #allocation3 [shape = 'f32[1,128]{1,0:T(1,128)}', space=vmem, size = 0x200, scoped, tag = 'scratch operand']
  %s0 = inlined_call_operand.vmem [shape: bf16[2,12,12,128], index: 0, kind: input, shape index: {}]
  %s1 = inlined_call_operand.vmem [shape: bf16[5,640,128], index: 1, kind: input, shape index: {}]
  %s2 = inlined_call_operand.vmem [shape: f32[1,128], index: 2, kind: input, shape index: {}]
  %s3 = inlined_call_operand.vmem [shape: f32[1,128], index: 3, kind: input, shape index: {}]
  %s4 = inlined_call_operand.vmem [shape: f32[1,128], index: 4, kind: input, shape index: {}]
  %s5 = inlined_call_operand.vmem [shape: f32[2,1,1], index: 5, kind: input, shape index: {}]
  %s6 = inlined_call_operand.vmem [shape: f32[2,1,1], index: 6, kind: output, shape index: {}]
  %s7 = sld [smem:[#allocation0]]
  $region65: #{supersimplenet_forward.4} parent=0
    _
  %s9 = ssub.s32 1, %s7
  %s10 = scalar_select 0, %s9, %s7
  loop: start=0, step=1, limit=6
  $region2: #{supersimplenet_forward.4} parent=0 // loop_pre_header
    _
  $region3: #{supersimplenet_forward.4} parent=0 // loop_header
    %s12 = sphi 0, %s16
    %p13 = scmp.ge.s32.totalorder %s12, 6
    %s19 = sphi 0, %s31
    %s20 = sphi 0, %s27
    %s21 = sphi 0, %s19
    %s22 = sphi 0, %s20
    %s23 = sphi 0, %s21
    %s24 = sphi 0, %s22
    %s34 = sphi 0, %s36
    %s37 = sphi 0, %s34
    %s38 = sphi 0, %s37
    %s54 = sphi 0, %s38
    %s58 = sphi 0, %s58
    %s60 = sphi 0, %s58
    %s61 = sphi 0, %s60
    %s75 = sphi 0, %s61
    %s79 = sphi 0, %s79
    %s81 = sphi 0, %s79
    %s82 = sphi 0, %s81
    %s96 = sphi 0, %s82
    %s100 = sphi 0, %s100
    %s102 = sphi 0, %s100
    %s103 = sphi 0, %s102
    %s117 = sphi 0, %s103
    %s121 = sphi 0, %s121
    %s123 = sphi 0, %s121
    %s124 = sphi 0, %s123
    %s138 = sphi 0, %s124
    %s144 = sphi 0, %s146
    %s147 = sphi 0, %s144
    %s148 = sphi 0, %s147
    %s164 = sphi 0, %s148
    %s170 = sphi 0, %s172
    %s173 = sphi 0, %s170
    %s174 = sphi 0, %s173
    %s190 = sphi 0, %s174
  $region4: #{supersimplenet_forward.4} parent=0 // loop_header_branch
    %15 = sbr.rel (%p13) target = $region8
  $region5: #{supersimplenet_forward.4} parent=0 // loop_body
    %s17 = ssub.s32 %s12, 1
    %s18 = ssub.s32 %s12, 2
    %s25 = sadd.s32 1, %s20
    %p26 = scmp.ge.s32.totalorder %s25, 2
    %s27 = scalar_select %p26, 0, %s25
    %s28 = sadd.s32 1, %s19
    %s29 = scalar_select %p26, %s28, %s19
    %p30 = scmp.ge.s32.totalorder %s29, 2
    %s31 = scalar_select %p30, 0, %s29
    %s32 = ssub.s32 %s19, %s31
    %p33 = scmp.eq.s32.totalorder %s32, 0
    %s35 = sadd.s32 %s34, 1
    %s36 = scalar_select %p33, %s34, %s35
    %p39 = pneg %p33
    %p40 = scmp.eq.s32.totalorder %s12, 3
    %p41 = por %p39, %p40
    %p42 = scmp.ne.s32.totalorder %s34, %s37
    %p43 = scmp.eq.s32.totalorder %s12, 0
    %p44 = por %p42, %p43
    %p45 = scmp.ne.s32.totalorder %s34, %s37
    %p46 = scmp.eq.s32.totalorder %s17, 3
    %p47 = por %p45, %p46
    %p48 = scmp.ne.s32.totalorder %s37, %s38
    %p49 = scmp.eq.s32.totalorder %s17, 0
    %p50 = por %p48, %p49
    %p51 = scmp.ne.s32.totalorder %s37, %s38
    %p52 = scmp.eq.s32.totalorder %s18, 3
    %p53 = por %p51, %p52
    %p55 = scmp.ne.s32.totalorder %s38, %s54
    %p56 = scmp.eq.s32.totalorder %s18, 0
    %p57 = por %p55, %p56
    %s59 = sadd.s32 %s58, 1
    %p62 = scmp.eq.s32.totalorder %s12, 3
    %p63 = scmp.ne.s32.totalorder %s58, %s60
    %p64 = scmp.eq.s32.totalorder %s12, 0
    %p65 = por %p63, %p64
    %p66 = scmp.ne.s32.totalorder %s58, %s60
    %p67 = scmp.eq.s32.totalorder %s17, 3
    %p68 = por %p66, %p67
    %p69 = scmp.ne.s32.totalorder %s60, %s61
    %p70 = scmp.eq.s32.totalorder %s17, 0
    %p71 = por %p69, %p70
    %p72 = scmp.ne.s32.totalorder %s60, %s61
    %p73 = scmp.eq.s32.totalorder %s18, 3
    %p74 = por %p72, %p73
    %p76 = scmp.ne.s32.totalorder %s61, %s75
    %p77 = scmp.eq.s32.totalorder %s18, 0
    %p78 = por %p76, %p77
    %s80 = sadd.s32 %s79, 1
    %p83 = scmp.eq.s32.totalorder %s12, 3
    %p84 = scmp.ne.s32.totalorder %s79, %s81
    %p85 = scmp.eq.s32.totalorder %s12, 0
    %p86 = por %p84, %p85
    %p87 = scmp.ne.s32.totalorder %s79, %s81
    %p88 = scmp.eq.s32.totalorder %s17, 3
    %p89 = por %p87, %p88
    %p90 = scmp.ne.s32.totalorder %s81, %s82
    %p91 = scmp.eq.s32.totalorder %s17, 0
    %p92 = por %p90, %p91
    %p93 = scmp.ne.s32.totalorder %s81, %s82
    %p94 = scmp.eq.s32.totalorder %s18, 3
    %p95 = por %p93, %p94
    %p97 = scmp.ne.s32.totalorder %s82, %s96
    %p98 = scmp.eq.s32.totalorder %s18, 0
    %p99 = por %p97, %p98
    %s101 = sadd.s32 %s100, 1
    %p104 = scmp.eq.s32.totalorder %s12, 3
    %p105 = scmp.ne.s32.totalorder %s100, %s102
    %p106 = scmp.eq.s32.totalorder %s12, 0
    %p107 = por %p105, %p106
    %p108 = scmp.ne.s32.totalorder %s100, %s102
    %p109 = scmp.eq.s32.totalorder %s17, 3
    %p110 = por %p108, %p109
    %p111 = scmp.ne.s32.totalorder %s102, %s103
    %p112 = scmp.eq.s32.totalorder %s17, 0
    %p113 = por %p111, %p112
    %p114 = scmp.ne.s32.totalorder %s102, %s103
    %p115 = scmp.eq.s32.totalorder %s18, 3
    %p116 = por %p114, %p115
    %p118 = scmp.ne.s32.totalorder %s103, %s117
    %p119 = scmp.eq.s32.totalorder %s18, 0
    %p120 = por %p118, %p119
    %s122 = sadd.s32 %s121, 1
    %p125 = scmp.eq.s32.totalorder %s12, 3
    %p126 = scmp.ne.s32.totalorder %s121, %s123
    %p127 = scmp.eq.s32.totalorder %s12, 0
    %p128 = por %p126, %p127
    %p129 = scmp.ne.s32.totalorder %s121, %s123
    %p130 = scmp.eq.s32.totalorder %s17, 3
    %p131 = por %p129, %p130
    %p132 = scmp.ne.s32.totalorder %s123, %s124
    %p133 = scmp.eq.s32.totalorder %s17, 0
    %p134 = por %p132, %p133
    %p135 = scmp.ne.s32.totalorder %s123, %s124
    %p136 = scmp.eq.s32.totalorder %s18, 3
    %p137 = por %p135, %p136
    %p139 = scmp.ne.s32.totalorder %s124, %s138
    %p140 = scmp.eq.s32.totalorder %s18, 0
    %p141 = por %p139, %p140
    %s142 = ssub.s32 %s19, %s31
    %p143 = scmp.eq.s32.totalorder %s142, 0
    %s145 = sadd.s32 %s144, 1
    %s146 = scalar_select %p143, %s144, %s145
    %p149 = pneg %p143
    %p150 = scmp.eq.s32.totalorder %s12, 3
    %p151 = por %p149, %p150
    %p152 = scmp.ne.s32.totalorder %s144, %s147
    %p153 = scmp.eq.s32.totalorder %s12, 0
    %p154 = por %p152, %p153
    %p155 = scmp.ne.s32.totalorder %s144, %s147
    %p156 = scmp.eq.s32.totalorder %s17, 3
    %p157 = por %p155, %p156
    %p158 = scmp.ne.s32.totalorder %s147, %s148
    %p159 = scmp.eq.s32.totalorder %s17, 0
    %p160 = por %p158, %p159
    %p161 = scmp.ne.s32.totalorder %s147, %s148
    %p162 = scmp.eq.s32.totalorder %s18, 3
    %p163 = por %p161, %p162
    %p165 = scmp.ne.s32.totalorder %s148, %s164
    %p166 = scmp.eq.s32.totalorder %s18, 0
    %p167 = por %p165, %p166
    %s168 = ssub.s32 %s19, %s31
    %p169 = scmp.eq.s32.totalorder %s168, 0
    %s171 = sadd.s32 %s170, 1
    %s172 = scalar_select %p169, %s170, %s171
    %p175 = pneg %p169
    %p176 = scmp.eq.s32.totalorder %s12, 3
    %p177 = por %p175, %p176
    %p178 = scmp.ne.s32.totalorder %s170, %s173
    %p179 = scmp.eq.s32.totalorder %s12, 0
    %p180 = por %p178, %p179
    %p181 = scmp.ne.s32.totalorder %s170, %s173
    %p182 = scmp.eq.s32.totalorder %s17, 3
    %p183 = por %p181, %p182
    %p184 = scmp.ne.s32.totalorder %s173, %s174
    %p185 = scmp.eq.s32.totalorder %s17, 0
    %p186 = por %p184, %p185
    %p187 = scmp.ne.s32.totalorder %s173, %s174
    %p188 = scmp.eq.s32.totalorder %s18, 3
    %p189 = por %p187, %p188
    %p191 = scmp.ne.s32.totalorder %s174, %s190
    %p192 = scmp.eq.s32.totalorder %s18, 0
    %p193 = por %p191, %p192
    %p194 = scmp.le.s32.totalorder 1, %s12
    %p195 = scmp.lt.s32.totalorder %s12, 5
    %p196 = pnand %p194, %p195
    %p197 = pneg %p196
    // Predicated region
    $region9: #{supersimplenet_forward.4} parent=5 // pred_check
      _
    $region10: #{supersimplenet_forward.4} parent=5 // pred_check_branch
      %199 = sbr.rel (%p196) target = $region12
    $region11: #{supersimplenet_forward.4} parent=5 // pred_region
      %s200 = ssub.s32 %s12, 1
      // Predicated region
      $region13: #{supersimplenet_forward.4} parent=11 // pred_check
        %p201 = pneg %p71
      $region14: #{supersimplenet_forward.4} parent=11 // pred_check_branch
        %203 = sbr.rel (%p201) target = $region16
      $region15: #{supersimplenet_forward.4} parent=11 // pred_region
        _
      $region16: #{supersimplenet_forward.4} parent=11 // pred_fallthru
        _
      // Predicated region
      $region17: #{supersimplenet_forward.4} parent=11 // pred_check
        %p204 = pneg %p92
      $region18: #{supersimplenet_forward.4} parent=11 // pred_check_branch
        %206 = sbr.rel (%p204) target = $region20
      $region19: #{supersimplenet_forward.4} parent=11 // pred_region
        _
      $region20: #{supersimplenet_forward.4} parent=11 // pred_fallthru
        _
      // Predicated region
      $region21: #{supersimplenet_forward.4} parent=11 // pred_check
        %p207 = pneg %p113
      $region22: #{supersimplenet_forward.4} parent=11 // pred_check_branch
        %209 = sbr.rel (%p207) target = $region24
      $region23: #{supersimplenet_forward.4} parent=11 // pred_region
        _
      $region24: #{supersimplenet_forward.4} parent=11 // pred_fallthru
        _
      // Predicated region
      $region25: #{supersimplenet_forward.4} parent=11 // pred_check
        %p210 = pneg %p134
      $region26: #{supersimplenet_forward.4} parent=11 // pred_check_branch
        %212 = sbr.rel (%p210) target = $region28
      $region27: #{supersimplenet_forward.4} parent=11 // pred_region
        _
      $region28: #{supersimplenet_forward.4} parent=11 // pred_fallthru
        _
    $region12: #{supersimplenet_forward.4} parent=5 // pred_fallthru
      _
    %p213 = scmp.lt.s32.totalorder %s12, 4
    // Predicated region
    $region29: #{supersimplenet_forward.4} parent=5 // pred_check
      %p214 = pneg %p213
    $region30: #{supersimplenet_forward.4} parent=5 // pred_check_branch
      %216 = sbr.rel (%p214) target = $region32
    $region31: #{supersimplenet_forward.4} parent=5 // pred_region
      // Predicated region
      $region33: #{supersimplenet_forward.4} parent=31 // pred_check
        %p217 = pneg %p44
      $region34: #{supersimplenet_forward.4} parent=31 // pred_check_branch
        %219 = sbr.rel (%p217) target = $region36
      $region35: #{supersimplenet_forward.4} parent=31 // pred_region
        %p220 = scmp.lt.s32.totalorder %s19, 1
        %s221 = scalar_select %p220, %s19, 1
        %s222 = smul.addr %s221, 24
        %s223 = smul.addr %s222, 4
        %s224 = scalar_lea.vmem %s0, %s223
      $region36: #{supersimplenet_forward.4} parent=31 // pred_fallthru
        _
      // Predicated region
      $region37: #{supersimplenet_forward.4} parent=31 // pred_check
        %p225 = pneg %p154
      $region38: #{supersimplenet_forward.4} parent=31 // pred_check_branch
        %227 = sbr.rel (%p225) target = $region40
      $region39: #{supersimplenet_forward.4} parent=31 // pred_region
        %p228 = scmp.lt.s32.totalorder %s19, 1
        %s229 = scalar_select %p228, %s19, 1
        %s230 = scalar_lea.vmem %s5, %s229
      $region40: #{supersimplenet_forward.4} parent=31 // pred_fallthru
        _
    $region32: #{supersimplenet_forward.4} parent=5 // pred_fallthru
      _
    %p231 = scmp.le.s32.totalorder 1, %s12
    %p232 = scmp.lt.s32.totalorder %s12, 5
    %p233 = pnand %p231, %p232
    %p234 = pneg %p233
    // Predicated region
    $region41: #{supersimplenet_forward.4} parent=5 // pred_check
      _
    $region42: #{supersimplenet_forward.4} parent=5 // pred_check_branch
      %236 = sbr.rel (%p233) target = $region44
    $region43: #{supersimplenet_forward.4} parent=5 // pred_region
      %s237 = ssub.s32 %s12, 1
      %p238 = scmp.lt.s32.totalorder %s21, 1
      %s239 = scalar_select %p238, %s21, 1
      %s240 = smul.addr %s239, 24
      %s241 = smul.addr %s240, 4
      %s242 = scalar_lea.vmem %s0, %s241
      %p243 = pneg %p50
      %p244 = pneg %p47
      %p245 = pneg %p71
      %p246 = pneg %p68
      %p247 = pneg %p92
      %p248 = pneg %p89
      %p249 = pneg %p113
      %p250 = pneg %p110
      %p251 = pneg %p134
      %p252 = pneg %p131
      %p253 = scmp.lt.s32.totalorder %s21, 1
      %s254 = scalar_select %p253, %s21, 1
      %s255 = scalar_lea.vmem %s5, %s254
      %p256 = pneg %p160
      %p257 = pneg %p157
      %p258 = pneg %p186
      %p259 = pneg %p183
      %p260 = scmp.lt.s32.totalorder %s21, 1
      %s261 = scalar_select %p260, %s21, 1
      %s262 = scalar_lea.vmem %s6, %s261
      %p263 = scmp.lt.s32.totalorder %s21, 1
      %s264 = scalar_select %p263, %s21, 1
      %s265 = smul.addr %s264, 24
      %s266 = smul.addr %s265, 4
      %s267 = scalar_lea.vmem %s0, %s266
      %p268 = scmp.lt.s32.totalorder %s21, 1
      %s269 = scalar_select %p268, %s21, 1
      %s270 = scalar_lea.vmem %s5, %s269
      %p271 = scmp.lt.s32.totalorder %s21, 1
      %s272 = scalar_select %p271, %s21, 1
      %s273 = scalar_lea.vmem %s6, %s272
      %p275 = scmp.eq.s32.totalorder %s22, 0
      // Predicated region
      $region45: #{supersimplenet_forward.4} parent=43 // pred_check
        %p276 = pneg %p275
      $region46: #{supersimplenet_forward.4} parent=43 // pred_check_branch
        %278 = sbr.rel (%p276) target = $region48
      $region47: #{supersimplenet_forward.4} parent=43 // pred_region
        %279 = vst [vmem:[#allocation2] sm:$0x1] -inf
        %280 = vst [vmem:[#allocation3] sm:$0x1] 0.0
      $region48: #{supersimplenet_forward.4} parent=43 // pred_fallthru
        _
      %s281 = smul.u32 %s22, 4
      %s282 = smul.u32 %s281, 2
      %s283 = smul.addr %s282, 4
      %s284 = scalar_lea.vmem %s267, %s283
      %v285 = vld [vmem:[%s284] sm:$0xf]
      %v286 = vld [vmem:[%s284 + $0x4] sm:$0x3]
      %v287 = vld [vmem:[%s284 + $0x8] sm:$0xf]
      %v288 = vld [vmem:[%s284 + $0xc] sm:$0x3]
      %v289 = vld [vmem:[%s284 + $0x10] sm:$0xf]
      %v290 = vld [vmem:[%s284 + $0x14] sm:$0x3]
      %v291 = vld [vmem:[%s284 + $0x18] sm:$0xf]
      %v292 = vld [vmem:[%s284 + $0x1c] sm:$0x3]
      %v293 = vld [vmem:[%s284 + $0x20] sm:$0xf]
      %v294 = vld [vmem:[%s284 + $0x24] sm:$0x3]
      %v295 = vld [vmem:[%s284 + $0x28] sm:$0xf]
      %v296 = vld [vmem:[%s284 + $0x2c] sm:$0x3]
      %v297 = vld [vmem:[%s284 + $0x30] sm:$0xf]
      %v298 = vld [vmem:[%s284 + $0x34] sm:$0x3]
      %v299 = vld [vmem:[%s284 + $0x38] sm:$0xf]
      %v300 = vld [vmem:[%s284 + $0x3c] sm:$0x3]
      %v305 = vunpack.c.l.b16 %v285
      %v306 = vunpack.c.l.b16 %v287
      %v307 = vunpack.c.l.b16 %v289
      %v308 = vunpack.c.l.b16 %v291
      %v309 = vpack.c.b16 %v306, %v305
      %v310 = vpack.c.b16 %v308, %v307
      %v314 = vunpack.c.l.b16 %v293
      %v315 = vpack.c.b16 %v307, %v306
      %v316 = vpack.c.b16 %v314, %v308
      %v320 = vunpack.c.l.b16 %v295
      %v321 = vpack.c.b16 %v320, %v314
      %v324 = vunpack.c.l.b16 %v297
      %v325 = vpack.c.b16 %v324, %v320
      %v328 = vunpack.c.l.b16 %v299
      %v329 = vpack.c.b16 %v328, %v324
      %v331 = vld [vmem:[%s1] sm:$0xf]
      %v332 = vld [vmem:[%s1 + $0x4] sm:$0xf]
      %v333 = vld [vmem:[%s1 + $0x8] sm:$0xf]
      %v334 = vld [vmem:[%s1 + $0xc] sm:$0xf]
      %v335 = vld [vmem:[%s1 + $0x10] sm:$0xf]
      %v336 = vld [vmem:[%s1 + $0x14] sm:$0xf]
      %v337 = vld [vmem:[%s1 + $0x18] sm:$0xf]
      %v338 = vld [vmem:[%s1 + $0x1c] sm:$0xf]
      %v339 = vld [vmem:[%s1 + $0x20] sm:$0xf]
      %v340 = vld [vmem:[%s1 + $0x24] sm:$0xf]
      %v341 = vld [vmem:[%s1 + $0x28] sm:$0xf]
      %v342 = vld [vmem:[%s1 + $0x2c] sm:$0xf]
      %v343 = vld [vmem:[%s1 + $0x30] sm:$0xf]
      %v344 = vld [vmem:[%s1 + $0x34] sm:$0xf]
      %v345 = vld [vmem:[%s1 + $0x38] sm:$0xf]
      %v346 = vld [vmem:[%s1 + $0x3c] sm:$0xf]
      %v347 = vld [vmem:[%s1 + $0x40] sm:$0xf]
      %v348 = vld [vmem:[%s1 + $0x44] sm:$0xf]
      %v349 = vld [vmem:[%s1 + $0x48] sm:$0xf]
      %v350 = vld [vmem:[%s1 + $0x4c] sm:$0xf]
      %v351 = vld [vmem:[%s1 + $0x50] sm:$0xf]
      %v352 = vld [vmem:[%s1 + $0x54] sm:$0xf]
      %v353 = vld [vmem:[%s1 + $0x58] sm:$0xf]
      %v354 = vld [vmem:[%s1 + $0x5c] sm:$0xf]
      %v355 = vld [vmem:[%s1 + $0x60] sm:$0xf]
      %v356 = vld [vmem:[%s1 + $0x64] sm:$0xf]
      %v357 = vld [vmem:[%s1 + $0x68] sm:$0xf]
      %v358 = vld [vmem:[%s1 + $0x6c] sm:$0xf]
      %v359 = vld [vmem:[%s1 + $0x70] sm:$0xf]
      %v360 = vld [vmem:[%s1 + $0x74] sm:$0xf]
      %v361 = vld [vmem:[%s1 + $0x78] sm:$0xf]
      %v362 = vld [vmem:[%s1 + $0x7c] sm:$0xf]
      %v363 = vld [vmem:[%s1 + $0x80] sm:$0xf]
      %v364 = vld [vmem:[%s1 + $0x84] sm:$0xf]
      %v365 = vld [vmem:[%s1 + $0x88] sm:$0xf]
      %v366 = vld [vmem:[%s1 + $0x8c] sm:$0xf]
      %v367 = vld [vmem:[%s1 + $0x90] sm:$0xf]
      %v368 = vld [vmem:[%s1 + $0x94] sm:$0xf]
      %v369 = vld [vmem:[%s1 + $0x98] sm:$0xf]
      %v370 = vld [vmem:[%s1 + $0x9c] sm:$0xf]
      %v371 = vld [vmem:[%s1 + $0xa0] sm:$0xf]
      %v372 = vld [vmem:[%s1 + $0xa4] sm:$0xf]
      %v373 = vld [vmem:[%s1 + $0xa8] sm:$0xf]
      %v374 = vld [vmem:[%s1 + $0xac] sm:$0xf]
      %v375 = vld [vmem:[%s1 + $0xb0] sm:$0xf]
      %v376 = vld [vmem:[%s1 + $0xb4] sm:$0xf]
      %v377 = vld [vmem:[%s1 + $0xb8] sm:$0xf]
      %v378 = vld [vmem:[%s1 + $0xbc] sm:$0xf]
      %v379 = vld [vmem:[%s1 + $0xc0] sm:$0xf]
      %v380 = vld [vmem:[%s1 + $0xc4] sm:$0xf]
      %v381 = vld [vmem:[%s1 + $0xc8] sm:$0xf]
      %v382 = vld [vmem:[%s1 + $0xcc] sm:$0xf]
      %v383 = vld [vmem:[%s1 + $0xd0] sm:$0xf]
      %v384 = vld [vmem:[%s1 + $0xd4] sm:$0xf]
      %v385 = vld [vmem:[%s1 + $0xd8] sm:$0xf]
      %v386 = vld [vmem:[%s1 + $0xdc] sm:$0xf]
      %v387 = vld [vmem:[%s1 + $0xe0] sm:$0xf]
      %v388 = vld [vmem:[%s1 + $0xe4] sm:$0xf]
      %v389 = vld [vmem:[%s1 + $0xe8] sm:$0xf]
      %v390 = vld [vmem:[%s1 + $0xec] sm:$0xf]
      %v391 = vld [vmem:[%s1 + $0xf0] sm:$0xf]
      %v392 = vld [vmem:[%s1 + $0xf4] sm:$0xf]
      %v393 = vld [vmem:[%s1 + $0xf8] sm:$0xf]
      %v394 = vld [vmem:[%s1 + $0xfc] sm:$0xf]
      %v395 = vld [vmem:[%s1 + $0x100] sm:$0xf]
      %v396 = vld [vmem:[%s1 + $0x104] sm:$0xf]
      %v397 = vld [vmem:[%s1 + $0x108] sm:$0xf]
      %v398 = vld [vmem:[%s1 + $0x10c] sm:$0xf]
      %v399 = vld [vmem:[%s1 + $0x110] sm:$0xf]
      %v400 = vld [vmem:[%s1 + $0x114] sm:$0xf]
      %v401 = vld [vmem:[%s1 + $0x118] sm:$0xf]
      %v402 = vld [vmem:[%s1 + $0x11c] sm:$0xf]
      %v403 = vld [vmem:[%s1 + $0x120] sm:$0xf]
      %v404 = vld [vmem:[%s1 + $0x124] sm:$0xf]
      %v405 = vld [vmem:[%s1 + $0x128] sm:$0xf]
      %v406 = vld [vmem:[%s1 + $0x12c] sm:$0xf]
      %v407 = vld [vmem:[%s1 + $0x130] sm:$0xf]
      %v408 = vld [vmem:[%s1 + $0x134] sm:$0xf]
      %v409 = vld [vmem:[%s1 + $0x138] sm:$0xf]
      %v410 = vld [vmem:[%s1 + $0x13c] sm:$0xf]
      %vm411 = vsmask.f32 3328
      %vm412 = vsmask.f32 7440
      %vm413 = vmor %vm411, %vm412
      %v415 = vshrl.u32 %v285, 16
      %v417 = vrot.slane %v415, 4
      %v418 = vshll.u32 %v285, 16
      %v420 = vrot.slane %v418, 5
      %v421 = vor.u32 %v417, %v420
      %v422 = vrot.slane %v421, 4
      %v424 = vshll.u32 %v286, 16
      %v426 = vrot.slane %v424, 5
      %v427 = vsel %vm413, %v422, %v426
      %v429 = vshrl.u32 %v287, 16
      %v431 = vrot.slane %v429, 4
      %v432 = vshll.u32 %v287, 16
      %v434 = vrot.slane %v432, 5
      %v435 = vor.u32 %v431, %v434
      %v436 = vrot.slane %v435, 4
      %v438 = vshll.u32 %v288, 16
      %v440 = vrot.slane %v438, 5
      %v441 = vsel %vm413, %v436, %v440
      %v443 = vshrl.u32 %v289, 16
      %v445 = vrot.slane %v443, 4
      %v446 = vshll.u32 %v289, 16
      %v448 = vrot.slane %v446, 5
      %v449 = vor.u32 %v445, %v448
      %v450 = vrot.slane %v449, 4
      %v452 = vshll.u32 %v290, 16
      %v454 = vrot.slane %v452, 5
      %v455 = vsel %vm413, %v450, %v454
      %v457 = vshrl.u32 %v291, 16
      %v459 = vrot.slane %v457, 4
      %v460 = vshll.u32 %v291, 16
      %v462 = vrot.slane %v460, 5
      %v463 = vor.u32 %v459, %v462
      %v464 = vrot.slane %v463, 4
      %v466 = vshll.u32 %v292, 16
      %v468 = vrot.slane %v466, 5
      %v469 = vsel %vm413, %v464, %v468
      %v471 = vshrl.u32 %v293, 16
      %v473 = vrot.slane %v471, 4
      %v474 = vshll.u32 %v293, 16
      %v476 = vrot.slane %v474, 5
      %v477 = vor.u32 %v473, %v476
      %v478 = vrot.slane %v477, 4
      %v480 = vshll.u32 %v294, 16
      %v482 = vrot.slane %v480, 5
      %v483 = vsel %vm413, %v478, %v482
      %v485 = vshrl.u32 %v295, 16
      %v487 = vrot.slane %v485, 4
      %v488 = vshll.u32 %v295, 16
      %v490 = vrot.slane %v488, 5
      %v491 = vor.u32 %v487, %v490
      %v492 = vrot.slane %v491, 4
      %v494 = vshll.u32 %v296, 16
      %v496 = vrot.slane %v494, 5
      %v497 = vsel %vm413, %v492, %v496
      %v499 = vshrl.u32 %v297, 16
      %v501 = vrot.slane %v499, 4
      %v502 = vshll.u32 %v297, 16
      %v504 = vrot.slane %v502, 5
      %v505 = vor.u32 %v501, %v504
      %v506 = vrot.slane %v505, 4
      %v508 = vshll.u32 %v298, 16
      %v510 = vrot.slane %v508, 5
      %v511 = vsel %vm413, %v506, %v510
      %v513 = vshrl.u32 %v299, 16
      %v515 = vrot.slane %v513, 4
      %v516 = vshll.u32 %v299, 16
      %v518 = vrot.slane %v516, 5
      %v519 = vor.u32 %v515, %v518
      %v520 = vrot.slane %v519, 4
      %v522 = vshll.u32 %v300, 16
      %v524 = vrot.slane %v522, 5
      %v525 = vsel %vm413, %v520, %v524
      %v526 = vunpack.c.l.b16 %v427
      %v527 = vunpack.c.l.b16 %v441
      %v528 = vunpack.c.l.b16 %v455
      %v529 = vunpack.c.l.b16 %v469
      %v530 = vpack.c.b16 %v527, %v526
      %v531 = vpack.c.b16 %v529, %v528
      %v534 = vunpack.c.l.b16 %v483
      %v535 = vpack.c.b16 %v528, %v527
      %v536 = vpack.c.b16 %v534, %v529
      %v539 = vunpack.c.l.b16 %v497
      %v540 = vpack.c.b16 %v539, %v534
      %v542 = vunpack.c.l.b16 %v511
      %v543 = vpack.c.b16 %v542, %v539
      %v545 = vunpack.c.l.b16 %v525
      %v546 = vpack.c.b16 %v545, %v542
      %s548 = scalar_lea.vmem %s1, 320
      %v549 = vld [vmem:[%s548] sm:$0xf]
      %v550 = vld [vmem:[%s548 + $0x4] sm:$0xf]
      %v551 = vld [vmem:[%s548 + $0x8] sm:$0xf]
      %v552 = vld [vmem:[%s548 + $0xc] sm:$0xf]
      %v553 = vld [vmem:[%s548 + $0x10] sm:$0xf]
      %v554 = vld [vmem:[%s548 + $0x14] sm:$0xf]
      %v555 = vld [vmem:[%s548 + $0x18] sm:$0xf]
      %v556 = vld [vmem:[%s548 + $0x1c] sm:$0xf]
      %v557 = vld [vmem:[%s548 + $0x20] sm:$0xf]
      %v558 = vld [vmem:[%s548 + $0x24] sm:$0xf]
      %v559 = vld [vmem:[%s548 + $0x28] sm:$0xf]
      %v560 = vld [vmem:[%s548 + $0x2c] sm:$0xf]
      %v561 = vld [vmem:[%s548 + $0x30] sm:$0xf]
      %v562 = vld [vmem:[%s548 + $0x34] sm:$0xf]
      %v563 = vld [vmem:[%s548 + $0x38] sm:$0xf]
      %v564 = vld [vmem:[%s548 + $0x3c] sm:$0xf]
      %v565 = vld [vmem:[%s548 + $0x40] sm:$0xf]
      %v566 = vld [vmem:[%s548 + $0x44] sm:$0xf]
      %v567 = vld [vmem:[%s548 + $0x48] sm:$0xf]
      %v568 = vld [vmem:[%s548 + $0x4c] sm:$0xf]
      %v569 = vld [vmem:[%s548 + $0x50] sm:$0xf]
      %v570 = vld [vmem:[%s548 + $0x54] sm:$0xf]
      %v571 = vld [vmem:[%s548 + $0x58] sm:$0xf]
      %v572 = vld [vmem:[%s548 + $0x5c] sm:$0xf]
      %v573 = vld [vmem:[%s548 + $0x60] sm:$0xf]
      %v574 = vld [vmem:[%s548 + $0x64] sm:$0xf]
      %v575 = vld [vmem:[%s548 + $0x68] sm:$0xf]
      %v576 = vld [vmem:[%s548 + $0x6c] sm:$0xf]
      %v577 = vld [vmem:[%s548 + $0x70] sm:$0xf]
      %v578 = vld [vmem:[%s548 + $0x74] sm:$0xf]
      %v579 = vld [vmem:[%s548 + $0x78] sm:$0xf]
      %v580 = vld [vmem:[%s548 + $0x7c] sm:$0xf]
      %v581 = vld [vmem:[%s548 + $0x80] sm:$0xf]
      %v582 = vld [vmem:[%s548 + $0x84] sm:$0xf]
      %v583 = vld [vmem:[%s548 + $0x88] sm:$0xf]
      %v584 = vld [vmem:[%s548 + $0x8c] sm:$0xf]
      %v585 = vld [vmem:[%s548 + $0x90] sm:$0xf]
      %v586 = vld [vmem:[%s548 + $0x94] sm:$0xf]
      %v587 = vld [vmem:[%s548 + $0x98] sm:$0xf]
      %v588 = vld [vmem:[%s548 + $0x9c] sm:$0xf]
      %v589 = vld [vmem:[%s548 + $0xa0] sm:$0xf]
      %v590 = vld [vmem:[%s548 + $0xa4] sm:$0xf]
      %v591 = vld [vmem:[%s548 + $0xa8] sm:$0xf]
      %v592 = vld [vmem:[%s548 + $0xac] sm:$0xf]
      %v593 = vld [vmem:[%s548 + $0xb0] sm:$0xf]
      %v594 = vld [vmem:[%s548 + $0xb4] sm:$0xf]
      %v595 = vld [vmem:[%s548 + $0xb8] sm:$0xf]
      %v596 = vld [vmem:[%s548 + $0xbc] sm:$0xf]
      %v597 = vld [vmem:[%s548 + $0xc0] sm:$0xf]
      %v598 = vld [vmem:[%s548 + $0xc4] sm:$0xf]
      %v599 = vld [vmem:[%s548 + $0xc8] sm:$0xf]
      %v600 = vld [vmem:[%s548 + $0xcc] sm:$0xf]
      %v601 = vld [vmem:[%s548 + $0xd0] sm:$0xf]
      %v602 = vld [vmem:[%s548 + $0xd4] sm:$0xf]
      %v603 = vld [vmem:[%s548 + $0xd8] sm:$0xf]
      %v604 = vld [vmem:[%s548 + $0xdc] sm:$0xf]
      %v605 = vld [vmem:[%s548 + $0xe0] sm:$0xf]
      %v606 = vld [vmem:[%s548 + $0xe4] sm:$0xf]
      %v607 = vld [vmem:[%s548 + $0xe8] sm:$0xf]
      %v608 = vld [vmem:[%s548 + $0xec] sm:$0xf]
      %v609 = vld [vmem:[%s548 + $0xf0] sm:$0xf]
      %v610 = vld [vmem:[%s548 + $0xf4] sm:$0xf]
      %v611 = vld [vmem:[%s548 + $0xf8] sm:$0xf]
      %v612 = vld [vmem:[%s548 + $0xfc] sm:$0xf]
      %v613 = vld [vmem:[%s548 + $0x100] sm:$0xf]
      %v614 = vld [vmem:[%s548 + $0x104] sm:$0xf]
      %v615 = vld [vmem:[%s548 + $0x108] sm:$0xf]
      %v616 = vld [vmem:[%s548 + $0x10c] sm:$0xf]
      %v617 = vld [vmem:[%s548 + $0x110] sm:$0xf]
      %v618 = vld [vmem:[%s548 + $0x114] sm:$0xf]
      %v619 = vld [vmem:[%s548 + $0x118] sm:$0xf]
      %v620 = vld [vmem:[%s548 + $0x11c] sm:$0xf]
      %v621 = vld [vmem:[%s548 + $0x120] sm:$0xf]
      %v622 = vld [vmem:[%s548 + $0x124] sm:$0xf]
      %v623 = vld [vmem:[%s548 + $0x128] sm:$0xf]
      %v624 = vld [vmem:[%s548 + $0x12c] sm:$0xf]
      %v625 = vld [vmem:[%s548 + $0x130] sm:$0xf]
      %v626 = vld [vmem:[%s548 + $0x134] sm:$0xf]
      %v627 = vld [vmem:[%s548 + $0x138] sm:$0xf]
      %v628 = vld [vmem:[%s548 + $0x13c] sm:$0xf]
      %v709 = vunpack.c.l.b16 %v549
      %v710 = vunpack.c.l.b16 %v550
      %v711 = vunpack.c.l.b16 %v551
      %v712 = vunpack.c.l.b16 %v552
      %v713 = vunpack.c.l.b16 %v553
      %v714 = vunpack.c.l.b16 %v554
      %v715 = vunpack.c.l.b16 %v555
      %v716 = vunpack.c.l.b16 %v556
      %v717 = vunpack.c.l.b16 %v557
      %v718 = vunpack.c.l.b16 %v558
      %v719 = vunpack.c.l.b16 %v559
      %v720 = vunpack.c.l.b16 %v560
      %v721 = vunpack.c.l.b16 %v561
      %v722 = vunpack.c.l.b16 %v562
      %v723 = vunpack.c.l.b16 %v563
      %v724 = vunpack.c.l.b16 %v564
      %v725 = vunpack.c.l.b16 %v565
      %v726 = vunpack.c.l.b16 %v566
      %v727 = vunpack.c.l.b16 %v567
      %v728 = vunpack.c.l.b16 %v568
      %v729 = vunpack.c.l.b16 %v569
      %v730 = vunpack.c.l.b16 %v570
      %v731 = vunpack.c.l.b16 %v571
      %v732 = vunpack.c.l.b16 %v572
      %v733 = vunpack.c.l.b16 %v573
      %v734 = vunpack.c.l.b16 %v574
      %v735 = vunpack.c.l.b16 %v575
      %v736 = vunpack.c.l.b16 %v576
      %v737 = vunpack.c.l.b16 %v577
      %v738 = vunpack.c.l.b16 %v578
      %v739 = vunpack.c.l.b16 %v579
      %v740 = vunpack.c.l.b16 %v580
      %v741 = vunpack.c.l.b16 %v581
      %v742 = vunpack.c.l.b16 %v582
      %v743 = vunpack.c.l.b16 %v583
      %v744 = vunpack.c.l.b16 %v584
      %v745 = vunpack.c.l.b16 %v585
      %v746 = vunpack.c.l.b16 %v586
      %v747 = vunpack.c.l.b16 %v587
      %v748 = vunpack.c.l.b16 %v588
      %v749 = vunpack.c.l.b16 %v589
      %v750 = vunpack.c.l.b16 %v590
      %v751 = vunpack.c.l.b16 %v591
      %v752 = vunpack.c.l.b16 %v592
      %v753 = vunpack.c.l.b16 %v593
      %v754 = vunpack.c.l.b16 %v594
      %v755 = vunpack.c.l.b16 %v595
      %v756 = vunpack.c.l.b16 %v596
      %v757 = vunpack.c.l.b16 %v597
      %v758 = vunpack.c.l.b16 %v598
      %v759 = vunpack.c.l.b16 %v599
      %v760 = vunpack.c.l.b16 %v600
      %v761 = vunpack.c.l.b16 %v601
      %v762 = vunpack.c.l.b16 %v602
      %v763 = vunpack.c.l.b16 %v603
      %v764 = vunpack.c.l.b16 %v604
      %v765 = vunpack.c.l.b16 %v605
      %v766 = vunpack.c.l.b16 %v606
      %v767 = vunpack.c.l.b16 %v607
      %v768 = vunpack.c.l.b16 %v608
      %v769 = vunpack.c.l.b16 %v609
      %v770 = vunpack.c.l.b16 %v610
      %v771 = vunpack.c.l.b16 %v611
      %v772 = vunpack.c.l.b16 %v612
      %v773 = vunpack.c.l.b16 %v613
      %v774 = vunpack.c.l.b16 %v614
      %v775 = vunpack.c.l.b16 %v615
      %v776 = vunpack.c.l.b16 %v616
      %v777 = vunpack.c.l.b16 %v617
      %v778 = vunpack.c.l.b16 %v618
      %v779 = vunpack.c.l.b16 %v619
      %v780 = vunpack.c.l.b16 %v620
      %v781 = vunpack.c.l.b16 %v621
      %v782 = vunpack.c.l.b16 %v622
      %v783 = vunpack.c.l.b16 %v623
      %v784 = vunpack.c.l.b16 %v624
      %v785 = vunpack.c.l.b16 %v625
      %v786 = vunpack.c.l.b16 %v626
      %v787 = vunpack.c.l.b16 %v627
      %v788 = vunpack.c.l.b16 %v628
      %v789 = vpack.c.b16 %v710, %v709
      %v790 = vpack.c.b16 %v712, %v711
      %v791 = vpack.c.b16 %v714, %v713
      %v792 = vpack.c.b16 %v716, %v715
      %v793 = vpack.c.b16 %v718, %v717
      %v794 = vpack.c.b16 %v720, %v719
      %v795 = vpack.c.b16 %v722, %v721
      %v796 = vpack.c.b16 %v724, %v723
      %v797 = vpack.c.b16 %v726, %v725
      %v798 = vpack.c.b16 %v728, %v727
      %v799 = vpack.c.b16 %v730, %v729
      %v800 = vpack.c.b16 %v732, %v731
      %v801 = vpack.c.b16 %v734, %v733
      %v802 = vpack.c.b16 %v736, %v735
      %v803 = vpack.c.b16 %v738, %v737
      %v804 = vpack.c.b16 %v740, %v739
      %v805 = vpack.c.b16 %v742, %v741
      %v806 = vpack.c.b16 %v744, %v743
      %v807 = vpack.c.b16 %v746, %v745
      %v808 = vpack.c.b16 %v748, %v747
      %v809 = vpack.c.b16 %v750, %v749
      %v810 = vpack.c.b16 %v752, %v751
      %v811 = vpack.c.b16 %v754, %v753
      %v812 = vpack.c.b16 %v756, %v755
      %v813 = vpack.c.b16 %v758, %v757
      %v814 = vpack.c.b16 %v760, %v759
      %v815 = vpack.c.b16 %v762, %v761
      %v816 = vpack.c.b16 %v764, %v763
      %v817 = vpack.c.b16 %v766, %v765
      %v818 = vpack.c.b16 %v768, %v767
      %v819 = vpack.c.b16 %v770, %v769
      %v820 = vpack.c.b16 %v772, %v771
      %v821 = vpack.c.b16 %v774, %v773
      %v822 = vpack.c.b16 %v776, %v775
      %v823 = vpack.c.b16 %v778, %v777
      %v824 = vpack.c.b16 %v780, %v779
      %v825 = vpack.c.b16 %v782, %v781
      %v826 = vpack.c.b16 %v784, %v783
      %v827 = vpack.c.b16 %v786, %v785
      %v828 = vpack.c.b16 %v788, %v787
      %869 = vmatprep.subr.bf16.mxu0 0
      %870 = vmatpush1.bf16.msra.mxu0 %v796
      %871 = vmatprep.subr.bf16.mxu0 0
      %872 = vmatpush1.bf16.msra.mxu0 %v795
      %873 = vmatprep.subr.bf16.mxu0 0
      %874 = vmatpush1.bf16.msra.mxu0 %v794
      %875 = vmatprep.subr.bf16.mxu0 0
      %876 = vmatpush1.bf16.msra.mxu0 %v793
      %877 = vmatprep.subr.bf16.mxu0 0
      %878 = vmatpush1.bf16.msra.mxu0 %v792
      %879 = vmatprep.subr.bf16.mxu0 0
      %880 = vmatpush1.bf16.msra.mxu0 %v791
      %881 = vmatprep.subr.bf16.mxu0 0
      %882 = vmatpush1.bf16.msra.mxu0 %v790
      %883 = vmatprep.subr.bf16.mxu0 0
      %884 = vmatpush1.bf16.msra.mxu0 %v789
      %885 = vmatprep.subr.bf16.mxu0 0
      %886 = vmatpush2.bf16.msra.mxu0 %v804
      %887 = vmatprep.subr.bf16.mxu0 0
      %888 = vmatpush2.bf16.msra.mxu0 %v803
      %889 = vmatprep.subr.bf16.mxu0 0
      %890 = vmatpush2.bf16.msra.mxu0 %v802
      %891 = vmatprep.subr.bf16.mxu0 0
      %892 = vmatpush2.bf16.msra.mxu0 %v801
      %893 = vmatprep.subr.bf16.mxu0 0
      %894 = vmatpush2.bf16.msra.mxu0 %v800
      %895 = vmatprep.subr.bf16.mxu0 0
      %896 = vmatpush2.bf16.msra.mxu0 %v799
      %897 = vmatprep.subr.bf16.mxu0 0
      %898 = vmatpush2.bf16.msra.mxu0 %v798
      %899 = vmatprep.subr.bf16.mxu0 0
      %900 = vmatpush2.bf16.msra.mxu0 %v797
      %901 = vmatprep.mubr.bf16.mxu0 %v535
      %902 = vmatmul.mubr.bf16.gmra.mxu0 %v530
      %v903 = vpop.f32.mrf.mxu0
      %v904 = vadd.f32 0.0, %v903
      %v905 = vpop.f32.mrf.mxu0
      %v906 = vpop.f32.mrf.mxu0
      %v907 = vadd.f32 0.0, %v906
      %v908 = vpop.f32.mrf.mxu0
      %909 = vmatprep.mubr.bf16.mxu0 %v536
      %910 = vmatmul.mubr.bf16.gmra.mxu0 %v531
      %v911 = vpop.f32.mrf.mxu0
      %v912 = vadd.f32 0.0, %v911
      %v913 = vpop.f32.mrf.mxu0
      %v914 = vpop.f32.mrf.mxu0
      %v915 = vadd.f32 0.0, %v914
      %v916 = vpop.f32.mrf.mxu0
      %917 = vdwg.mxu0
      %918 = vmatprep.subr.bf16.mxu0 0
      %919 = vmatpush1.bf16.msra.mxu0 %v812
      %920 = vmatprep.subr.bf16.mxu0 0
      %921 = vmatpush1.bf16.msra.mxu0 %v811
      %922 = vmatprep.subr.bf16.mxu0 0
      %923 = vmatpush1.bf16.msra.mxu0 %v810
      %924 = vmatprep.subr.bf16.mxu0 0
      %925 = vmatpush1.bf16.msra.mxu0 %v809
      %926 = vmatprep.subr.bf16.mxu0 0
      %927 = vmatpush1.bf16.msra.mxu0 %v808
      %928 = vmatprep.subr.bf16.mxu0 0
      %929 = vmatpush1.bf16.msra.mxu0 %v807
      %930 = vmatprep.subr.bf16.mxu0 0
      %931 = vmatpush1.bf16.msra.mxu0 %v806
      %932 = vmatprep.subr.bf16.mxu0 0
      %933 = vmatpush1.bf16.msra.mxu0 %v805
      %934 = vmatprep.subr.bf16.mxu0 0
      %935 = vmatpush2.bf16.msra.mxu0 %v820
      %936 = vmatprep.subr.bf16.mxu0 0
      %937 = vmatpush2.bf16.msra.mxu0 %v819
      %938 = vmatprep.subr.bf16.mxu0 0
      %939 = vmatpush2.bf16.msra.mxu0 %v818
      %940 = vmatprep.subr.bf16.mxu0 0
      %941 = vmatpush2.bf16.msra.mxu0 %v817
      %942 = vmatprep.subr.bf16.mxu0 0
      %943 = vmatpush2.bf16.msra.mxu0 %v816
      %944 = vmatprep.subr.bf16.mxu0 0
      %945 = vmatpush2.bf16.msra.mxu0 %v815
      %946 = vmatprep.subr.bf16.mxu0 0
      %947 = vmatpush2.bf16.msra.mxu0 %v814
      %948 = vmatprep.subr.bf16.mxu0 0
      %949 = vmatpush2.bf16.msra.mxu0 %v813
      %950 = vmatprep.mubr.bf16.mxu0 %v536
      %951 = vmatmul.mubr.bf16.gmra.mxu0 %v531
      %v952 = vpop.f32.mrf.mxu0
      %v953 = vadd.f32 %v904, %v952
      %v954 = vpop.f32.mrf.mxu0
      %v955 = vpop.f32.mrf.mxu0
      %v956 = vadd.f32 %v907, %v955
      %v957 = vpop.f32.mrf.mxu0
      %958 = vmatprep.mubr.bf16.mxu0 %v543
      %959 = vmatmul.mubr.bf16.gmra.mxu0 %v540
      %v960 = vpop.f32.mrf.mxu0
      %v961 = vadd.f32 %v912, %v960
      %v962 = vpop.f32.mrf.mxu0
      %v963 = vpop.f32.mrf.mxu0
      %v964 = vadd.f32 %v915, %v963
      %v965 = vpop.f32.mrf.mxu0
      %966 = vdwg.mxu0
      %967 = vmatprep.subr.bf16.mxu0 0
      %968 = vmatpush1.bf16.msra.mxu0 %v828
      %969 = vmatprep.subr.bf16.mxu0 0
      %970 = vmatpush1.bf16.msra.mxu0 %v827
      %971 = vmatprep.subr.bf16.mxu0 0
      %972 = vmatpush1.bf16.msra.mxu0 %v826
      %973 = vmatprep.subr.bf16.mxu0 0
      %974 = vmatpush1.bf16.msra.mxu0 %v825
      %975 = vmatprep.subr.bf16.mxu0 0
      %976 = vmatpush1.bf16.msra.mxu0 %v824
      %977 = vmatprep.subr.bf16.mxu0 0
      %978 = vmatpush1.bf16.msra.mxu0 %v823
      %979 = vmatprep.subr.bf16.mxu0 0
      %980 = vmatpush1.bf16.msra.mxu0 %v822
      %981 = vmatprep.subr.bf16.mxu0 0
      %982 = vmatpush1.bf16.msra.mxu0 %v821
      %983 = vmatprep.subr.bf16.mxu0 0
      %984 = vmatpush2.bf16.msra.mxu0 0
      %985 = vmatprep.subr.bf16.mxu0 0
      %986 = vmatpush2.bf16.msra.mxu0 0
      %987 = vmatprep.subr.bf16.mxu0 0
      %988 = vmatpush2.bf16.msra.mxu0 0
      %989 = vmatprep.subr.bf16.mxu0 0
      %990 = vmatpush2.bf16.msra.mxu0 0
      %991 = vmatprep.subr.bf16.mxu0 0
      %992 = vmatpush2.bf16.msra.mxu0 0
      %993 = vmatprep.subr.bf16.mxu0 0
      %994 = vmatpush2.bf16.msra.mxu0 0
      %995 = vmatprep.subr.bf16.mxu0 0
      %996 = vmatpush2.bf16.msra.mxu0 0
      %997 = vmatprep.subr.bf16.mxu0 0
      %998 = vmatpush2.bf16.msra.mxu0 0
      %999 = vmatprep.mubr.bf16.mxu0 0
      %1000 = vmatmul.mubr.bf16.gmra.mxu0 %v540
      %v1001 = vpop.f32.mrf.mxu0
      %v1002 = vadd.f32 %v953, %v1001
      %v1003 = vpop.f32.mrf.mxu0
      %v1004 = vpop.f32.mrf.mxu0
      %v1005 = vadd.f32 %v956, %v1004
      %v1006 = vpop.f32.mrf.mxu0
      %1007 = vmatprep.mubr.bf16.mxu0 0
      %1008 = vmatmul.mubr.bf16.gmra.mxu0 %v546
      %v1009 = vpop.f32.mrf.mxu0
      %v1010 = vadd.f32 %v961, %v1009
      %v1011 = vpop.f32.mrf.mxu0
      %v1012 = vpop.f32.mrf.mxu0
      %v1013 = vadd.f32 %v964, %v1012
      %v1014 = vpop.f32.mrf.mxu0
      %1015 = vdwg.mxu0
      %v1096 = vunpack.c.l.b16 %v331
      %v1097 = vunpack.c.l.b16 %v332
      %v1098 = vunpack.c.l.b16 %v333
      %v1099 = vunpack.c.l.b16 %v334
      %v1100 = vunpack.c.l.b16 %v335
      %v1101 = vunpack.c.l.b16 %v336
      %v1102 = vunpack.c.l.b16 %v337
      %v1103 = vunpack.c.l.b16 %v338
      %v1104 = vunpack.c.l.b16 %v339
      %v1105 = vunpack.c.l.b16 %v340
      %v1106 = vunpack.c.l.b16 %v341
      %v1107 = vunpack.c.l.b16 %v342
      %v1108 = vunpack.c.l.b16 %v343
      %v1109 = vunpack.c.l.b16 %v344
      %v1110 = vunpack.c.l.b16 %v345
      %v1111 = vunpack.c.l.b16 %v346
      %v1112 = vunpack.c.l.b16 %v347
      %v1113 = vunpack.c.l.b16 %v348
      %v1114 = vunpack.c.l.b16 %v349
      %v1115 = vunpack.c.l.b16 %v350
      %v1116 = vunpack.c.l.b16 %v351
      %v1117 = vunpack.c.l.b16 %v352
      %v1118 = vunpack.c.l.b16 %v353
      %v1119 = vunpack.c.l.b16 %v354
      %v1120 = vunpack.c.l.b16 %v355
      %v1121 = vunpack.c.l.b16 %v356
      %v1122 = vunpack.c.l.b16 %v357
      %v1123 = vunpack.c.l.b16 %v358
      %v1124 = vunpack.c.l.b16 %v359
      %v1125 = vunpack.c.l.b16 %v360
      %v1126 = vunpack.c.l.b16 %v361
      %v1127 = vunpack.c.l.b16 %v362
      %v1128 = vunpack.c.l.b16 %v363
      %v1129 = vunpack.c.l.b16 %v364
      %v1130 = vunpack.c.l.b16 %v365
      %v1131 = vunpack.c.l.b16 %v366
      %v1132 = vunpack.c.l.b16 %v367
      %v1133 = vunpack.c.l.b16 %v368
      %v1134 = vunpack.c.l.b16 %v369
      %v1135 = vunpack.c.l.b16 %v370
      %v1136 = vunpack.c.l.b16 %v371
      %v1137 = vunpack.c.l.b16 %v372
      %v1138 = vunpack.c.l.b16 %v373
      %v1139 = vunpack.c.l.b16 %v374
      %v1140 = vunpack.c.l.b16 %v375
      %v1141 = vunpack.c.l.b16 %v376
      %v1142 = vunpack.c.l.b16 %v377
      %v1143 = vunpack.c.l.b16 %v378
      %v1144 = vunpack.c.l.b16 %v379
      %v1145 = vunpack.c.l.b16 %v380
      %v1146 = vunpack.c.l.b16 %v381
      %v1147 = vunpack.c.l.b16 %v382
      %v1148 = vunpack.c.l.b16 %v383
      %v1149 = vunpack.c.l.b16 %v384
      %v1150 = vunpack.c.l.b16 %v385
      %v1151 = vunpack.c.l.b16 %v386
      %v1152 = vunpack.c.l.b16 %v387
      %v1153 = vunpack.c.l.b16 %v388
      %v1154 = vunpack.c.l.b16 %v389
      %v1155 = vunpack.c.l.b16 %v390
      %v1156 = vunpack.c.l.b16 %v391
      %v1157 = vunpack.c.l.b16 %v392
      %v1158 = vunpack.c.l.b16 %v393
      %v1159 = vunpack.c.l.b16 %v394
      %v1160 = vunpack.c.l.b16 %v395
      %v1161 = vunpack.c.l.b16 %v396
      %v1162 = vunpack.c.l.b16 %v397
      %v1163 = vunpack.c.l.b16 %v398
      %v1164 = vunpack.c.l.b16 %v399
      %v1165 = vunpack.c.l.b16 %v400
      %v1166 = vunpack.c.l.b16 %v401
      %v1167 = vunpack.c.l.b16 %v402
      %v1168 = vunpack.c.l.b16 %v403
      %v1169 = vunpack.c.l.b16 %v404
      %v1170 = vunpack.c.l.b16 %v405
      %v1171 = vunpack.c.l.b16 %v406
      %v1172 = vunpack.c.l.b16 %v407
      %v1173 = vunpack.c.l.b16 %v408
      %v1174 = vunpack.c.l.b16 %v409
      %v1175 = vunpack.c.l.b16 %v410
      %v1176 = vpack.c.b16 %v1097, %v1096
      %v1177 = vpack.c.b16 %v1099, %v1098
      %v1178 = vpack.c.b16 %v1101, %v1100
      %v1179 = vpack.c.b16 %v1103, %v1102
      %v1180 = vpack.c.b16 %v1105, %v1104
      %v1181 = vpack.c.b16 %v1107, %v1106
      %v1182 = vpack.c.b16 %v1109, %v1108
      %v1183 = vpack.c.b16 %v1111, %v1110
      %v1184 = vpack.c.b16 %v1113, %v1112
      %v1185 = vpack.c.b16 %v1115, %v1114
      %v1186 = vpack.c.b16 %v1117, %v1116
      %v1187 = vpack.c.b16 %v1119, %v1118
      %v1188 = vpack.c.b16 %v1121, %v1120
      %v1189 = vpack.c.b16 %v1123, %v1122
      %v1190 = vpack.c.b16 %v1125, %v1124
      %v1191 = vpack.c.b16 %v1127, %v1126
      %v1192 = vpack.c.b16 %v1129, %v1128
      %v1193 = vpack.c.b16 %v1131, %v1130
      %v1194 = vpack.c.b16 %v1133, %v1132
      %v1195 = vpack.c.b16 %v1135, %v1134
      %v1196 = vpack.c.b16 %v1137, %v1136
      %v1197 = vpack.c.b16 %v1139, %v1138
      %v1198 = vpack.c.b16 %v1141, %v1140
      %v1199 = vpack.c.b16 %v1143, %v1142
      %v1200 = vpack.c.b16 %v1145, %v1144
      %v1201 = vpack.c.b16 %v1147, %v1146
      %v1202 = vpack.c.b16 %v1149, %v1148
      %v1203 = vpack.c.b16 %v1151, %v1150
      %v1204 = vpack.c.b16 %v1153, %v1152
      %v1205 = vpack.c.b16 %v1155, %v1154
      %v1206 = vpack.c.b16 %v1157, %v1156
      %v1207 = vpack.c.b16 %v1159, %v1158
      %v1208 = vpack.c.b16 %v1161, %v1160
      %v1209 = vpack.c.b16 %v1163, %v1162
      %v1210 = vpack.c.b16 %v1165, %v1164
      %v1211 = vpack.c.b16 %v1167, %v1166
      %v1212 = vpack.c.b16 %v1169, %v1168
      %v1213 = vpack.c.b16 %v1171, %v1170
      %v1214 = vpack.c.b16 %v1173, %v1172
      %v1215 = vpack.c.b16 %v1175, %v1174
      %1256 = vmatprep.subr.bf16.mxu0 0
      %1257 = vmatpush1.bf16.msra.mxu0 %v1183
      %1258 = vmatprep.subr.bf16.mxu0 0
      %1259 = vmatpush1.bf16.msra.mxu0 %v1182
      %1260 = vmatprep.subr.bf16.mxu0 0
      %1261 = vmatpush1.bf16.msra.mxu0 %v1181
      %1262 = vmatprep.subr.bf16.mxu0 0
      %1263 = vmatpush1.bf16.msra.mxu0 %v1180
      %1264 = vmatprep.subr.bf16.mxu0 0
      %1265 = vmatpush1.bf16.msra.mxu0 %v1179
      %1266 = vmatprep.subr.bf16.mxu0 0
      %1267 = vmatpush1.bf16.msra.mxu0 %v1178
      %1268 = vmatprep.subr.bf16.mxu0 0
      %1269 = vmatpush1.bf16.msra.mxu0 %v1177
      %1270 = vmatprep.subr.bf16.mxu0 0
      %1271 = vmatpush1.bf16.msra.mxu0 %v1176
      %1272 = vmatprep.subr.bf16.mxu0 0
      %1273 = vmatpush2.bf16.msra.mxu0 %v1191
      %1274 = vmatprep.subr.bf16.mxu0 0
      %1275 = vmatpush2.bf16.msra.mxu0 %v1190
      %1276 = vmatprep.subr.bf16.mxu0 0
      %1277 = vmatpush2.bf16.msra.mxu0 %v1189
      %1278 = vmatprep.subr.bf16.mxu0 0
      %1279 = vmatpush2.bf16.msra.mxu0 %v1188
      %1280 = vmatprep.subr.bf16.mxu0 0
      %1281 = vmatpush2.bf16.msra.mxu0 %v1187
      %1282 = vmatprep.subr.bf16.mxu0 0
      %1283 = vmatpush2.bf16.msra.mxu0 %v1186
      %1284 = vmatprep.subr.bf16.mxu0 0
      %1285 = vmatpush2.bf16.msra.mxu0 %v1185
      %1286 = vmatprep.subr.bf16.mxu0 0
      %1287 = vmatpush2.bf16.msra.mxu0 %v1184
      %1288 = vmatprep.mubr.bf16.mxu0 %v315
      %1289 = vmatmul.mubr.bf16.gmra.mxu0 %v309
      %v1290 = vpop.f32.mrf.mxu0
      %v1291 = vadd.f32 %v1002, %v1290
      %v1292 = vpop.f32.mrf.mxu0
      %v1293 = vpop.f32.mrf.mxu0
      %v1294 = vadd.f32 %v1005, %v1293
      %v1295 = vpop.f32.mrf.mxu0
      %1296 = vmatprep.mubr.bf16.mxu0 %v316
      %1297 = vmatmul.mubr.bf16.gmra.mxu0 %v310
      %v1298 = vpop.f32.mrf.mxu0
      %v1299 = vadd.f32 %v1010, %v1298
      %v1300 = vpop.f32.mrf.mxu0
      %v1301 = vpop.f32.mrf.mxu0
      %v1302 = vadd.f32 %v1013, %v1301
      %v1303 = vpop.f32.mrf.mxu0
      %1304 = vdwg.mxu0
      %1305 = vmatprep.subr.bf16.mxu0 0
      %1306 = vmatpush1.bf16.msra.mxu0 %v1199
      %1307 = vmatprep.subr.bf16.mxu0 0
      %1308 = vmatpush1.bf16.msra.mxu0 %v1198
      %1309 = vmatprep.subr.bf16.mxu0 0
      %1310 = vmatpush1.bf16.msra.mxu0 %v1197
      %1311 = vmatprep.subr.bf16.mxu0 0
      %1312 = vmatpush1.bf16.msra.mxu0 %v1196
      %1313 = vmatprep.subr.bf16.mxu0 0
      %1314 = vmatpush1.bf16.msra.mxu0 %v1195
      %1315 = vmatprep.subr.bf16.mxu0 0
      %1316 = vmatpush1.bf16.msra.mxu0 %v1194
      %1317 = vmatprep.subr.bf16.mxu0 0
      %1318 = vmatpush1.bf16.msra.mxu0 %v1193
      %1319 = vmatprep.subr.bf16.mxu0 0
      %1320 = vmatpush1.bf16.msra.mxu0 %v1192
      %1321 = vmatprep.subr.bf16.mxu0 0
      %1322 = vmatpush2.bf16.msra.mxu0 %v1207
      %1323 = vmatprep.subr.bf16.mxu0 0
      %1324 = vmatpush2.bf16.msra.mxu0 %v1206
      %1325 = vmatprep.subr.bf16.mxu0 0
      %1326 = vmatpush2.bf16.msra.mxu0 %v1205
      %1327 = vmatprep.subr.bf16.mxu0 0
      %1328 = vmatpush2.bf16.msra.mxu0 %v1204
      %1329 = vmatprep.subr.bf16.mxu0 0
      %1330 = vmatpush2.bf16.msra.mxu0 %v1203
      %1331 = vmatprep.subr.bf16.mxu0 0
      %1332 = vmatpush2.bf16.msra.mxu0 %v1202
      %1333 = vmatprep.subr.bf16.mxu0 0
      %1334 = vmatpush2.bf16.msra.mxu0 %v1201
      %1335 = vmatprep.subr.bf16.mxu0 0
      %1336 = vmatpush2.bf16.msra.mxu0 %v1200
      %1337 = vmatprep.mubr.bf16.mxu0 %v316
      %1338 = vmatmul.mubr.bf16.gmra.mxu0 %v310
      %v1339 = vpop.f32.mrf.mxu0
      %v1340 = vadd.f32 %v1291, %v1339
      %v1341 = vpop.f32.mrf.mxu0
      %v1342 = vpop.f32.mrf.mxu0
      %v1343 = vadd.f32 %v1294, %v1342
      %v1344 = vpop.f32.mrf.mxu0
      %1345 = vmatprep.mubr.bf16.mxu0 %v325
      %1346 = vmatmul.mubr.bf16.gmra.mxu0 %v321
      %v1347 = vpop.f32.mrf.mxu0
      %v1348 = vadd.f32 %v1299, %v1347
      %v1349 = vpop.f32.mrf.mxu0
      %v1350 = vpop.f32.mrf.mxu0
      %v1351 = vadd.f32 %v1302, %v1350
      %v1352 = vpop.f32.mrf.mxu0
      %1353 = vdwg.mxu0
      %1354 = vmatprep.subr.bf16.mxu0 0
      %1355 = vmatpush1.bf16.msra.mxu0 %v1215
      %1356 = vmatprep.subr.bf16.mxu0 0
      %1357 = vmatpush1.bf16.msra.mxu0 %v1214
      %1358 = vmatprep.subr.bf16.mxu0 0
      %1359 = vmatpush1.bf16.msra.mxu0 %v1213
      %1360 = vmatprep.subr.bf16.mxu0 0
      %1361 = vmatpush1.bf16.msra.mxu0 %v1212
      %1362 = vmatprep.subr.bf16.mxu0 0
      %1363 = vmatpush1.bf16.msra.mxu0 %v1211
      %1364 = vmatprep.subr.bf16.mxu0 0
      %1365 = vmatpush1.bf16.msra.mxu0 %v1210
      %1366 = vmatprep.subr.bf16.mxu0 0
      %1367 = vmatpush1.bf16.msra.mxu0 %v1209
      %1368 = vmatprep.subr.bf16.mxu0 0
      %1369 = vmatpush1.bf16.msra.mxu0 %v1208
      %1370 = vmatprep.subr.bf16.mxu0 0
      %1371 = vmatpush2.bf16.msra.mxu0 0
      %1372 = vmatprep.subr.bf16.mxu0 0
      %1373 = vmatpush2.bf16.msra.mxu0 0
      %1374 = vmatprep.subr.bf16.mxu0 0
      %1375 = vmatpush2.bf16.msra.mxu0 0
      %1376 = vmatprep.subr.bf16.mxu0 0
      %1377 = vmatpush2.bf16.msra.mxu0 0
      %1378 = vmatprep.subr.bf16.mxu0 0
      %1379 = vmatpush2.bf16.msra.mxu0 0
      %1380 = vmatprep.subr.bf16.mxu0 0
      %1381 = vmatpush2.bf16.msra.mxu0 0
      %1382 = vmatprep.subr.bf16.mxu0 0
      %1383 = vmatpush2.bf16.msra.mxu0 0
      %1384 = vmatprep.subr.bf16.mxu0 0
      %1385 = vmatpush2.bf16.msra.mxu0 0
      %1386 = vmatprep.mubr.bf16.mxu0 0
      %1387 = vmatmul.mubr.bf16.gmra.mxu0 %v321
      %v1388 = vpop.f32.mrf.mxu0
      %v1389 = vadd.f32 %v1340, %v1388
      %v1390 = vpop.f32.mrf.mxu0
      %v1391 = vpop.f32.mrf.mxu0
      %v1392 = vadd.f32 %v1343, %v1391
      %v1393 = vpop.f32.mrf.mxu0
      %1394 = vmatprep.mubr.bf16.mxu0 0
      %1395 = vmatmul.mubr.bf16.gmra.mxu0 %v329
      %v1396 = vpop.f32.mrf.mxu0
      %v1397 = vadd.f32 %v1348, %v1396
      %v1398 = vpop.f32.mrf.mxu0
      %v1399 = vpop.f32.mrf.mxu0
      %v1400 = vadd.f32 %v1351, %v1399
      %v1401 = vpop.f32.mrf.mxu0
      %1402 = vdwg.mxu0
      %vm1411 = vcmask 1042432
      %vm1412 = vcmask 1046532
      %vm1413 = vmor %vm1411, %vm1412
      %v1414 = vrot.slane %v285, 5
      %v1415 = vrot.slane %v1414, 4
      %v1416 = vrot.slane %v286, 5
      %v1417 = vsel %vm1413, %v1415, %v1416
      %v1418 = vrot.slane %v287, 5
      %v1419 = vrot.slane %v1418, 4
      %v1420 = vrot.slane %v288, 5
      %v1421 = vsel %vm1413, %v1419, %v1420
      %v1422 = vrot.slane %v289, 5
      %v1423 = vrot.slane %v1422, 4
      %v1424 = vrot.slane %v290, 5
      %v1425 = vsel %vm1413, %v1423, %v1424
      %v1426 = vrot.slane %v291, 5
      %v1427 = vrot.slane %v1426, 4
      %v1428 = vrot.slane %v292, 5
      %v1429 = vsel %vm1413, %v1427, %v1428
      %v1430 = vrot.slane %v293, 5
      %v1431 = vrot.slane %v1430, 4
      %v1432 = vrot.slane %v294, 5
      %v1433 = vsel %vm1413, %v1431, %v1432
      %v1434 = vrot.slane %v295, 5
      %v1435 = vrot.slane %v1434, 4
      %v1436 = vrot.slane %v296, 5
      %v1437 = vsel %vm1413, %v1435, %v1436
      %v1438 = vrot.slane %v297, 5
      %v1439 = vrot.slane %v1438, 4
      %v1440 = vrot.slane %v298, 5
      %v1441 = vsel %vm1413, %v1439, %v1440
      %v1442 = vrot.slane %v299, 5
      %v1443 = vrot.slane %v1442, 4
      %v1444 = vrot.slane %v300, 5
      %v1445 = vsel %vm1413, %v1443, %v1444
      %v1446 = vunpack.c.l.b16 %v1417
      %v1447 = vunpack.c.l.b16 %v1421
      %v1448 = vunpack.c.l.b16 %v1425
      %v1449 = vunpack.c.l.b16 %v1429
      %v1450 = vpack.c.b16 %v1447, %v1446
      %v1451 = vpack.c.b16 %v1449, %v1448
      %v1454 = vunpack.c.l.b16 %v1433
      %v1455 = vpack.c.b16 %v1448, %v1447
      %v1456 = vpack.c.b16 %v1454, %v1449
      %v1459 = vunpack.c.l.b16 %v1437
      %v1460 = vpack.c.b16 %v1459, %v1454
      %v1462 = vunpack.c.l.b16 %v1441
      %v1463 = vpack.c.b16 %v1462, %v1459
      %v1465 = vunpack.c.l.b16 %v1445
      %v1466 = vpack.c.b16 %v1465, %v1462
      %s1468 = scalar_lea.vmem %s1, 640
      %v1469 = vld [vmem:[%s1468] sm:$0xf]
      %v1470 = vld [vmem:[%s1468 + $0x4] sm:$0xf]
      %v1471 = vld [vmem:[%s1468 + $0x8] sm:$0xf]
      %v1472 = vld [vmem:[%s1468 + $0xc] sm:$0xf]
      %v1473 = vld [vmem:[%s1468 + $0x10] sm:$0xf]
      %v1474 = vld [vmem:[%s1468 + $0x14] sm:$0xf]
      %v1475 = vld [vmem:[%s1468 + $0x18] sm:$0xf]
      %v1476 = vld [vmem:[%s1468 + $0x1c] sm:$0xf]
      %v1477 = vld [vmem:[%s1468 + $0x20] sm:$0xf]
      %v1478 = vld [vmem:[%s1468 + $0x24] sm:$0xf]
      %v1479 = vld [vmem:[%s1468 + $0x28] sm:$0xf]
      %v1480 = vld [vmem:[%s1468 + $0x2c] sm:$0xf]
      %v1481 = vld [vmem:[%s1468 + $0x30] sm:$0xf]
      %v1482 = vld [vmem:[%s1468 + $0x34] sm:$0xf]
      %v1483 = vld [vmem:[%s1468 + $0x38] sm:$0xf]
      %v1484 = vld [vmem:[%s1468 + $0x3c] sm:$0xf]
      %v1485 = vld [vmem:[%s1468 + $0x40] sm:$0xf]
      %v1486 = vld [vmem:[%s1468 + $0x44] sm:$0xf]
      %v1487 = vld [vmem:[%s1468 + $0x48] sm:$0xf]
      %v1488 = vld [vmem:[%s1468 + $0x4c] sm:$0xf]
      %v1489 = vld [vmem:[%s1468 + $0x50] sm:$0xf]
      %v1490 = vld [vmem:[%s1468 + $0x54] sm:$0xf]
      %v1491 = vld [vmem:[%s1468 + $0x58] sm:$0xf]
      %v1492 = vld [vmem:[%s1468 + $0x5c] sm:$0xf]
      %v1493 = vld [vmem:[%s1468 + $0x60] sm:$0xf]
      %v1494 = vld [vmem:[%s1468 + $0x64] sm:$0xf]
      %v1495 = vld [vmem:[%s1468 + $0x68] sm:$0xf]
      %v1496 = vld [vmem:[%s1468 + $0x6c] sm:$0xf]
      %v1497 = vld [vmem:[%s1468 + $0x70] sm:$0xf]
      %v1498 = vld [vmem:[%s1468 + $0x74] sm:$0xf]
      %v1499 = vld [vmem:[%s1468 + $0x78] sm:$0xf]
      %v1500 = vld [vmem:[%s1468 + $0x7c] sm:$0xf]
      %v1501 = vld [vmem:[%s1468 + $0x80] sm:$0xf]
      %v1502 = vld [vmem:[%s1468 + $0x84] sm:$0xf]
      %v1503 = vld [vmem:[%s1468 + $0x88] sm:$0xf]
      %v1504 = vld [vmem:[%s1468 + $0x8c] sm:$0xf]
      %v1505 = vld [vmem:[%s1468 + $0x90] sm:$0xf]
      %v1506 = vld [vmem:[%s1468 + $0x94] sm:$0xf]
      %v1507 = vld [vmem:[%s1468 + $0x98] sm:$0xf]
      %v1508 = vld [vmem:[%s1468 + $0x9c] sm:$0xf]
      %v1509 = vld [vmem:[%s1468 + $0xa0] sm:$0xf]
      %v1510 = vld [vmem:[%s1468 + $0xa4] sm:$0xf]
      %v1511 = vld [vmem:[%s1468 + $0xa8] sm:$0xf]
      %v1512 = vld [vmem:[%s1468 + $0xac] sm:$0xf]
      %v1513 = vld [vmem:[%s1468 + $0xb0] sm:$0xf]
      %v1514 = vld [vmem:[%s1468 + $0xb4] sm:$0xf]
      %v1515 = vld [vmem:[%s1468 + $0xb8] sm:$0xf]
      %v1516 = vld [vmem:[%s1468 + $0xbc] sm:$0xf]
      %v1517 = vld [vmem:[%s1468 + $0xc0] sm:$0xf]
      %v1518 = vld [vmem:[%s1468 + $0xc4] sm:$0xf]
      %v1519 = vld [vmem:[%s1468 + $0xc8] sm:$0xf]
      %v1520 = vld [vmem:[%s1468 + $0xcc] sm:$0xf]
      %v1521 = vld [vmem:[%s1468 + $0xd0] sm:$0xf]
      %v1522 = vld [vmem:[%s1468 + $0xd4] sm:$0xf]
      %v1523 = vld [vmem:[%s1468 + $0xd8] sm:$0xf]
      %v1524 = vld [vmem:[%s1468 + $0xdc] sm:$0xf]
      %v1525 = vld [vmem:[%s1468 + $0xe0] sm:$0xf]
      %v1526 = vld [vmem:[%s1468 + $0xe4] sm:$0xf]
      %v1527 = vld [vmem:[%s1468 + $0xe8] sm:$0xf]
      %v1528 = vld [vmem:[%s1468 + $0xec] sm:$0xf]
      %v1529 = vld [vmem:[%s1468 + $0xf0] sm:$0xf]
      %v1530 = vld [vmem:[%s1468 + $0xf4] sm:$0xf]
      %v1531 = vld [vmem:[%s1468 + $0xf8] sm:$0xf]
      %v1532 = vld [vmem:[%s1468 + $0xfc] sm:$0xf]
      %v1533 = vld [vmem:[%s1468 + $0x100] sm:$0xf]
      %v1534 = vld [vmem:[%s1468 + $0x104] sm:$0xf]
      %v1535 = vld [vmem:[%s1468 + $0x108] sm:$0xf]
      %v1536 = vld [vmem:[%s1468 + $0x10c] sm:$0xf]
      %v1537 = vld [vmem:[%s1468 + $0x110] sm:$0xf]
      %v1538 = vld [vmem:[%s1468 + $0x114] sm:$0xf]
      %v1539 = vld [vmem:[%s1468 + $0x118] sm:$0xf]
      %v1540 = vld [vmem:[%s1468 + $0x11c] sm:$0xf]
      %v1541 = vld [vmem:[%s1468 + $0x120] sm:$0xf]
      %v1542 = vld [vmem:[%s1468 + $0x124] sm:$0xf]
      %v1543 = vld [vmem:[%s1468 + $0x128] sm:$0xf]
      %v1544 = vld [vmem:[%s1468 + $0x12c] sm:$0xf]
      %v1545 = vld [vmem:[%s1468 + $0x130] sm:$0xf]
      %v1546 = vld [vmem:[%s1468 + $0x134] sm:$0xf]
      %v1547 = vld [vmem:[%s1468 + $0x138] sm:$0xf]
      %v1548 = vld [vmem:[%s1468 + $0x13c] sm:$0xf]
      %v1629 = vunpack.c.l.b16 %v1469
      %v1630 = vunpack.c.l.b16 %v1470
      %v1631 = vunpack.c.l.b16 %v1471
      %v1632 = vunpack.c.l.b16 %v1472
      %v1633 = vunpack.c.l.b16 %v1473
      %v1634 = vunpack.c.l.b16 %v1474
      %v1635 = vunpack.c.l.b16 %v1475
      %v1636 = vunpack.c.l.b16 %v1476
      %v1637 = vunpack.c.l.b16 %v1477
      %v1638 = vunpack.c.l.b16 %v1478
      %v1639 = vunpack.c.l.b16 %v1479
      %v1640 = vunpack.c.l.b16 %v1480
      %v1641 = vunpack.c.l.b16 %v1481
      %v1642 = vunpack.c.l.b16 %v1482
      %v1643 = vunpack.c.l.b16 %v1483
      %v1644 = vunpack.c.l.b16 %v1484
      %v1645 = vunpack.c.l.b16 %v1485
      %v1646 = vunpack.c.l.b16 %v1486
      %v1647 = vunpack.c.l.b16 %v1487
      %v1648 = vunpack.c.l.b16 %v1488
      %v1649 = vunpack.c.l.b16 %v1489
      %v1650 = vunpack.c.l.b16 %v1490
      %v1651 = vunpack.c.l.b16 %v1491
      %v1652 = vunpack.c.l.b16 %v1492
      %v1653 = vunpack.c.l.b16 %v1493
      %v1654 = vunpack.c.l.b16 %v1494
      %v1655 = vunpack.c.l.b16 %v1495
      %v1656 = vunpack.c.l.b16 %v1496
      %v1657 = vunpack.c.l.b16 %v1497
      %v1658 = vunpack.c.l.b16 %v1498
      %v1659 = vunpack.c.l.b16 %v1499
      %v1660 = vunpack.c.l.b16 %v1500
      %v1661 = vunpack.c.l.b16 %v1501
      %v1662 = vunpack.c.l.b16 %v1502
      %v1663 = vunpack.c.l.b16 %v1503
      %v1664 = vunpack.c.l.b16 %v1504
      %v1665 = vunpack.c.l.b16 %v1505
      %v1666 = vunpack.c.l.b16 %v1506
      %v1667 = vunpack.c.l.b16 %v1507
      %v1668 = vunpack.c.l.b16 %v1508
      %v1669 = vunpack.c.l.b16 %v1509
      %v1670 = vunpack.c.l.b16 %v1510
      %v1671 = vunpack.c.l.b16 %v1511
      %v1672 = vunpack.c.l.b16 %v1512
      %v1673 = vunpack.c.l.b16 %v1513
      %v1674 = vunpack.c.l.b16 %v1514
      %v1675 = vunpack.c.l.b16 %v1515
      %v1676 = vunpack.c.l.b16 %v1516
      %v1677 = vunpack.c.l.b16 %v1517
      %v1678 = vunpack.c.l.b16 %v1518
      %v1679 = vunpack.c.l.b16 %v1519
      %v1680 = vunpack.c.l.b16 %v1520
      %v1681 = vunpack.c.l.b16 %v1521
      %v1682 = vunpack.c.l.b16 %v1522
      %v1683 = vunpack.c.l.b16 %v1523
      %v1684 = vunpack.c.l.b16 %v1524
      %v1685 = vunpack.c.l.b16 %v1525
      %v1686 = vunpack.c.l.b16 %v1526
      %v1687 = vunpack.c.l.b16 %v1527
      %v1688 = vunpack.c.l.b16 %v1528
      %v1689 = vunpack.c.l.b16 %v1529
      %v1690 = vunpack.c.l.b16 %v1530
      %v1691 = vunpack.c.l.b16 %v1531
      %v1692 = vunpack.c.l.b16 %v1532
      %v1693 = vunpack.c.l.b16 %v1533
      %v1694 = vunpack.c.l.b16 %v1534
      %v1695 = vunpack.c.l.b16 %v1535
      %v1696 = vunpack.c.l.b16 %v1536
      %v1697 = vunpack.c.l.b16 %v1537
      %v1698 = vunpack.c.l.b16 %v1538
      %v1699 = vunpack.c.l.b16 %v1539
      %v1700 = vunpack.c.l.b16 %v1540
      %v1701 = vunpack.c.l.b16 %v1541
      %v1702 = vunpack.c.l.b16 %v1542
      %v1703 = vunpack.c.l.b16 %v1543
      %v1704 = vunpack.c.l.b16 %v1544
      %v1705 = vunpack.c.l.b16 %v1545
      %v1706 = vunpack.c.l.b16 %v1546
      %v1707 = vunpack.c.l.b16 %v1547
      %v1708 = vunpack.c.l.b16 %v1548
      %v1709 = vpack.c.b16 %v1630, %v1629
      %v1710 = vpack.c.b16 %v1632, %v1631
      %v1711 = vpack.c.b16 %v1634, %v1633
      %v1712 = vpack.c.b16 %v1636, %v1635
      %v1713 = vpack.c.b16 %v1638, %v1637
      %v1714 = vpack.c.b16 %v1640, %v1639
      %v1715 = vpack.c.b16 %v1642, %v1641
      %v1716 = vpack.c.b16 %v1644, %v1643
      %v1717 = vpack.c.b16 %v1646, %v1645
      %v1718 = vpack.c.b16 %v1648, %v1647
      %v1719 = vpack.c.b16 %v1650, %v1649
      %v1720 = vpack.c.b16 %v1652, %v1651
      %v1721 = vpack.c.b16 %v1654, %v1653
      %v1722 = vpack.c.b16 %v1656, %v1655
      %v1723 = vpack.c.b16 %v1658, %v1657
      %v1724 = vpack.c.b16 %v1660, %v1659
      %v1725 = vpack.c.b16 %v1662, %v1661
      %v1726 = vpack.c.b16 %v1664, %v1663
      %v1727 = vpack.c.b16 %v1666, %v1665
      %v1728 = vpack.c.b16 %v1668, %v1667
      %v1729 = vpack.c.b16 %v1670, %v1669
      %v1730 = vpack.c.b16 %v1672, %v1671
      %v1731 = vpack.c.b16 %v1674, %v1673
      %v1732 = vpack.c.b16 %v1676, %v1675
      %v1733 = vpack.c.b16 %v1678, %v1677
      %v1734 = vpack.c.b16 %v1680, %v1679
      %v1735 = vpack.c.b16 %v1682, %v1681
      %v1736 = vpack.c.b16 %v1684, %v1683
      %v1737 = vpack.c.b16 %v1686, %v1685
      %v1738 = vpack.c.b16 %v1688, %v1687
      %v1739 = vpack.c.b16 %v1690, %v1689
      %v1740 = vpack.c.b16 %v1692, %v1691
      %v1741 = vpack.c.b16 %v1694, %v1693
      %v1742 = vpack.c.b16 %v1696, %v1695
      %v1743 = vpack.c.b16 %v1698, %v1697
      %v1744 = vpack.c.b16 %v1700, %v1699
      %v1745 = vpack.c.b16 %v1702, %v1701
      %v1746 = vpack.c.b16 %v1704, %v1703
      %v1747 = vpack.c.b16 %v1706, %v1705
      %v1748 = vpack.c.b16 %v1708, %v1707
      %1789 = vmatprep.subr.bf16.mxu0 0
      %1790 = vmatpush1.bf16.msra.mxu0 %v1716
      %1791 = vmatprep.subr.bf16.mxu0 0
      %1792 = vmatpush1.bf16.msra.mxu0 %v1715
      %1793 = vmatprep.subr.bf16.mxu0 0
      %1794 = vmatpush1.bf16.msra.mxu0 %v1714
      %1795 = vmatprep.subr.bf16.mxu0 0
      %1796 = vmatpush1.bf16.msra.mxu0 %v1713
      %1797 = vmatprep.subr.bf16.mxu0 0
      %1798 = vmatpush1.bf16.msra.mxu0 %v1712
      %1799 = vmatprep.subr.bf16.mxu0 0
      %1800 = vmatpush1.bf16.msra.mxu0 %v1711
      %1801 = vmatprep.subr.bf16.mxu0 0
      %1802 = vmatpush1.bf16.msra.mxu0 %v1710
      %1803 = vmatprep.subr.bf16.mxu0 0
      %1804 = vmatpush1.bf16.msra.mxu0 %v1709
      %1805 = vmatprep.subr.bf16.mxu0 0
      %1806 = vmatpush2.bf16.msra.mxu0 %v1724
      %1807 = vmatprep.subr.bf16.mxu0 0
      %1808 = vmatpush2.bf16.msra.mxu0 %v1723
      %1809 = vmatprep.subr.bf16.mxu0 0
      %1810 = vmatpush2.bf16.msra.mxu0 %v1722
      %1811 = vmatprep.subr.bf16.mxu0 0
      %1812 = vmatpush2.bf16.msra.mxu0 %v1721
      %1813 = vmatprep.subr.bf16.mxu0 0
      %1814 = vmatpush2.bf16.msra.mxu0 %v1720
      %1815 = vmatprep.subr.bf16.mxu0 0
      %1816 = vmatpush2.bf16.msra.mxu0 %v1719
      %1817 = vmatprep.subr.bf16.mxu0 0
      %1818 = vmatpush2.bf16.msra.mxu0 %v1718
      %1819 = vmatprep.subr.bf16.mxu0 0
      %1820 = vmatpush2.bf16.msra.mxu0 %v1717
      %1821 = vmatprep.mubr.bf16.mxu0 %v1455
      %1822 = vmatmul.mubr.bf16.gmra.mxu0 %v1450
      %v1823 = vpop.f32.mrf.mxu0
      %v1824 = vadd.f32 0.0, %v1823
      %v1825 = vpop.f32.mrf.mxu0
      %v1826 = vpop.f32.mrf.mxu0
      %v1827 = vadd.f32 0.0, %v1826
      %v1828 = vpop.f32.mrf.mxu0
      %1829 = vmatprep.mubr.bf16.mxu0 %v1456
      %1830 = vmatmul.mubr.bf16.gmra.mxu0 %v1451
      %v1831 = vpop.f32.mrf.mxu0
      %v1832 = vadd.f32 0.0, %v1831
      %v1833 = vpop.f32.mrf.mxu0
      %v1834 = vpop.f32.mrf.mxu0
      %v1835 = vadd.f32 0.0, %v1834
      %v1836 = vpop.f32.mrf.mxu0
      %1837 = vdwg.mxu0
      %1838 = vmatprep.subr.bf16.mxu0 0
      %1839 = vmatpush1.bf16.msra.mxu0 %v1732
      %1840 = vmatprep.subr.bf16.mxu0 0
      %1841 = vmatpush1.bf16.msra.mxu0 %v1731
      %1842 = vmatprep.subr.bf16.mxu0 0
      %1843 = vmatpush1.bf16.msra.mxu0 %v1730
      %1844 = vmatprep.subr.bf16.mxu0 0
      %1845 = vmatpush1.bf16.msra.mxu0 %v1729
      %1846 = vmatprep.subr.bf16.mxu0 0
      %1847 = vmatpush1.bf16.msra.mxu0 %v1728
      %1848 = vmatprep.subr.bf16.mxu0 0
      %1849 = vmatpush1.bf16.msra.mxu0 %v1727
      %1850 = vmatprep.subr.bf16.mxu0 0
      %1851 = vmatpush1.bf16.msra.mxu0 %v1726
      %1852 = vmatprep.subr.bf16.mxu0 0
      %1853 = vmatpush1.bf16.msra.mxu0 %v1725
      %1854 = vmatprep.subr.bf16.mxu0 0
      %1855 = vmatpush2.bf16.msra.mxu0 %v1740
      %1856 = vmatprep.subr.bf16.mxu0 0
      %1857 = vmatpush2.bf16.msra.mxu0 %v1739
      %1858 = vmatprep.subr.bf16.mxu0 0
      %1859 = vmatpush2.bf16.msra.mxu0 %v1738
      %1860 = vmatprep.subr.bf16.mxu0 0
      %1861 = vmatpush2.bf16.msra.mxu0 %v1737
      %1862 = vmatprep.subr.bf16.mxu0 0
      %1863 = vmatpush2.bf16.msra.mxu0 %v1736
      %1864 = vmatprep.subr.bf16.mxu0 0
      %1865 = vmatpush2.bf16.msra.mxu0 %v1735
      %1866 = vmatprep.subr.bf16.mxu0 0
      %1867 = vmatpush2.bf16.msra.mxu0 %v1734
      %1868 = vmatprep.subr.bf16.mxu0 0
      %1869 = vmatpush2.bf16.msra.mxu0 %v1733
      %1870 = vmatprep.mubr.bf16.mxu0 %v1456
      %1871 = vmatmul.mubr.bf16.gmra.mxu0 %v1451
      %v1872 = vpop.f32.mrf.mxu0
      %v1873 = vadd.f32 %v1824, %v1872
      %v1874 = vpop.f32.mrf.mxu0
      %v1875 = vpop.f32.mrf.mxu0
      %v1876 = vadd.f32 %v1827, %v1875
      %v1877 = vpop.f32.mrf.mxu0
      %1878 = vmatprep.mubr.bf16.mxu0 %v1463
      %1879 = vmatmul.mubr.bf16.gmra.mxu0 %v1460
      %v1880 = vpop.f32.mrf.mxu0
      %v1881 = vadd.f32 %v1832, %v1880
      %v1882 = vpop.f32.mrf.mxu0
      %v1883 = vpop.f32.mrf.mxu0
      %v1884 = vadd.f32 %v1835, %v1883
      %v1885 = vpop.f32.mrf.mxu0
      %1886 = vdwg.mxu0
      %1887 = vmatprep.subr.bf16.mxu0 0
      %1888 = vmatpush1.bf16.msra.mxu0 %v1748
      %1889 = vmatprep.subr.bf16.mxu0 0
      %1890 = vmatpush1.bf16.msra.mxu0 %v1747
      %1891 = vmatprep.subr.bf16.mxu0 0
      %1892 = vmatpush1.bf16.msra.mxu0 %v1746
      %1893 = vmatprep.subr.bf16.mxu0 0
      %1894 = vmatpush1.bf16.msra.mxu0 %v1745
      %1895 = vmatprep.subr.bf16.mxu0 0
      %1896 = vmatpush1.bf16.msra.mxu0 %v1744
      %1897 = vmatprep.subr.bf16.mxu0 0
      %1898 = vmatpush1.bf16.msra.mxu0 %v1743
      %1899 = vmatprep.subr.bf16.mxu0 0
      %1900 = vmatpush1.bf16.msra.mxu0 %v1742
      %1901 = vmatprep.subr.bf16.mxu0 0
      %1902 = vmatpush1.bf16.msra.mxu0 %v1741
      %1903 = vmatprep.subr.bf16.mxu0 0
      %1904 = vmatpush2.bf16.msra.mxu0 0
      %1905 = vmatprep.subr.bf16.mxu0 0
      %1906 = vmatpush2.bf16.msra.mxu0 0
      %1907 = vmatprep.subr.bf16.mxu0 0
      %1908 = vmatpush2.bf16.msra.mxu0 0
      %1909 = vmatprep.subr.bf16.mxu0 0
      %1910 = vmatpush2.bf16.msra.mxu0 0
      %1911 = vmatprep.subr.bf16.mxu0 0
      %1912 = vmatpush2.bf16.msra.mxu0 0
      %1913 = vmatprep.subr.bf16.mxu0 0
      %1914 = vmatpush2.bf16.msra.mxu0 0
      %1915 = vmatprep.subr.bf16.mxu0 0
      %1916 = vmatpush2.bf16.msra.mxu0 0
      %1917 = vmatprep.subr.bf16.mxu0 0
      %1918 = vmatpush2.bf16.msra.mxu0 0
      %1919 = vmatprep.mubr.bf16.mxu0 0
      %1920 = vmatmul.mubr.bf16.gmra.mxu0 %v1460
      %v1921 = vpop.f32.mrf.mxu0
      %v1922 = vadd.f32 %v1873, %v1921
      %v1923 = vpop.f32.mrf.mxu0
      %v1924 = vpop.f32.mrf.mxu0
      %v1925 = vadd.f32 %v1876, %v1924
      %v1926 = vpop.f32.mrf.mxu0
      %1927 = vmatprep.mubr.bf16.mxu0 0
      %1928 = vmatmul.mubr.bf16.gmra.mxu0 %v1466
      %v1929 = vpop.f32.mrf.mxu0
      %v1930 = vadd.f32 %v1881, %v1929
      %v1931 = vpop.f32.mrf.mxu0
      %v1932 = vpop.f32.mrf.mxu0
      %v1933 = vadd.f32 %v1884, %v1932
      %v1934 = vpop.f32.mrf.mxu0
      %1935 = vdwg.mxu0
      %v1936 = vadd.f32 %v1389, %v1922
      %v1937 = vadd.f32 %v1392, %v1925
      %v1938 = vadd.f32 %v1397, %v1930
      %v1939 = vadd.f32 %v1400, %v1933
      %vm1940 = vsmask.f32 2304
      %vm1941 = vsmask.f32 6416
      %vm1942 = vmor %vm1940, %vm1941
      %v1943 = vrot.slane %v415, 5
      %v1944 = vrot.slane %v418, 6
      %v1945 = vor.u32 %v1943, %v1944
      %v1946 = vrot.slane %v1945, 4
      %v1947 = vshrl.u32 %v286, 16
      %v1949 = vrot.slane %v1947, 5
      %v1950 = vrot.slane %v424, 6
      %v1951 = vor.u32 %v1949, %v1950
      %v1952 = vsel %vm1942, %v1946, %v1951
      %v1953 = vrot.slane %v429, 5
      %v1954 = vrot.slane %v432, 6
      %v1955 = vor.u32 %v1953, %v1954
      %v1956 = vrot.slane %v1955, 4
      %v1957 = vshrl.u32 %v288, 16
      %v1959 = vrot.slane %v1957, 5
      %v1960 = vrot.slane %v438, 6
      %v1961 = vor.u32 %v1959, %v1960
      %v1962 = vsel %vm1942, %v1956, %v1961
      %v1963 = vrot.slane %v443, 5
      %v1964 = vrot.slane %v446, 6
      %v1965 = vor.u32 %v1963, %v1964
      %v1966 = vrot.slane %v1965, 4
      %v1967 = vshrl.u32 %v290, 16
      %v1969 = vrot.slane %v1967, 5
      %v1970 = vrot.slane %v452, 6
      %v1971 = vor.u32 %v1969, %v1970
      %v1972 = vsel %vm1942, %v1966, %v1971
      %v1973 = vrot.slane %v457, 5
      %v1974 = vrot.slane %v460, 6
      %v1975 = vor.u32 %v1973, %v1974
      %v1976 = vrot.slane %v1975, 4
      %v1977 = vshrl.u32 %v292, 16
      %v1979 = vrot.slane %v1977, 5
      %v1980 = vrot.slane %v466, 6
      %v1981 = vor.u32 %v1979, %v1980
      %v1982 = vsel %vm1942, %v1976, %v1981
      %v1983 = vrot.slane %v471, 5
      %v1984 = vrot.slane %v474, 6
      %v1985 = vor.u32 %v1983, %v1984
      %v1986 = vrot.slane %v1985, 4
      %v1987 = vshrl.u32 %v294, 16
      %v1989 = vrot.slane %v1987, 5
      %v1990 = vrot.slane %v480, 6
      %v1991 = vor.u32 %v1989, %v1990
      %v1992 = vsel %vm1942, %v1986, %v1991
      %v1993 = vrot.slane %v485, 5
      %v1994 = vrot.slane %v488, 6
      %v1995 = vor.u32 %v1993, %v1994
      %v1996 = vrot.slane %v1995, 4
      %v1997 = vshrl.u32 %v296, 16
      %v1999 = vrot.slane %v1997, 5
      %v2000 = vrot.slane %v494, 6
      %v2001 = vor.u32 %v1999, %v2000
      %v2002 = vsel %vm1942, %v1996, %v2001
      %v2003 = vrot.slane %v499, 5
      %v2004 = vrot.slane %v502, 6
      %v2005 = vor.u32 %v2003, %v2004
      %v2006 = vrot.slane %v2005, 4
      %v2007 = vshrl.u32 %v298, 16
      %v2009 = vrot.slane %v2007, 5
      %v2010 = vrot.slane %v508, 6
      %v2011 = vor.u32 %v2009, %v2010
      %v2012 = vsel %vm1942, %v2006, %v2011
      %v2013 = vrot.slane %v513, 5
      %v2014 = vrot.slane %v516, 6
      %v2015 = vor.u32 %v2013, %v2014
      %v2016 = vrot.slane %v2015, 4
      %v2017 = vshrl.u32 %v300, 16
      %v2019 = vrot.slane %v2017, 5
      %v2020 = vrot.slane %v522, 6
      %v2021 = vor.u32 %v2019, %v2020
      %v2022 = vsel %vm1942, %v2016, %v2021
      %v2023 = vunpack.c.l.b16 %v1952
      %v2024 = vunpack.c.l.b16 %v1962
      %v2025 = vunpack.c.l.b16 %v1972
      %v2026 = vunpack.c.l.b16 %v1982
      %v2027 = vpack.c.b16 %v2024, %v2023
      %v2028 = vpack.c.b16 %v2026, %v2025
      %v2031 = vunpack.c.l.b16 %v1992
      %v2032 = vpack.c.b16 %v2025, %v2024
      %v2033 = vpack.c.b16 %v2031, %v2026
      %v2036 = vunpack.c.l.b16 %v2002
      %v2037 = vpack.c.b16 %v2036, %v2031
      %v2039 = vunpack.c.l.b16 %v2012
      %v2040 = vpack.c.b16 %v2039, %v2036
      %v2042 = vunpack.c.l.b16 %v2022
      %v2043 = vpack.c.b16 %v2042, %v2039
      %s2045 = scalar_lea.vmem %s1, 960
      %v2046 = vld [vmem:[%s2045] sm:$0xf]
      %v2047 = vld [vmem:[%s2045 + $0x4] sm:$0xf]
      %v2048 = vld [vmem:[%s2045 + $0x8] sm:$0xf]
      %v2049 = vld [vmem:[%s2045 + $0xc] sm:$0xf]
      %v2050 = vld [vmem:[%s2045 + $0x10] sm:$0xf]
      %v2051 = vld [vmem:[%s2045 + $0x14] sm:$0xf]
      %v2052 = vld [vmem:[%s2045 + $0x18] sm:$0xf]
      %v2053 = vld [vmem:[%s2045 + $0x1c] sm:$0xf]
      %v2054 = vld [vmem:[%s2045 + $0x20] sm:$0xf]
      %v2055 = vld [vmem:[%s2045 + $0x24] sm:$0xf]
      %v2056 = vld [vmem:[%s2045 + $0x28] sm:$0xf]
      %v2057 = vld [vmem:[%s2045 + $0x2c] sm:$0xf]
      %v2058 = vld [vmem:[%s2045 + $0x30] sm:$0xf]
      %v2059 = vld [vmem:[%s2045 + $0x34] sm:$0xf]
      %v2060 = vld [vmem:[%s2045 + $0x38] sm:$0xf]
      %v2061 = vld [vmem:[%s2045 + $0x3c] sm:$0xf]
      %v2062 = vld [vmem:[%s2045 + $0x40] sm:$0xf]
      %v2063 = vld [vmem:[%s2045 + $0x44] sm:$0xf]
      %v2064 = vld [vmem:[%s2045 + $0x48] sm:$0xf]
      %v2065 = vld [vmem:[%s2045 + $0x4c] sm:$0xf]
      %v2066 = vld [vmem:[%s2045 + $0x50] sm:$0xf]
      %v2067 = vld [vmem:[%s2045 + $0x54] sm:$0xf]
      %v2068 = vld [vmem:[%s2045 + $0x58] sm:$0xf]
      %v2069 = vld [vmem:[%s2045 + $0x5c] sm:$0xf]
      %v2070 = vld [vmem:[%s2045 + $0x60] sm:$0xf]
      %v2071 = vld [vmem:[%s2045 + $0x64] sm:$0xf]
      %v2072 = vld [vmem:[%s2045 + $0x68] sm:$0xf]
      %v2073 = vld [vmem:[%s2045 + $0x6c] sm:$0xf]
      %v2074 = vld [vmem:[%s2045 + $0x70] sm:$0xf]
      %v2075 = vld [vmem:[%s2045 + $0x74] sm:$0xf]
      %v2076 = vld [vmem:[%s2045 + $0x78] sm:$0xf]
      %v2077 = vld [vmem:[%s2045 + $0x7c] sm:$0xf]
      %v2078 = vld [vmem:[%s2045 + $0x80] sm:$0xf]
      %v2079 = vld [vmem:[%s2045 + $0x84] sm:$0xf]
      %v2080 = vld [vmem:[%s2045 + $0x88] sm:$0xf]
      %v2081 = vld [vmem:[%s2045 + $0x8c] sm:$0xf]
      %v2082 = vld [vmem:[%s2045 + $0x90] sm:$0xf]
      %v2083 = vld [vmem:[%s2045 + $0x94] sm:$0xf]
      %v2084 = vld [vmem:[%s2045 + $0x98] sm:$0xf]
      %v2085 = vld [vmem:[%s2045 + $0x9c] sm:$0xf]
      %v2086 = vld [vmem:[%s2045 + $0xa0] sm:$0xf]
      %v2087 = vld [vmem:[%s2045 + $0xa4] sm:$0xf]
      %v2088 = vld [vmem:[%s2045 + $0xa8] sm:$0xf]
      %v2089 = vld [vmem:[%s2045 + $0xac] sm:$0xf]
      %v2090 = vld [vmem:[%s2045 + $0xb0] sm:$0xf]
      %v2091 = vld [vmem:[%s2045 + $0xb4] sm:$0xf]
      %v2092 = vld [vmem:[%s2045 + $0xb8] sm:$0xf]
      %v2093 = vld [vmem:[%s2045 + $0xbc] sm:$0xf]
      %v2094 = vld [vmem:[%s2045 + $0xc0] sm:$0xf]
      %v2095 = vld [vmem:[%s2045 + $0xc4] sm:$0xf]
      %v2096 = vld [vmem:[%s2045 + $0xc8] sm:$0xf]
      %v2097 = vld [vmem:[%s2045 + $0xcc] sm:$0xf]
      %v2098 = vld [vmem:[%s2045 + $0xd0] sm:$0xf]
      %v2099 = vld [vmem:[%s2045 + $0xd4] sm:$0xf]
      %v2100 = vld [vmem:[%s2045 + $0xd8] sm:$0xf]
      %v2101 = vld [vmem:[%s2045 + $0xdc] sm:$0xf]
      %v2102 = vld [vmem:[%s2045 + $0xe0] sm:$0xf]
      %v2103 = vld [vmem:[%s2045 + $0xe4] sm:$0xf]
      %v2104 = vld [vmem:[%s2045 + $0xe8] sm:$0xf]
      %v2105 = vld [vmem:[%s2045 + $0xec] sm:$0xf]
      %v2106 = vld [vmem:[%s2045 + $0xf0] sm:$0xf]
      %v2107 = vld [vmem:[%s2045 + $0xf4] sm:$0xf]
      %v2108 = vld [vmem:[%s2045 + $0xf8] sm:$0xf]
      %v2109 = vld [vmem:[%s2045 + $0xfc] sm:$0xf]
      %v2110 = vld [vmem:[%s2045 + $0x100] sm:$0xf]
      %v2111 = vld [vmem:[%s2045 + $0x104] sm:$0xf]
      %v2112 = vld [vmem:[%s2045 + $0x108] sm:$0xf]
      %v2113 = vld [vmem:[%s2045 + $0x10c] sm:$0xf]
      %v2114 = vld [vmem:[%s2045 + $0x110] sm:$0xf]
      %v2115 = vld [vmem:[%s2045 + $0x114] sm:$0xf]
      %v2116 = vld [vmem:[%s2045 + $0x118] sm:$0xf]
      %v2117 = vld [vmem:[%s2045 + $0x11c] sm:$0xf]
      %v2118 = vld [vmem:[%s2045 + $0x120] sm:$0xf]
      %v2119 = vld [vmem:[%s2045 + $0x124] sm:$0xf]
      %v2120 = vld [vmem:[%s2045 + $0x128] sm:$0xf]
      %v2121 = vld [vmem:[%s2045 + $0x12c] sm:$0xf]
      %v2122 = vld [vmem:[%s2045 + $0x130] sm:$0xf]
      %v2123 = vld [vmem:[%s2045 + $0x134] sm:$0xf]
      %v2124 = vld [vmem:[%s2045 + $0x138] sm:$0xf]
      %v2125 = vld [vmem:[%s2045 + $0x13c] sm:$0xf]
      %v2206 = vunpack.c.l.b16 %v2046
      %v2207 = vunpack.c.l.b16 %v2047
      %v2208 = vunpack.c.l.b16 %v2048
      %v2209 = vunpack.c.l.b16 %v2049
      %v2210 = vunpack.c.l.b16 %v2050
      %v2211 = vunpack.c.l.b16 %v2051
      %v2212 = vunpack.c.l.b16 %v2052
      %v2213 = vunpack.c.l.b16 %v2053
      %v2214 = vunpack.c.l.b16 %v2054
      %v2215 = vunpack.c.l.b16 %v2055
      %v2216 = vunpack.c.l.b16 %v2056
      %v2217 = vunpack.c.l.b16 %v2057
      %v2218 = vunpack.c.l.b16 %v2058
      %v2219 = vunpack.c.l.b16 %v2059
      %v2220 = vunpack.c.l.b16 %v2060
      %v2221 = vunpack.c.l.b16 %v2061
      %v2222 = vunpack.c.l.b16 %v2062
      %v2223 = vunpack.c.l.b16 %v2063
      %v2224 = vunpack.c.l.b16 %v2064
      %v2225 = vunpack.c.l.b16 %v2065
      %v2226 = vunpack.c.l.b16 %v2066
      %v2227 = vunpack.c.l.b16 %v2067
      %v2228 = vunpack.c.l.b16 %v2068
      %v2229 = vunpack.c.l.b16 %v2069
      %v2230 = vunpack.c.l.b16 %v2070
      %v2231 = vunpack.c.l.b16 %v2071
      %v2232 = vunpack.c.l.b16 %v2072
      %v2233 = vunpack.c.l.b16 %v2073
      %v2234 = vunpack.c.l.b16 %v2074
      %v2235 = vunpack.c.l.b16 %v2075
      %v2236 = vunpack.c.l.b16 %v2076
      %v2237 = vunpack.c.l.b16 %v2077
      %v2238 = vunpack.c.l.b16 %v2078
      %v2239 = vunpack.c.l.b16 %v2079
      %v2240 = vunpack.c.l.b16 %v2080
      %v2241 = vunpack.c.l.b16 %v2081
      %v2242 = vunpack.c.l.b16 %v2082
      %v2243 = vunpack.c.l.b16 %v2083
      %v2244 = vunpack.c.l.b16 %v2084
      %v2245 = vunpack.c.l.b16 %v2085
      %v2246 = vunpack.c.l.b16 %v2086
      %v2247 = vunpack.c.l.b16 %v2087
      %v2248 = vunpack.c.l.b16 %v2088
      %v2249 = vunpack.c.l.b16 %v2089
      %v2250 = vunpack.c.l.b16 %v2090
      %v2251 = vunpack.c.l.b16 %v2091
      %v2252 = vunpack.c.l.b16 %v2092
      %v2253 = vunpack.c.l.b16 %v2093
      %v2254 = vunpack.c.l.b16 %v2094
      %v2255 = vunpack.c.l.b16 %v2095
      %v2256 = vunpack.c.l.b16 %v2096
      %v2257 = vunpack.c.l.b16 %v2097
      %v2258 = vunpack.c.l.b16 %v2098
      %v2259 = vunpack.c.l.b16 %v2099
      %v2260 = vunpack.c.l.b16 %v2100
      %v2261 = vunpack.c.l.b16 %v2101
      %v2262 = vunpack.c.l.b16 %v2102
      %v2263 = vunpack.c.l.b16 %v2103
      %v2264 = vunpack.c.l.b16 %v2104
      %v2265 = vunpack.c.l.b16 %v2105
      %v2266 = vunpack.c.l.b16 %v2106
      %v2267 = vunpack.c.l.b16 %v2107
      %v2268 = vunpack.c.l.b16 %v2108
      %v2269 = vunpack.c.l.b16 %v2109
      %v2270 = vunpack.c.l.b16 %v2110
      %v2271 = vunpack.c.l.b16 %v2111
      %v2272 = vunpack.c.l.b16 %v2112
      %v2273 = vunpack.c.l.b16 %v2113
      %v2274 = vunpack.c.l.b16 %v2114
      %v2275 = vunpack.c.l.b16 %v2115
      %v2276 = vunpack.c.l.b16 %v2116
      %v2277 = vunpack.c.l.b16 %v2117
      %v2278 = vunpack.c.l.b16 %v2118
      %v2279 = vunpack.c.l.b16 %v2119
      %v2280 = vunpack.c.l.b16 %v2120
      %v2281 = vunpack.c.l.b16 %v2121
      %v2282 = vunpack.c.l.b16 %v2122
      %v2283 = vunpack.c.l.b16 %v2123
      %v2284 = vunpack.c.l.b16 %v2124
      %v2285 = vunpack.c.l.b16 %v2125
      %v2286 = vpack.c.b16 %v2207, %v2206
      %v2287 = vpack.c.b16 %v2209, %v2208
      %v2288 = vpack.c.b16 %v2211, %v2210
      %v2289 = vpack.c.b16 %v2213, %v2212
      %v2290 = vpack.c.b16 %v2215, %v2214
      %v2291 = vpack.c.b16 %v2217, %v2216
      %v2292 = vpack.c.b16 %v2219, %v2218
      %v2293 = vpack.c.b16 %v2221, %v2220
      %v2294 = vpack.c.b16 %v2223, %v2222
      %v2295 = vpack.c.b16 %v2225, %v2224
      %v2296 = vpack.c.b16 %v2227, %v2226
      %v2297 = vpack.c.b16 %v2229, %v2228
      %v2298 = vpack.c.b16 %v2231, %v2230
      %v2299 = vpack.c.b16 %v2233, %v2232
      %v2300 = vpack.c.b16 %v2235, %v2234
      %v2301 = vpack.c.b16 %v2237, %v2236
      %v2302 = vpack.c.b16 %v2239, %v2238
      %v2303 = vpack.c.b16 %v2241, %v2240
      %v2304 = vpack.c.b16 %v2243, %v2242
      %v2305 = vpack.c.b16 %v2245, %v2244
      %v2306 = vpack.c.b16 %v2247, %v2246
      %v2307 = vpack.c.b16 %v2249, %v2248
      %v2308 = vpack.c.b16 %v2251, %v2250
      %v2309 = vpack.c.b16 %v2253, %v2252
      %v2310 = vpack.c.b16 %v2255, %v2254
      %v2311 = vpack.c.b16 %v2257, %v2256
      %v2312 = vpack.c.b16 %v2259, %v2258
      %v2313 = vpack.c.b16 %v2261, %v2260
      %v2314 = vpack.c.b16 %v2263, %v2262
      %v2315 = vpack.c.b16 %v2265, %v2264
      %v2316 = vpack.c.b16 %v2267, %v2266
      %v2317 = vpack.c.b16 %v2269, %v2268
      %v2318 = vpack.c.b16 %v2271, %v2270
      %v2319 = vpack.c.b16 %v2273, %v2272
      %v2320 = vpack.c.b16 %v2275, %v2274
      %v2321 = vpack.c.b16 %v2277, %v2276
      %v2322 = vpack.c.b16 %v2279, %v2278
      %v2323 = vpack.c.b16 %v2281, %v2280
      %v2324 = vpack.c.b16 %v2283, %v2282
      %v2325 = vpack.c.b16 %v2285, %v2284
      %2366 = vmatprep.subr.bf16.mxu0 0
      %2367 = vmatpush1.bf16.msra.mxu0 %v2293
      %2368 = vmatprep.subr.bf16.mxu0 0
      %2369 = vmatpush1.bf16.msra.mxu0 %v2292
      %2370 = vmatprep.subr.bf16.mxu0 0
      %2371 = vmatpush1.bf16.msra.mxu0 %v2291
      %2372 = vmatprep.subr.bf16.mxu0 0
      %2373 = vmatpush1.bf16.msra.mxu0 %v2290
      %2374 = vmatprep.subr.bf16.mxu0 0
      %2375 = vmatpush1.bf16.msra.mxu0 %v2289
      %2376 = vmatprep.subr.bf16.mxu0 0
      %2377 = vmatpush1.bf16.msra.mxu0 %v2288
      %2378 = vmatprep.subr.bf16.mxu0 0
      %2379 = vmatpush1.bf16.msra.mxu0 %v2287
      %2380 = vmatprep.subr.bf16.mxu0 0
      %2381 = vmatpush1.bf16.msra.mxu0 %v2286
      %2382 = vmatprep.subr.bf16.mxu0 0
      %2383 = vmatpush2.bf16.msra.mxu0 %v2301
      %2384 = vmatprep.subr.bf16.mxu0 0
      %2385 = vmatpush2.bf16.msra.mxu0 %v2300
      %2386 = vmatprep.subr.bf16.mxu0 0
      %2387 = vmatpush2.bf16.msra.mxu0 %v2299
      %2388 = vmatprep.subr.bf16.mxu0 0
      %2389 = vmatpush2.bf16.msra.mxu0 %v2298
      %2390 = vmatprep.subr.bf16.mxu0 0
      %2391 = vmatpush2.bf16.msra.mxu0 %v2297
      %2392 = vmatprep.subr.bf16.mxu0 0
      %2393 = vmatpush2.bf16.msra.mxu0 %v2296
      %2394 = vmatprep.subr.bf16.mxu0 0
      %2395 = vmatpush2.bf16.msra.mxu0 %v2295
      %2396 = vmatprep.subr.bf16.mxu0 0
      %2397 = vmatpush2.bf16.msra.mxu0 %v2294
      %2398 = vmatprep.mubr.bf16.mxu0 %v2032
      %2399 = vmatmul.mubr.bf16.gmra.mxu0 %v2027
      %v2400 = vpop.f32.mrf.mxu0
      %v2401 = vadd.f32 0.0, %v2400
      %v2402 = vpop.f32.mrf.mxu0
      %v2403 = vpop.f32.mrf.mxu0
      %v2404 = vadd.f32 0.0, %v2403
      %v2405 = vpop.f32.mrf.mxu0
      %2406 = vmatprep.mubr.bf16.mxu0 %v2033
      %2407 = vmatmul.mubr.bf16.gmra.mxu0 %v2028
      %v2408 = vpop.f32.mrf.mxu0
      %v2409 = vadd.f32 0.0, %v2408
      %v2410 = vpop.f32.mrf.mxu0
      %v2411 = vpop.f32.mrf.mxu0
      %v2412 = vadd.f32 0.0, %v2411
      %v2413 = vpop.f32.mrf.mxu0
      %2414 = vdwg.mxu0
      %2415 = vmatprep.subr.bf16.mxu0 0
      %2416 = vmatpush1.bf16.msra.mxu0 %v2309
      %2417 = vmatprep.subr.bf16.mxu0 0
      %2418 = vmatpush1.bf16.msra.mxu0 %v2308
      %2419 = vmatprep.subr.bf16.mxu0 0
      %2420 = vmatpush1.bf16.msra.mxu0 %v2307
      %2421 = vmatprep.subr.bf16.mxu0 0
      %2422 = vmatpush1.bf16.msra.mxu0 %v2306
      %2423 = vmatprep.subr.bf16.mxu0 0
      %2424 = vmatpush1.bf16.msra.mxu0 %v2305
      %2425 = vmatprep.subr.bf16.mxu0 0
      %2426 = vmatpush1.bf16.msra.mxu0 %v2304
      %2427 = vmatprep.subr.bf16.mxu0 0
      %2428 = vmatpush1.bf16.msra.mxu0 %v2303
      %2429 = vmatprep.subr.bf16.mxu0 0
      %2430 = vmatpush1.bf16.msra.mxu0 %v2302
      %2431 = vmatprep.subr.bf16.mxu0 0
      %2432 = vmatpush2.bf16.msra.mxu0 %v2317
      %2433 = vmatprep.subr.bf16.mxu0 0
      %2434 = vmatpush2.bf16.msra.mxu0 %v2316
      %2435 = vmatprep.subr.bf16.mxu0 0
      %2436 = vmatpush2.bf16.msra.mxu0 %v2315
      %2437 = vmatprep.subr.bf16.mxu0 0
      %2438 = vmatpush2.bf16.msra.mxu0 %v2314
      %2439 = vmatprep.subr.bf16.mxu0 0
      %2440 = vmatpush2.bf16.msra.mxu0 %v2313
      %2441 = vmatprep.subr.bf16.mxu0 0
      %2442 = vmatpush2.bf16.msra.mxu0 %v2312
      %2443 = vmatprep.subr.bf16.mxu0 0
      %2444 = vmatpush2.bf16.msra.mxu0 %v2311
      %2445 = vmatprep.subr.bf16.mxu0 0
      %2446 = vmatpush2.bf16.msra.mxu0 %v2310
      %2447 = vmatprep.mubr.bf16.mxu0 %v2033
      %2448 = vmatmul.mubr.bf16.gmra.mxu0 %v2028
      %v2449 = vpop.f32.mrf.mxu0
      %v2450 = vadd.f32 %v2401, %v2449
      %v2451 = vpop.f32.mrf.mxu0
      %v2452 = vpop.f32.mrf.mxu0
      %v2453 = vadd.f32 %v2404, %v2452
      %v2454 = vpop.f32.mrf.mxu0
      %2455 = vmatprep.mubr.bf16.mxu0 %v2040
      %2456 = vmatmul.mubr.bf16.gmra.mxu0 %v2037
      %v2457 = vpop.f32.mrf.mxu0
      %v2458 = vadd.f32 %v2409, %v2457
      %v2459 = vpop.f32.mrf.mxu0
      %v2460 = vpop.f32.mrf.mxu0
      %v2461 = vadd.f32 %v2412, %v2460
      %v2462 = vpop.f32.mrf.mxu0
      %2463 = vdwg.mxu0
      %2464 = vmatprep.subr.bf16.mxu0 0
      %2465 = vmatpush1.bf16.msra.mxu0 %v2325
      %2466 = vmatprep.subr.bf16.mxu0 0
      %2467 = vmatpush1.bf16.msra.mxu0 %v2324
      %2468 = vmatprep.subr.bf16.mxu0 0
      %2469 = vmatpush1.bf16.msra.mxu0 %v2323
      %2470 = vmatprep.subr.bf16.mxu0 0
      %2471 = vmatpush1.bf16.msra.mxu0 %v2322
      %2472 = vmatprep.subr.bf16.mxu0 0
      %2473 = vmatpush1.bf16.msra.mxu0 %v2321
      %2474 = vmatprep.subr.bf16.mxu0 0
      %2475 = vmatpush1.bf16.msra.mxu0 %v2320
      %2476 = vmatprep.subr.bf16.mxu0 0
      %2477 = vmatpush1.bf16.msra.mxu0 %v2319
      %2478 = vmatprep.subr.bf16.mxu0 0
      %2479 = vmatpush1.bf16.msra.mxu0 %v2318
      %2480 = vmatprep.subr.bf16.mxu0 0
      %2481 = vmatpush2.bf16.msra.mxu0 0
      %2482 = vmatprep.subr.bf16.mxu0 0
      %2483 = vmatpush2.bf16.msra.mxu0 0
      %2484 = vmatprep.subr.bf16.mxu0 0
      %2485 = vmatpush2.bf16.msra.mxu0 0
      %2486 = vmatprep.subr.bf16.mxu0 0
      %2487 = vmatpush2.bf16.msra.mxu0 0
      %2488 = vmatprep.subr.bf16.mxu0 0
      %2489 = vmatpush2.bf16.msra.mxu0 0
      %2490 = vmatprep.subr.bf16.mxu0 0
      %2491 = vmatpush2.bf16.msra.mxu0 0
      %2492 = vmatprep.subr.bf16.mxu0 0
      %2493 = vmatpush2.bf16.msra.mxu0 0
      %2494 = vmatprep.subr.bf16.mxu0 0
      %2495 = vmatpush2.bf16.msra.mxu0 0
      %2496 = vmatprep.mubr.bf16.mxu0 0
      %2497 = vmatmul.mubr.bf16.gmra.mxu0 %v2037
      %v2498 = vpop.f32.mrf.mxu0
      %v2499 = vadd.f32 %v2450, %v2498
      %v2500 = vpop.f32.mrf.mxu0
      %v2501 = vpop.f32.mrf.mxu0
      %v2502 = vadd.f32 %v2453, %v2501
      %v2503 = vpop.f32.mrf.mxu0
      %2504 = vmatprep.mubr.bf16.mxu0 0
      %2505 = vmatmul.mubr.bf16.gmra.mxu0 %v2043
      %v2506 = vpop.f32.mrf.mxu0
      %v2507 = vadd.f32 %v2458, %v2506
      %v2508 = vpop.f32.mrf.mxu0
      %v2509 = vpop.f32.mrf.mxu0
      %v2510 = vadd.f32 %v2461, %v2509
      %v2511 = vpop.f32.mrf.mxu0
      %2512 = vdwg.mxu0
      %v2513 = vadd.f32 %v1936, %v2499
      %v2514 = vadd.f32 %v1937, %v2502
      %v2515 = vadd.f32 %v1938, %v2507
      %v2516 = vadd.f32 %v1939, %v2510
      %vm2517 = vcmask 1041408
      %vm2518 = vcmask 1045508
      %vm2519 = vmor %vm2517, %vm2518
      %v2520 = vrot.slane %v285, 6
      %v2521 = vrot.slane %v2520, 4
      %v2522 = vrot.slane %v286, 6
      %v2523 = vsel %vm2519, %v2521, %v2522
      %v2524 = vrot.slane %v287, 6
      %v2525 = vrot.slane %v2524, 4
      %v2526 = vrot.slane %v288, 6
      %v2527 = vsel %vm2519, %v2525, %v2526
      %v2528 = vrot.slane %v289, 6
      %v2529 = vrot.slane %v2528, 4
      %v2530 = vrot.slane %v290, 6
      %v2531 = vsel %vm2519, %v2529, %v2530
      %v2532 = vrot.slane %v291, 6
      %v2533 = vrot.slane %v2532, 4
      %v2534 = vrot.slane %v292, 6
      %v2535 = vsel %vm2519, %v2533, %v2534
      %v2536 = vrot.slane %v293, 6
      %v2537 = vrot.slane %v2536, 4
      %v2538 = vrot.slane %v294, 6
      %v2539 = vsel %vm2519, %v2537, %v2538
      %v2540 = vrot.slane %v295, 6
      %v2541 = vrot.slane %v2540, 4
      %v2542 = vrot.slane %v296, 6
      %v2543 = vsel %vm2519, %v2541, %v2542
      %v2544 = vrot.slane %v297, 6
      %v2545 = vrot.slane %v2544, 4
      %v2546 = vrot.slane %v298, 6
      %v2547 = vsel %vm2519, %v2545, %v2546
      %v2548 = vrot.slane %v299, 6
      %v2549 = vrot.slane %v2548, 4
      %v2550 = vrot.slane %v300, 6
      %v2551 = vsel %vm2519, %v2549, %v2550
      %v2552 = vunpack.c.l.b16 %v2523
      %v2553 = vunpack.c.l.b16 %v2527
      %v2554 = vunpack.c.l.b16 %v2531
      %v2555 = vunpack.c.l.b16 %v2535
      %v2556 = vpack.c.b16 %v2553, %v2552
      %v2557 = vpack.c.b16 %v2555, %v2554
      %v2560 = vunpack.c.l.b16 %v2539
      %v2561 = vpack.c.b16 %v2554, %v2553
      %v2562 = vpack.c.b16 %v2560, %v2555
      %v2565 = vunpack.c.l.b16 %v2543
      %v2566 = vpack.c.b16 %v2565, %v2560
      %v2568 = vunpack.c.l.b16 %v2547
      %v2569 = vpack.c.b16 %v2568, %v2565
      %v2571 = vunpack.c.l.b16 %v2551
      %v2572 = vpack.c.b16 %v2571, %v2568
      %s2574 = scalar_lea.vmem %s1, 1280
      %v2575 = vld [vmem:[%s2574] sm:$0xf]
      %v2576 = vld [vmem:[%s2574 + $0x4] sm:$0xf]
      %v2577 = vld [vmem:[%s2574 + $0x8] sm:$0xf]
      %v2578 = vld [vmem:[%s2574 + $0xc] sm:$0xf]
      %v2579 = vld [vmem:[%s2574 + $0x10] sm:$0xf]
      %v2580 = vld [vmem:[%s2574 + $0x14] sm:$0xf]
      %v2581 = vld [vmem:[%s2574 + $0x18] sm:$0xf]
      %v2582 = vld [vmem:[%s2574 + $0x1c] sm:$0xf]
      %v2583 = vld [vmem:[%s2574 + $0x20] sm:$0xf]
      %v2584 = vld [vmem:[%s2574 + $0x24] sm:$0xf]
      %v2585 = vld [vmem:[%s2574 + $0x28] sm:$0xf]
      %v2586 = vld [vmem:[%s2574 + $0x2c] sm:$0xf]
      %v2587 = vld [vmem:[%s2574 + $0x30] sm:$0xf]
      %v2588 = vld [vmem:[%s2574 + $0x34] sm:$0xf]
      %v2589 = vld [vmem:[%s2574 + $0x38] sm:$0xf]
      %v2590 = vld [vmem:[%s2574 + $0x3c] sm:$0xf]
      %v2591 = vld [vmem:[%s2574 + $0x40] sm:$0xf]
      %v2592 = vld [vmem:[%s2574 + $0x44] sm:$0xf]
      %v2593 = vld [vmem:[%s2574 + $0x48] sm:$0xf]
      %v2594 = vld [vmem:[%s2574 + $0x4c] sm:$0xf]
      %v2595 = vld [vmem:[%s2574 + $0x50] sm:$0xf]
      %v2596 = vld [vmem:[%s2574 + $0x54] sm:$0xf]
      %v2597 = vld [vmem:[%s2574 + $0x58] sm:$0xf]
      %v2598 = vld [vmem:[%s2574 + $0x5c] sm:$0xf]
      %v2599 = vld [vmem:[%s2574 + $0x60] sm:$0xf]
      %v2600 = vld [vmem:[%s2574 + $0x64] sm:$0xf]
      %v2601 = vld [vmem:[%s2574 + $0x68] sm:$0xf]
      %v2602 = vld [vmem:[%s2574 + $0x6c] sm:$0xf]
      %v2603 = vld [vmem:[%s2574 + $0x70] sm:$0xf]
      %v2604 = vld [vmem:[%s2574 + $0x74] sm:$0xf]
      %v2605 = vld [vmem:[%s2574 + $0x78] sm:$0xf]
      %v2606 = vld [vmem:[%s2574 + $0x7c] sm:$0xf]
      %v2607 = vld [vmem:[%s2574 + $0x80] sm:$0xf]
      %v2608 = vld [vmem:[%s2574 + $0x84] sm:$0xf]
      %v2609 = vld [vmem:[%s2574 + $0x88] sm:$0xf]
      %v2610 = vld [vmem:[%s2574 + $0x8c] sm:$0xf]
      %v2611 = vld [vmem:[%s2574 + $0x90] sm:$0xf]
      %v2612 = vld [vmem:[%s2574 + $0x94] sm:$0xf]
      %v2613 = vld [vmem:[%s2574 + $0x98] sm:$0xf]
      %v2614 = vld [vmem:[%s2574 + $0x9c] sm:$0xf]
      %v2615 = vld [vmem:[%s2574 + $0xa0] sm:$0xf]
      %v2616 = vld [vmem:[%s2574 + $0xa4] sm:$0xf]
      %v2617 = vld [vmem:[%s2574 + $0xa8] sm:$0xf]
      %v2618 = vld [vmem:[%s2574 + $0xac] sm:$0xf]
      %v2619 = vld [vmem:[%s2574 + $0xb0] sm:$0xf]
      %v2620 = vld [vmem:[%s2574 + $0xb4] sm:$0xf]
      %v2621 = vld [vmem:[%s2574 + $0xb8] sm:$0xf]
      %v2622 = vld [vmem:[%s2574 + $0xbc] sm:$0xf]
      %v2623 = vld [vmem:[%s2574 + $0xc0] sm:$0xf]
      %v2624 = vld [vmem:[%s2574 + $0xc4] sm:$0xf]
      %v2625 = vld [vmem:[%s2574 + $0xc8] sm:$0xf]
      %v2626 = vld [vmem:[%s2574 + $0xcc] sm:$0xf]
      %v2627 = vld [vmem:[%s2574 + $0xd0] sm:$0xf]
      %v2628 = vld [vmem:[%s2574 + $0xd4] sm:$0xf]
      %v2629 = vld [vmem:[%s2574 + $0xd8] sm:$0xf]
      %v2630 = vld [vmem:[%s2574 + $0xdc] sm:$0xf]
      %v2631 = vld [vmem:[%s2574 + $0xe0] sm:$0xf]
      %v2632 = vld [vmem:[%s2574 + $0xe4] sm:$0xf]
      %v2633 = vld [vmem:[%s2574 + $0xe8] sm:$0xf]
      %v2634 = vld [vmem:[%s2574 + $0xec] sm:$0xf]
      %v2635 = vld [vmem:[%s2574 + $0xf0] sm:$0xf]
      %v2636 = vld [vmem:[%s2574 + $0xf4] sm:$0xf]
      %v2637 = vld [vmem:[%s2574 + $0xf8] sm:$0xf]
      %v2638 = vld [vmem:[%s2574 + $0xfc] sm:$0xf]
      %v2639 = vld [vmem:[%s2574 + $0x100] sm:$0xf]
      %v2640 = vld [vmem:[%s2574 + $0x104] sm:$0xf]
      %v2641 = vld [vmem:[%s2574 + $0x108] sm:$0xf]
      %v2642 = vld [vmem:[%s2574 + $0x10c] sm:$0xf]
      %v2643 = vld [vmem:[%s2574 + $0x110] sm:$0xf]
      %v2644 = vld [vmem:[%s2574 + $0x114] sm:$0xf]
      %v2645 = vld [vmem:[%s2574 + $0x118] sm:$0xf]
      %v2646 = vld [vmem:[%s2574 + $0x11c] sm:$0xf]
      %v2647 = vld [vmem:[%s2574 + $0x120] sm:$0xf]
      %v2648 = vld [vmem:[%s2574 + $0x124] sm:$0xf]
      %v2649 = vld [vmem:[%s2574 + $0x128] sm:$0xf]
      %v2650 = vld [vmem:[%s2574 + $0x12c] sm:$0xf]
      %v2651 = vld [vmem:[%s2574 + $0x130] sm:$0xf]
      %v2652 = vld [vmem:[%s2574 + $0x134] sm:$0xf]
      %v2653 = vld [vmem:[%s2574 + $0x138] sm:$0xf]
      %v2654 = vld [vmem:[%s2574 + $0x13c] sm:$0xf]
      %v2735 = vunpack.c.l.b16 %v2575
      %v2736 = vunpack.c.l.b16 %v2576
      %v2737 = vunpack.c.l.b16 %v2577
      %v2738 = vunpack.c.l.b16 %v2578
      %v2739 = vunpack.c.l.b16 %v2579
      %v2740 = vunpack.c.l.b16 %v2580
      %v2741 = vunpack.c.l.b16 %v2581
      %v2742 = vunpack.c.l.b16 %v2582
      %v2743 = vunpack.c.l.b16 %v2583
      %v2744 = vunpack.c.l.b16 %v2584
      %v2745 = vunpack.c.l.b16 %v2585
      %v2746 = vunpack.c.l.b16 %v2586
      %v2747 = vunpack.c.l.b16 %v2587
      %v2748 = vunpack.c.l.b16 %v2588
      %v2749 = vunpack.c.l.b16 %v2589
      %v2750 = vunpack.c.l.b16 %v2590
      %v2751 = vunpack.c.l.b16 %v2591
      %v2752 = vunpack.c.l.b16 %v2592
      %v2753 = vunpack.c.l.b16 %v2593
      %v2754 = vunpack.c.l.b16 %v2594
      %v2755 = vunpack.c.l.b16 %v2595
      %v2756 = vunpack.c.l.b16 %v2596
      %v2757 = vunpack.c.l.b16 %v2597
      %v2758 = vunpack.c.l.b16 %v2598
      %v2759 = vunpack.c.l.b16 %v2599
      %v2760 = vunpack.c.l.b16 %v2600
      %v2761 = vunpack.c.l.b16 %v2601
      %v2762 = vunpack.c.l.b16 %v2602
      %v2763 = vunpack.c.l.b16 %v2603
      %v2764 = vunpack.c.l.b16 %v2604
      %v2765 = vunpack.c.l.b16 %v2605
      %v2766 = vunpack.c.l.b16 %v2606
      %v2767 = vunpack.c.l.b16 %v2607
      %v2768 = vunpack.c.l.b16 %v2608
      %v2769 = vunpack.c.l.b16 %v2609
      %v2770 = vunpack.c.l.b16 %v2610
      %v2771 = vunpack.c.l.b16 %v2611
      %v2772 = vunpack.c.l.b16 %v2612
      %v2773 = vunpack.c.l.b16 %v2613
      %v2774 = vunpack.c.l.b16 %v2614
      %v2775 = vunpack.c.l.b16 %v2615
      %v2776 = vunpack.c.l.b16 %v2616
      %v2777 = vunpack.c.l.b16 %v2617
      %v2778 = vunpack.c.l.b16 %v2618
      %v2779 = vunpack.c.l.b16 %v2619
      %v2780 = vunpack.c.l.b16 %v2620
      %v2781 = vunpack.c.l.b16 %v2621
      %v2782 = vunpack.c.l.b16 %v2622
      %v2783 = vunpack.c.l.b16 %v2623
      %v2784 = vunpack.c.l.b16 %v2624
      %v2785 = vunpack.c.l.b16 %v2625
      %v2786 = vunpack.c.l.b16 %v2626
      %v2787 = vunpack.c.l.b16 %v2627
      %v2788 = vunpack.c.l.b16 %v2628
      %v2789 = vunpack.c.l.b16 %v2629
      %v2790 = vunpack.c.l.b16 %v2630
      %v2791 = vunpack.c.l.b16 %v2631
      %v2792 = vunpack.c.l.b16 %v2632
      %v2793 = vunpack.c.l.b16 %v2633
      %v2794 = vunpack.c.l.b16 %v2634
      %v2795 = vunpack.c.l.b16 %v2635
      %v2796 = vunpack.c.l.b16 %v2636
      %v2797 = vunpack.c.l.b16 %v2637
      %v2798 = vunpack.c.l.b16 %v2638
      %v2799 = vunpack.c.l.b16 %v2639
      %v2800 = vunpack.c.l.b16 %v2640
      %v2801 = vunpack.c.l.b16 %v2641
      %v2802 = vunpack.c.l.b16 %v2642
      %v2803 = vunpack.c.l.b16 %v2643
      %v2804 = vunpack.c.l.b16 %v2644
      %v2805 = vunpack.c.l.b16 %v2645
      %v2806 = vunpack.c.l.b16 %v2646
      %v2807 = vunpack.c.l.b16 %v2647
      %v2808 = vunpack.c.l.b16 %v2648
      %v2809 = vunpack.c.l.b16 %v2649
      %v2810 = vunpack.c.l.b16 %v2650
      %v2811 = vunpack.c.l.b16 %v2651
      %v2812 = vunpack.c.l.b16 %v2652
      %v2813 = vunpack.c.l.b16 %v2653
      %v2814 = vunpack.c.l.b16 %v2654
      %v2815 = vpack.c.b16 %v2736, %v2735
      %v2816 = vpack.c.b16 %v2738, %v2737
      %v2817 = vpack.c.b16 %v2740, %v2739
      %v2818 = vpack.c.b16 %v2742, %v2741
      %v2819 = vpack.c.b16 %v2744, %v2743
      %v2820 = vpack.c.b16 %v2746, %v2745
      %v2821 = vpack.c.b16 %v2748, %v2747
      %v2822 = vpack.c.b16 %v2750, %v2749
      %v2823 = vpack.c.b16 %v2752, %v2751
      %v2824 = vpack.c.b16 %v2754, %v2753
      %v2825 = vpack.c.b16 %v2756, %v2755
      %v2826 = vpack.c.b16 %v2758, %v2757
      %v2827 = vpack.c.b16 %v2760, %v2759
      %v2828 = vpack.c.b16 %v2762, %v2761
      %v2829 = vpack.c.b16 %v2764, %v2763
      %v2830 = vpack.c.b16 %v2766, %v2765
      %v2831 = vpack.c.b16 %v2768, %v2767
      %v2832 = vpack.c.b16 %v2770, %v2769
      %v2833 = vpack.c.b16 %v2772, %v2771
      %v2834 = vpack.c.b16 %v2774, %v2773
      %v2835 = vpack.c.b16 %v2776, %v2775
      %v2836 = vpack.c.b16 %v2778, %v2777
      %v2837 = vpack.c.b16 %v2780, %v2779
      %v2838 = vpack.c.b16 %v2782, %v2781
      %v2839 = vpack.c.b16 %v2784, %v2783
      %v2840 = vpack.c.b16 %v2786, %v2785
      %v2841 = vpack.c.b16 %v2788, %v2787
      %v2842 = vpack.c.b16 %v2790, %v2789
      %v2843 = vpack.c.b16 %v2792, %v2791
      %v2844 = vpack.c.b16 %v2794, %v2793
      %v2845 = vpack.c.b16 %v2796, %v2795
      %v2846 = vpack.c.b16 %v2798, %v2797
      %v2847 = vpack.c.b16 %v2800, %v2799
      %v2848 = vpack.c.b16 %v2802, %v2801
      %v2849 = vpack.c.b16 %v2804, %v2803
      %v2850 = vpack.c.b16 %v2806, %v2805
      %v2851 = vpack.c.b16 %v2808, %v2807
      %v2852 = vpack.c.b16 %v2810, %v2809
      %v2853 = vpack.c.b16 %v2812, %v2811
      %v2854 = vpack.c.b16 %v2814, %v2813
      %2895 = vmatprep.subr.bf16.mxu0 0
      %2896 = vmatpush1.bf16.msra.mxu0 %v2822
      %2897 = vmatprep.subr.bf16.mxu0 0
      %2898 = vmatpush1.bf16.msra.mxu0 %v2821
      %2899 = vmatprep.subr.bf16.mxu0 0
      %2900 = vmatpush1.bf16.msra.mxu0 %v2820
      %2901 = vmatprep.subr.bf16.mxu0 0
      %2902 = vmatpush1.bf16.msra.mxu0 %v2819
      %2903 = vmatprep.subr.bf16.mxu0 0
      %2904 = vmatpush1.bf16.msra.mxu0 %v2818
      %2905 = vmatprep.subr.bf16.mxu0 0
      %2906 = vmatpush1.bf16.msra.mxu0 %v2817
      %2907 = vmatprep.subr.bf16.mxu0 0
      %2908 = vmatpush1.bf16.msra.mxu0 %v2816
      %2909 = vmatprep.subr.bf16.mxu0 0
      %2910 = vmatpush1.bf16.msra.mxu0 %v2815
      %2911 = vmatprep.subr.bf16.mxu0 0
      %2912 = vmatpush2.bf16.msra.mxu0 %v2830
      %2913 = vmatprep.subr.bf16.mxu0 0
      %2914 = vmatpush2.bf16.msra.mxu0 %v2829
      %2915 = vmatprep.subr.bf16.mxu0 0
      %2916 = vmatpush2.bf16.msra.mxu0 %v2828
      %2917 = vmatprep.subr.bf16.mxu0 0
      %2918 = vmatpush2.bf16.msra.mxu0 %v2827
      %2919 = vmatprep.subr.bf16.mxu0 0
      %2920 = vmatpush2.bf16.msra.mxu0 %v2826
      %2921 = vmatprep.subr.bf16.mxu0 0
      %2922 = vmatpush2.bf16.msra.mxu0 %v2825
      %2923 = vmatprep.subr.bf16.mxu0 0
      %2924 = vmatpush2.bf16.msra.mxu0 %v2824
      %2925 = vmatprep.subr.bf16.mxu0 0
      %2926 = vmatpush2.bf16.msra.mxu0 %v2823
      %2927 = vmatprep.mubr.bf16.mxu0 %v2561
      %2928 = vmatmul.mubr.bf16.gmra.mxu0 %v2556
      %v2929 = vpop.f32.mrf.mxu0
      %v2930 = vadd.f32 0.0, %v2929
      %v2931 = vpop.f32.mrf.mxu0
      %v2932 = vpop.f32.mrf.mxu0
      %v2933 = vadd.f32 0.0, %v2932
      %v2934 = vpop.f32.mrf.mxu0
      %2935 = vmatprep.mubr.bf16.mxu0 %v2562
      %2936 = vmatmul.mubr.bf16.gmra.mxu0 %v2557
      %v2937 = vpop.f32.mrf.mxu0
      %v2938 = vadd.f32 0.0, %v2937
      %v2939 = vpop.f32.mrf.mxu0
      %v2940 = vpop.f32.mrf.mxu0
      %v2941 = vadd.f32 0.0, %v2940
      %v2942 = vpop.f32.mrf.mxu0
      %2943 = vdwg.mxu0
      %2944 = vmatprep.subr.bf16.mxu0 0
      %2945 = vmatpush1.bf16.msra.mxu0 %v2838
      %2946 = vmatprep.subr.bf16.mxu0 0
      %2947 = vmatpush1.bf16.msra.mxu0 %v2837
      %2948 = vmatprep.subr.bf16.mxu0 0
      %2949 = vmatpush1.bf16.msra.mxu0 %v2836
      %2950 = vmatprep.subr.bf16.mxu0 0
      %2951 = vmatpush1.bf16.msra.mxu0 %v2835
      %2952 = vmatprep.subr.bf16.mxu0 0
      %2953 = vmatpush1.bf16.msra.mxu0 %v2834
      %2954 = vmatprep.subr.bf16.mxu0 0
      %2955 = vmatpush1.bf16.msra.mxu0 %v2833
      %2956 = vmatprep.subr.bf16.mxu0 0
      %2957 = vmatpush1.bf16.msra.mxu0 %v2832
      %2958 = vmatprep.subr.bf16.mxu0 0
      %2959 = vmatpush1.bf16.msra.mxu0 %v2831
      %2960 = vmatprep.subr.bf16.mxu0 0
      %2961 = vmatpush2.bf16.msra.mxu0 %v2846
      %2962 = vmatprep.subr.bf16.mxu0 0
      %2963 = vmatpush2.bf16.msra.mxu0 %v2845
      %2964 = vmatprep.subr.bf16.mxu0 0
      %2965 = vmatpush2.bf16.msra.mxu0 %v2844
      %2966 = vmatprep.subr.bf16.mxu0 0
      %2967 = vmatpush2.bf16.msra.mxu0 %v2843
      %2968 = vmatprep.subr.bf16.mxu0 0
      %2969 = vmatpush2.bf16.msra.mxu0 %v2842
      %2970 = vmatprep.subr.bf16.mxu0 0
      %2971 = vmatpush2.bf16.msra.mxu0 %v2841
      %2972 = vmatprep.subr.bf16.mxu0 0
      %2973 = vmatpush2.bf16.msra.mxu0 %v2840
      %2974 = vmatprep.subr.bf16.mxu0 0
      %2975 = vmatpush2.bf16.msra.mxu0 %v2839
      %2976 = vmatprep.mubr.bf16.mxu0 %v2562
      %2977 = vmatmul.mubr.bf16.gmra.mxu0 %v2557
      %v2978 = vpop.f32.mrf.mxu0
      %v2979 = vadd.f32 %v2930, %v2978
      %v2980 = vpop.f32.mrf.mxu0
      %v2981 = vpop.f32.mrf.mxu0
      %v2982 = vadd.f32 %v2933, %v2981
      %v2983 = vpop.f32.mrf.mxu0
      %2984 = vmatprep.mubr.bf16.mxu0 %v2569
      %2985 = vmatmul.mubr.bf16.gmra.mxu0 %v2566
      %v2986 = vpop.f32.mrf.mxu0
      %v2987 = vadd.f32 %v2938, %v2986
      %v2988 = vpop.f32.mrf.mxu0
      %v2989 = vpop.f32.mrf.mxu0
      %v2990 = vadd.f32 %v2941, %v2989
      %v2991 = vpop.f32.mrf.mxu0
      %2992 = vdwg.mxu0
      %2993 = vmatprep.subr.bf16.mxu0 0
      %2994 = vmatpush1.bf16.msra.mxu0 %v2854
      %2995 = vmatprep.subr.bf16.mxu0 0
      %2996 = vmatpush1.bf16.msra.mxu0 %v2853
      %2997 = vmatprep.subr.bf16.mxu0 0
      %2998 = vmatpush1.bf16.msra.mxu0 %v2852
      %2999 = vmatprep.subr.bf16.mxu0 0
      %3000 = vmatpush1.bf16.msra.mxu0 %v2851
      %3001 = vmatprep.subr.bf16.mxu0 0
      %3002 = vmatpush1.bf16.msra.mxu0 %v2850
      %3003 = vmatprep.subr.bf16.mxu0 0
      %3004 = vmatpush1.bf16.msra.mxu0 %v2849
      %3005 = vmatprep.subr.bf16.mxu0 0
      %3006 = vmatpush1.bf16.msra.mxu0 %v2848
      %3007 = vmatprep.subr.bf16.mxu0 0
      %3008 = vmatpush1.bf16.msra.mxu0 %v2847
      %3009 = vmatprep.subr.bf16.mxu0 0
      %3010 = vmatpush2.bf16.msra.mxu0 0
      %3011 = vmatprep.subr.bf16.mxu0 0
      %3012 = vmatpush2.bf16.msra.mxu0 0
      %3013 = vmatprep.subr.bf16.mxu0 0
      %3014 = vmatpush2.bf16.msra.mxu0 0
      %3015 = vmatprep.subr.bf16.mxu0 0
      %3016 = vmatpush2.bf16.msra.mxu0 0
      %3017 = vmatprep.subr.bf16.mxu0 0
      %3018 = vmatpush2.bf16.msra.mxu0 0
      %3019 = vmatprep.subr.bf16.mxu0 0
      %3020 = vmatpush2.bf16.msra.mxu0 0
      %3021 = vmatprep.subr.bf16.mxu0 0
      %3022 = vmatpush2.bf16.msra.mxu0 0
      %3023 = vmatprep.subr.bf16.mxu0 0
      %3024 = vmatpush2.bf16.msra.mxu0 0
      %3025 = vmatprep.mubr.bf16.mxu0 0
      %3026 = vmatmul.mubr.bf16.gmra.mxu0 %v2566
      %v3027 = vpop.f32.mrf.mxu0
      %v3028 = vadd.f32 %v2979, %v3027
      %v3029 = vpop.f32.mrf.mxu0
      %v3030 = vpop.f32.mrf.mxu0
      %v3031 = vadd.f32 %v2982, %v3030
      %v3032 = vpop.f32.mrf.mxu0
      %3033 = vmatprep.mubr.bf16.mxu0 0
      %3034 = vmatmul.mubr.bf16.gmra.mxu0 %v2572
      %v3035 = vpop.f32.mrf.mxu0
      %v3036 = vadd.f32 %v2987, %v3035
      %v3037 = vpop.f32.mrf.mxu0
      %v3038 = vpop.f32.mrf.mxu0
      %v3039 = vadd.f32 %v2990, %v3038
      %v3040 = vpop.f32.mrf.mxu0
      %3041 = vdwg.mxu0
      %v3042 = vadd.f32 %v2513, %v3028
      %v3043 = vadd.f32 %v2514, %v3031
      %v3044 = vadd.f32 %v2515, %v3036
      %v3045 = vadd.f32 %v2516, %v3039
      %v3046 = vld [vmem:[%s2] sm:$0x1]
      %v3048 = vlaneseq
      %v3049 = vshrl.u32 %v3048, 7
      %v3050 = vsub.s32 0, %v3049
      %v3051 = vrot.slane %v3046, %v3050
      %v3053 = vadd.f32 %v3042, %v3051
      %v3054 = vadd.f32 %v3043, %v3051
      %v3055 = vadd.f32 %v3044, %v3051
      %v3056 = vadd.f32 %v3045, %v3051
      %v3057 = vmax.f32 %v3053, 0.0
      %v3058 = vmax.f32 %v3054, 0.0
      %v3059 = vmax.f32 %v3055, 0.0
      %v3060 = vmax.f32 %v3056, 0.0
      %v3061 = vld [vmem:[#allocation2] sm:$0x1]
      %v3062 = vmax.f32 %v3057, %v3058
      %v3063 = vmax.f32 %v3059, %v3060
      %v3064 = vmax.f32 %v3062, %v3063
      %v3065 = vrot.slane %v3064, 4
      %v3066 = vmax.f32 %v3064, %v3065
      %v3067 = vrot.slane %v3066, 2
      %v3068 = vmax.f32 %v3066, %v3067
      %v3069 = vrot.slane %v3068, 1
      %v3070 = vmax.f32 %v3068, %v3069
      %v3071 = vmax.f32 %v3061, %v3070
      %3072 = vst [vmem:[#allocation2] sm:$0x1] %v3071
      %v3073 = vld [vmem:[#allocation3] sm:$0x1]
      %v3074 = vadd.f32 %v3057, %v3058
      %v3075 = vadd.f32 %v3074, %v3059
      %v3076 = vadd.f32 %v3075, %v3060
      %v3077 = vrot.slane %v3076, 4
      %v3078 = vadd.f32 %v3076, %v3077
      %v3079 = vrot.slane %v3078, 2
      %v3080 = vadd.f32 %v3078, %v3079
      %v3081 = vrot.slane %v3080, 1
      %v3082 = vadd.f32 %v3080, %v3081
      %v3083 = vadd.f32 %v3073, %v3082
      %3084 = vst [vmem:[#allocation3] sm:$0x1] %v3083
      %p3085 = scmp.eq.s32.totalorder %s22, 1
      // Predicated region
      $region49: #{supersimplenet_forward.4} parent=43 // pred_check
        %p3086 = pneg %p3085
      $region50: #{supersimplenet_forward.4} parent=43 // pred_check_branch
        %3088 = sbr.rel (%p3086) target = $region52
      $region51: #{supersimplenet_forward.4} parent=43 // pred_region
        %v3089 = vld [vmem:[#allocation3] sm:$0x1]
        %v3090 = vmul.f32 %v3089, 0.015625
        %v3091 = vld [vmem:[#allocation2] sm:$0x1]
        %v3092 = vld [vmem:[%s3] sm:$0x1]
        %v3093 = vmul.f32 %v3091, %v3092
        %vm3094 = vcmask 1040384
        %v3095 = vsel %vm3094, %v3093, 0.0
        %3096 = vadd.xlane.f32.xlu0 %v3095
        %v3097 = vpop.xlane.xlu0 %3096
        %v3098 = vld [vmem:[%s4] sm:$0x1]
        %v3099 = vmul.f32 %v3090, %v3098
        %v3100 = vsel %vm3094, %v3099, 0.0
        %3101 = vadd.xlane.f32.xlu0 %v3100
        %v3102 = vpop.xlane.xlu0 %3101
        %v3103 = vadd.f32 %v3097, %v3102
        %v3104 = vld [vmem:[%s270] sm:$0x1]
        %v3105 = vadd.f32 %v3103, %v3104
        %vm3106 = vcmask 0
        %3107 = vst.msk [vmem:[%s273] sm:$0x1] %vm3106, %v3105
      $region52: #{supersimplenet_forward.4} parent=43 // pred_fallthru
        _
      %p3108 = scmp.lt.s32.totalorder %s21, 1
      %s3109 = scalar_select %p3108, %s21, 1
      %s3110 = scalar_lea.vmem %s6, %s3109
      // Predicated region
      $region53: #{supersimplenet_forward.4} parent=43 // pred_check
        %p3111 = pneg %p183
      $region54: #{supersimplenet_forward.4} parent=43 // pred_check_branch
        %3113 = sbr.rel (%p3111) target = $region56
      $region55: #{supersimplenet_forward.4} parent=43 // pred_region
        _
      $region56: #{supersimplenet_forward.4} parent=43 // pred_fallthru
        _
    $region44: #{supersimplenet_forward.4} parent=5 // pred_fallthru
      _
    %p3114 = scmp.le.s32.totalorder 2, %s12
    // Predicated region
    $region57: #{supersimplenet_forward.4} parent=5 // pred_check
      %p3115 = pneg %p3114
    $region58: #{supersimplenet_forward.4} parent=5 // pred_check_branch
      %3117 = sbr.rel (%p3115) target = $region60
    $region59: #{supersimplenet_forward.4} parent=5 // pred_region
      %s3118 = ssub.s32 %s12, 2
      // Predicated region
      $region61: #{supersimplenet_forward.4} parent=59 // pred_check
        %p3119 = pneg %p189
      $region62: #{supersimplenet_forward.4} parent=59 // pred_check_branch
        %3121 = sbr.rel (%p3119) target = $region64
      $region63: #{supersimplenet_forward.4} parent=59 // pred_region
        %p3122 = scmp.lt.s32.totalorder %s23, 1
        %s3123 = scalar_select %p3122, %s23, 1
        %s3124 = scalar_lea.vmem %s6, %s3123
      $region64: #{supersimplenet_forward.4} parent=59 // pred_fallthru
        _
    $region60: #{supersimplenet_forward.4} parent=5 // pred_fallthru
      _
  $region6: #{supersimplenet_forward.4} parent=0 // loop_footer
    %s16 = sadd.s32 1, %s12
  $region7: #{supersimplenet_forward.4} parent=0 // loop_footer_branch
    %11 = sbr.rel target = $region3
  $region8: #{supersimplenet_forward.4} parent=0 // loop_exit
    _

</llo_original>
